<compile_context>
chip_gen: v7x
topology: tpu7x:2x2x1
jax: 0.10.0
libtpu: 0.0.40
codegen_flags: <defaults>
</compile_context>

<pallas_src>
import functools

import jax
import jax.numpy as jnp
from jax.experimental import pallas as pl
from jax.experimental.pallas import tpu as pltpu

NEG_SLOPE = 0.01                # LeakyReLU default in CBR
BN_EPS = 1e-5                   # torch.nn.BatchNorm2d default eps
LANE = 128                      # Cout padded to multiples of this
ACT_DTYPE = jnp.bfloat16        # MXU inputs + inter-layer activations
TILE_M_CAP = 512                # row-tile cap
TARGET_TILES = 4                # aim for >= 4 grid steps (pipelining + 2 TC)


def _round_up(n, m):
    return ((n + m - 1) // m) * m


def _pick_tile_m(m, target=TARGET_TILES, cap=TILE_M_CAP):
    """Row tile ~ cdiv(M, target) rounded to the sublane (8), capped."""
    tile = _round_up(-(-m // target), 8)
    return max(8, min(tile, cap))


_VMEM_LIMIT = None


def _vmem_limit_bytes():
    """Generation-dependent VMEM cap (~3/4 physical), safe fallback 48 MiB."""
    global _VMEM_LIMIT
    if _VMEM_LIMIT is None:
        default = 48 * 1024 * 1024
        try:
            cap = getattr(pltpu.get_tpu_info(), "vmem_capacity_bytes", None)
            _VMEM_LIMIT = (min(int(cap) * 3 // 4, 112 * 1024 * 1024)
                           if cap else default)
        except Exception:
            _VMEM_LIMIT = default
    return _VMEM_LIMIT


# ----------------------------- Pallas kernels ------------------------------

def _conv_act_kernel(p_ref, w_ref, b_ref, o_ref):
    """Tiled im2col-GEMM conv + bias + LeakyReLU (norm=None CBR layers).

    p_ref: (TILE_M, K_pad) bf16 patches  -- block walks the M axis
    w_ref: (K_pad, C)      bf16 weights  -- constant index_map -> VMEM resident
    b_ref: (1, C)          f32  bias     -- constant index_map -> VMEM resident
    """
    y = jnp.dot(p_ref[...], w_ref[...], preferred_element_type=jnp.float32)
    y = y + b_ref[...]
    o_ref[...] = jnp.where(y >= 0.0, y, NEG_SLOPE * y).astype(o_ref.dtype)


def _conv_stats_kernel(p_ref, w_ref, b_ref, y_ref, s_ref):
    """BN layers: conv + bias, plus per-tile per-channel sum / sum-of-squares.

    s_ref is a per-tile (8, C) f32 output block (row 0 = sum, row 1 = sumsq,
    rows 2..7 zero), written with a single full-block store.  Tiles are
    independent ("parallel" grid axis); the reduction over tiles happens in
    the glue next to the mean/var math.
    """
    y = jnp.dot(p_ref[...], w_ref[...], preferred_element_type=jnp.float32)
    y = y + b_ref[...]
    y_ref[...] = y.astype(y_ref.dtype)

    s = jnp.sum(y, axis=0, keepdims=True)        # (1, C)
    ss = jnp.sum(y * y, axis=0, keepdims=True)   # (1, C)
    rows = jax.lax.broadcasted_iota(jnp.int32, s_ref.shape, 0)
    s_ref[...] = jnp.where(rows == 0, s, jnp.where(rows == 1, ss, 0.0))


# ------------------------------ JAX glue ------------------------------------

def _im2col(x, k, stride, pad, k_pad):
    """x: (N,H,W,Cin_real) -> patches (N*Ho*Wo, k_pad) bf16, K padded once."""
    N, H, W, C = x.shape
    xp = jnp.pad(x, ((0, 0), (pad, pad), (pad, pad), (0, 0)))
    Ho = (H + 2 * pad - k) // stride + 1
    Wo = (W + 2 * pad - k) // stride + 1
    cols = []
    for kh in range(k):
        for kw in range(k):
            cols.append(
                xp[:, kh:kh + stride * (Ho - 1) + 1:stride,
                       kw:kw + stride * (Wo - 1) + 1:stride, :])
    patches = jnp.concatenate(cols, axis=-1).reshape(N * Ho * Wo, k * k * C)
    if k_pad > k * k * C:
        patches = jnp.pad(patches, ((0, 0), (0, k_pad - k * k * C)))
    return patches, (N, Ho, Wo)


def cbr_apply(x, p, cin, k, stride, pad, use_bn):
    """One CBR block.  x: NHWC (only x[..., :cin] is real); returns NHWC bf16
    with Cout lane-padded to 128 (padded channels exactly zero)."""
    K_pad, C = p["w"].shape
    patches, (N, Ho, Wo) = _im2col(
        x[..., :cin].astype(ACT_DTYPE), k, stride, pad, K_pad)

    M = patches.shape[0]
    tile_m = _pick_tile_m(M)
    m_pad = _round_up(M, tile_m)
    n_pad_rows = m_pad - M
    if n_pad_rows:
        patches = jnp.pad(patches, ((0, n_pad_rows), (0, 0)))
    grid = (m_pad // tile_m,)

    patch_spec = pl.BlockSpec((tile_m, K_pad), lambda i: (i, 0))
    w_spec = pl.BlockSpec((K_pad, C), lambda i: (0, 0))    # VMEM resident
    vec_spec = pl.BlockSpec((1, C), lambda i: (0, 0))      # VMEM resident
    row_spec = pl.BlockSpec((tile_m, C), lambda i: (i, 0))
    cparams = pltpu.CompilerParams(
        dimension_semantics=("parallel",),
        vmem_limit_bytes=_vmem_limit_bytes())

    if not use_bn:
        y = pl.pallas_call(
            _conv_act_kernel,
            out_shape=jax.ShapeDtypeStruct((m_pad, C), ACT_DTYPE),
            grid=grid,
            in_specs=[patch_spec, w_spec, vec_spec],
            out_specs=row_spec,
            compiler_params=cparams,
        )(patches, p["w"], p["b"])
        y = y[:M]
    else:
        y, stats = pl.pallas_call(
            _conv_stats_kernel,
            out_shape=(jax.ShapeDtypeStruct((m_pad, C), ACT_DTYPE),
                       jax.ShapeDtypeStruct((grid[0] * 8, C), jnp.float32)),
            grid=grid,
            in_specs=[patch_spec, w_spec, vec_spec],
            out_specs=(row_spec, pl.BlockSpec((8, C), lambda i: (i, 0))),
            compiler_params=cparams,
        )(patches, p["w"], p["b"])

        tot = stats.reshape(grid[0], 8, C).sum(axis=0)     # reduce tiles
        sum_y, sum_y2 = tot[0], tot[1]
        if n_pad_rows:
            # Zero-padded patch rows produce exactly y = bias; subtract their
            # exact contribution so batch statistics match the real M rows.
            bvec = p["b"][0]
            sum_y = sum_y - n_pad_rows * bvec
            sum_y2 = sum_y2 - n_pad_rows * bvec * bvec

        mean = sum_y / M
        var = jnp.maximum(sum_y2 / M - mean * mean, 0.0)   # biased variance
        inv_std = jax.lax.rsqrt(var + BN_EPS)
        scale = p["gamma"] * inv_std                       # 0 on padded chans
        shift = p["beta"] - mean * scale
        # BN affine + LeakyReLU in glue (XLA fuses this with the next layer's
        # im2col pad/concat/cast) -- no separate Pallas pass needed.
        yf = y[:M].astype(jnp.float32) * scale[None, :] + shift[None, :]
        y = jnp.where(yf >= 0.0, yf, NEG_SLOPE * yf).astype(ACT_DTYPE)

    return y.reshape(N, Ho, Wo, C)


def init_encoder_params(key, in_channels, chan_num):
    """Deterministic synthetic parameters matching encoderNet's conv stack.

    Weights are stored as (round_up(k*k*cin, 128), round_up(cout, 128)) with
    real values in the top-left corner and zeros elsewhere, so padded K rows
    contribute nothing and padded output channels stay exactly zero.  BN
    gamma/beta are zero on padded channels (padded lanes map to exactly 0).
    """
    c = chan_num
    # (cin, cout, k, stride, pad, use_bn) in forward order
    specs = [
        (in_channels, c, 3, 1, 1, False),   # layer0.0 (norm=None)
        (c, c, 3, 1, 1, True),              # layer0.1
        (c, c, 3, 1, 1, True),              # layer0.2
        (c, 2 * c, 4, 2, 1, False),         # pool1 (norm=None)
        (2 * c, 2 * c, 3, 1, 1, True),      # layer1.0
        (2 * c, 2 * c, 3, 1, 1, True),      # layer1.1
        (2 * c, 4 * c, 4, 2, 1, False),     # pool2 (norm=None)
        (4 * c, 4 * c, 3, 1, 1, True),      # layer2.0
        (4 * c, 4 * c, 3, 1, 1, True),      # layer2.1
        (4 * c, 8 * c, 4, 2, 1, False),     # pool3 (norm=None)
        (8 * c, 8 * c, 3, 1, 1, True),      # layer3.0
        (8 * c, 8 * c, 3, 1, 1, True),      # layer3.1
    ]
    params = []
    for (cin, cout, k, s, pad, bn) in specs:
        cout_p = _round_up(cout, LANE)
        k_real = k * k * cin
        k_pad = _round_up(k_real, LANE)
        key, kw_, kb_ = jax.random.split(key, 3)
        w = jax.random.normal(kw_, (k, k, cin, cout), jnp.float32)
        w = (w / jnp.sqrt(jnp.float32(k_real))).reshape(k_real, cout)
        w_p = jnp.zeros((k_pad, cout_p), jnp.float32)
        w_p = w_p.at[:k_real, :cout].set(w).astype(ACT_DTYPE)

        b = jax.random.normal(kb_, (cout,), jnp.float32) * 0.01
        b_p = jnp.zeros((1, cout_p), jnp.float32).at[0, :cout].set(b)

        p = {"w": w_p, "b": b_p}
        if bn:
            p["gamma"] = jnp.zeros((cout_p,), jnp.float32).at[:cout].set(1.0)
            p["beta"] = jnp.zeros((cout_p,), jnp.float32)
        params.append(((cin, cout, k, s, pad, bn), p))
    return params


def encoder_forward(x_nchw, params, feat=False):
    """Reproduces encoderNet.forward. Input/output in NCHW like PyTorch."""
    x = jnp.transpose(x_nchw, (0, 2, 3, 1)).astype(ACT_DTYPE)   # NCHW -> NHWC

    feats = {}
    # feature boundaries: x0 after 2, x1 after 5, x2 after 8, x3 after 11
    names = {2: "x0", 5: "x1", 8: "x2", 11: "x3"}
    for i, ((cin, cout, k, s, pad, bn), p) in enumerate(params):
        x = cbr_apply(x, p, cin, k, s, pad, bn)
        if i in names:
            feats[names[i]] = (x, cout)

    def to_nchw(a_c):
        a, cout = a_c
        return jnp.transpose(a[..., :cout], (0, 3, 1, 2)).astype(jnp.float32)

    if feat:
        return [to_nchw(feats["x3"]), to_nchw(feats["x2"]),
                to_nchw(feats["x1"]), to_nchw(feats["x0"])]
    return to_nchw(feats["x3"])


# --------------------------------- main --------------------------------------

if __name__ == "__main__":
    key = jax.random.PRNGKey(0)
    k_param, k_x = jax.random.split(key)

    batch, in_channels, spatial, chan_num = 2, 4, 16, 8
    x = jax.random.normal(k_x, (batch, in_channels, spatial, spatial),
                          jnp.float32)

    params = init_encoder_params(k_param, in_channels, chan_num)

    fwd = jax.jit(functools.partial(encoder_forward, params=params, feat=False))
    y = fwd(x)
    y = jax.block_until_ready(y)

    expected = (batch, 8 * chan_num, spatial // 8, spatial // 8)
    assert y.shape == expected, (y.shape, expected)
    assert jnp.all(jnp.isfinite(y))
    print("KERNEL_OK")
</pallas_src>

<mosaic_0001>
module attributes {stable_mosaic.version = 11 : i64} {
  func.func @_conv_act_kernel(%arg0: i32, %arg1: memref<128x128xbf16, #tpu.memory_space<vmem>>, %arg2: memref<128x128xbf16, #tpu.memory_space<vmem>>, %arg3: memref<1x128xf32, #tpu.memory_space<vmem>>, %arg4: memref<128x128xbf16, #tpu.memory_space<vmem>>) attributes {dimension_semantics = [#tpu.dimension_semantics<parallel>], iteration_bounds = array<i64: 4>, scalar_prefetch = 0 : i64, scratch_operands = 0 : i64, tpu.core_type = #tpu.core_type<tc>, window_params = [{transform_indices = @transform_0, window_bounds = array<i64: 128, 128>}, {pipeline_mode = #tpu.pipeline_mode<synchronous>, transform_indices = @transform_1, window_bounds = array<i64: 128, 128>}, {pipeline_mode = #tpu.pipeline_mode<synchronous>, transform_indices = @transform_2, window_bounds = array<i64: 1, 128>}, {transform_indices = @transform_3, window_bounds = array<i64: 128, 128>}]} {
    %c0 = arith.constant 0 : index
    %c0_0 = arith.constant 0 : index
    %0 = vector.load %arg1[%c0, %c0_0] : memref<128x128xbf16, #tpu.memory_space<vmem>>, vector<128x128xbf16>
    %c0_1 = arith.constant 0 : index
    %c0_2 = arith.constant 0 : index
    %1 = vector.load %arg2[%c0_1, %c0_2] : memref<128x128xbf16, #tpu.memory_space<vmem>>, vector<128x128xbf16>
    %cst = arith.constant dense<0.000000e+00> : vector<128x128xf32>
    %2 = tpu.matmul %0, %1, %cst {dimension_numbers = #tpu.dot_dimension_numbers<[1], [0], [0], [1], [0, 0, 1, 1], [], []>} : vector<128x128xbf16>, vector<128x128xbf16>, vector<128x128xf32> -> vector<128x128xf32>
    %c0_3 = arith.constant 0 : index
    %c0_4 = arith.constant 0 : index
    %3 = vector.load %arg3[%c0_3, %c0_4] : memref<1x128xf32, #tpu.memory_space<vmem>>, vector<1x128xf32>
    %4 = vector.broadcast %3 : vector<1x128xf32> to vector<128x128xf32>
    %5 = arith.addf %2, %4 : vector<128x128xf32>
    %cst_5 = arith.constant 0.000000e+00 : f32
    %6 = vector.broadcast %cst_5 : f32 to vector<128x128xf32>
    %7 = arith.cmpf oge, %5, %6 : vector<128x128xf32>
    %cst_6 = arith.constant 0.00999999977 : f32
    %8 = vector.broadcast %cst_6 : f32 to vector<128x128xf32>
    %9 = arith.mulf %8, %5 : vector<128x128xf32>
    %10 = arith.select %7, %5, %9 : vector<128x128xi1>, vector<128x128xf32>
    %11 = arith.truncf %10 : vector<128x128xf32> to vector<128x128xbf16>
    %c0_7 = arith.constant 0 : index
    %c0_8 = arith.constant 0 : index
    %12 = vector.load %arg4[%c0_7, %c0_8] : memref<128x128xbf16, #tpu.memory_space<vmem>>, vector<128x128xbf16>
    tpu.vector_store %arg4[%c0_7, %c0_8], %11 {strides = array<i32>} : memref<128x128xbf16, #tpu.memory_space<vmem>>, vector<128x128xbf16>,
    return
  }
  func.func @transform_0(%arg0: i32) -> (i32, i32) {
    %c0_i32 = arith.constant 0 : i32
    %c0_i32_0 = arith.constant 0 : i32
    return %arg0, %c0_i32 : i32, i32
  }
  func.func @transform_1(%arg0: i32) -> (i32, i32) {
    %c0_i32 = arith.constant 0 : i32
    %c0_i32_0 = arith.constant 0 : i32
    %c0_i32_1 = arith.constant 0 : i32
    return %c0_i32, %c0_i32_0 : i32, i32
  }
  func.func @transform_2(%arg0: i32) -> (i32, i32) {
    %c0_i32 = arith.constant 0 : i32
    %c0_i32_0 = arith.constant 0 : i32
    %c0_i32_1 = arith.constant 0 : i32
    return %c0_i32, %c0_i32_0 : i32, i32
  }
  func.func @transform_3(%arg0: i32) -> (i32, i32) {
    %c0_i32 = arith.constant 0 : i32
    %c0_i32_0 = arith.constant 0 : i32
    return %arg0, %c0_i32 : i32, i32
  }
}

module attributes {stable_mosaic.version = 11 : i64} {
  func.func @_conv_stats_kernel(%arg0: i32, %arg1: memref<128x128xbf16, #tpu.memory_space<vmem>>, %arg2: memref<128x128xbf16, #tpu.memory_space<vmem>>, %arg3: memref<1x128xf32, #tpu.memory_space<vmem>>, %arg4: memref<128x128xbf16, #tpu.memory_space<vmem>>, %arg5: memref<8x128xf32, #tpu.memory_space<vmem>>) attributes {dimension_semantics = [#tpu.dimension_semantics<parallel>], iteration_bounds = array<i64: 4>, scalar_prefetch = 0 : i64, scratch_operands = 0 : i64, tpu.core_type = #tpu.core_type<tc>, window_params = [{transform_indices = @transform_0, window_bounds = array<i64: 128, 128>}, {pipeline_mode = #tpu.pipeline_mode<synchronous>, transform_indices = @transform_1, window_bounds = array<i64: 128, 128>}, {pipeline_mode = #tpu.pipeline_mode<synchronous>, transform_indices = @transform_2, window_bounds = array<i64: 1, 128>}, {transform_indices = @transform_3, window_bounds = array<i64: 128, 128>}, {transform_indices = @transform_4, window_bounds = array<i64: 8, 128>}]} {
    %c0 = arith.constant 0 : index
    %c0_0 = arith.constant 0 : index
    %0 = vector.load %arg1[%c0, %c0_0] : memref<128x128xbf16, #tpu.memory_space<vmem>>, vector<128x128xbf16>
    %c0_1 = arith.constant 0 : index
    %c0_2 = arith.constant 0 : index
    %1 = vector.load %arg2[%c0_1, %c0_2] : memref<128x128xbf16, #tpu.memory_space<vmem>>, vector<128x128xbf16>
    %cst = arith.constant dense<0.000000e+00> : vector<128x128xf32>
    %2 = tpu.matmul %0, %1, %cst {dimension_numbers = #tpu.dot_dimension_numbers<[1], [0], [0], [1], [0, 0, 1, 1], [], []>} : vector<128x128xbf16>, vector<128x128xbf16>, vector<128x128xf32> -> vector<128x128xf32>
    %c0_3 = arith.constant 0 : index
    %c0_4 = arith.constant 0 : index
    %3 = vector.load %arg3[%c0_3, %c0_4] : memref<1x128xf32, #tpu.memory_space<vmem>>, vector<1x128xf32>
    %4 = vector.broadcast %3 : vector<1x128xf32> to vector<128x128xf32>
    %5 = arith.addf %2, %4 : vector<128x128xf32>
    %6 = arith.truncf %5 : vector<128x128xf32> to vector<128x128xbf16>
    %c0_5 = arith.constant 0 : index
    %c0_6 = arith.constant 0 : index
    %7 = vector.load %arg4[%c0_5, %c0_6] : memref<128x128xbf16, #tpu.memory_space<vmem>>, vector<128x128xbf16>
    tpu.vector_store %arg4[%c0_5, %c0_6], %6 {strides = array<i32>} : memref<128x128xbf16, #tpu.memory_space<vmem>>, vector<128x128xbf16>,
    %cst_7 = arith.constant dense<0.000000e+00> : vector<128xf32>
    %8 = vector.multi_reduction <add>, %5, %cst_7 [0] : vector<128x128xf32> to vector<128xf32>
    %9 = vector.shape_cast %8 : vector<128xf32> to vector<1x128xf32>
    %10 = arith.mulf %5, %5 : vector<128x128xf32>
    %cst_8 = arith.constant dense<0.000000e+00> : vector<128xf32>
    %11 = vector.multi_reduction <add>, %10, %cst_8 [0] : vector<128x128xf32> to vector<128xf32>
    %12 = vector.shape_cast %11 : vector<128xf32> to vector<1x128xf32>
    %13 = tpu.iota {dimensions = array<i32: 0>} : vector<8x128xi32>
    %c0_i32 = arith.constant 0 : i32
    %14 = vector.broadcast %c0_i32 : i32 to vector<8x128xi32>
    %15 = arith.cmpi eq, %13, %14 : vector<8x128xi32>
    %c1_i32 = arith.constant 1 : i32
    %16 = vector.broadcast %c1_i32 : i32 to vector<8x128xi32>
    %17 = arith.cmpi eq, %13, %16 : vector<8x128xi32>
    %cst_9 = arith.constant 0.000000e+00 : f32
    %18 = vector.shape_cast %12 : vector<1x128xf32> to vector<1x128xf32>
    %19 = vector.broadcast %18 : vector<1x128xf32> to vector<8x128xf32>
    %20 = vector.broadcast %cst_9 : f32 to vector<8x128xf32>
    %21 = arith.select %17, %19, %20 : vector<8x128xi1>, vector<8x128xf32>
    %22 = vector.shape_cast %9 : vector<1x128xf32> to vector<1x128xf32>
    %23 = vector.broadcast %22 : vector<1x128xf32> to vector<8x128xf32>
    %24 = arith.select %15, %23, %21 : vector<8x128xi1>, vector<8x128xf32>
    %c0_10 = arith.constant 0 : index
    %c0_11 = arith.constant 0 : index
    %25 = vector.load %arg5[%c0_10, %c0_11] : memref<8x128xf32, #tpu.memory_space<vmem>>, vector<8x128xf32>
    tpu.vector_store %arg5[%c0_10, %c0_11], %24 {strides = array<i32>} : memref<8x128xf32, #tpu.memory_space<vmem>>, vector<8x128xf32>,
    return
  }
  func.func @transform_0(%arg0: i32) -> (i32, i32) {
    %c0_i32 = arith.constant 0 : i32
    %c0_i32_0 = arith.constant 0 : i32
    return %arg0, %c0_i32 : i32, i32
  }
  func.func @transform_1(%arg0: i32) -> (i32, i32) {
    %c0_i32 = arith.constant 0 : i32
    %c0_i32_0 = arith.constant 0 : i32
    %c0_i32_1 = arith.constant 0 : i32
    return %c0_i32, %c0_i32_0 : i32, i32
  }
  func.func @transform_2(%arg0: i32) -> (i32, i32) {
    %c0_i32 = arith.constant 0 : i32
    %c0_i32_0 = arith.constant 0 : i32
    %c0_i32_1 = arith.constant 0 : i32
    return %c0_i32, %c0_i32_0 : i32, i32
  }
  func.func @transform_3(%arg0: i32) -> (i32, i32) {
    %c0_i32 = arith.constant 0 : i32
    %c0_i32_0 = arith.constant 0 : i32
    return %arg0, %c0_i32 : i32, i32
  }
  func.func @transform_4(%arg0: i32) -> (i32, i32) {
    %c0_i32 = arith.constant 0 : i32
    %c0_i32_0 = arith.constant 0 : i32
    return %arg0, %c0_i32 : i32, i32
  }
}

module attributes {stable_mosaic.version = 11 : i64} {
  func.func @_conv_act_kernel(%arg0: i32, %arg1: memref<32x128xbf16, #tpu.memory_space<vmem>>, %arg2: memref<128x128xbf16, #tpu.memory_space<vmem>>, %arg3: memref<1x128xf32, #tpu.memory_space<vmem>>, %arg4: memref<32x128xbf16, #tpu.memory_space<vmem>>) attributes {dimension_semantics = [#tpu.dimension_semantics<parallel>], iteration_bounds = array<i64: 4>, scalar_prefetch = 0 : i64, scratch_operands = 0 : i64, tpu.core_type = #tpu.core_type<tc>, window_params = [{transform_indices = @transform_0, window_bounds = array<i64: 32, 128>}, {pipeline_mode = #tpu.pipeline_mode<synchronous>, transform_indices = @transform_1, window_bounds = array<i64: 128, 128>}, {pipeline_mode = #tpu.pipeline_mode<synchronous>, transform_indices = @transform_2, window_bounds = array<i64: 1, 128>}, {transform_indices = @transform_3, window_bounds = array<i64: 32, 128>}]} {
    %c0 = arith.constant 0 : index
    %c0_0 = arith.constant 0 : index
    %0 = vector.load %arg1[%c0, %c0_0] : memref<32x128xbf16, #tpu.memory_space<vmem>>, vector<32x128xbf16>
    %c0_1 = arith.constant 0 : index
    %c0_2 = arith.constant 0 : index
    %1 = vector.load %arg2[%c0_1, %c0_2] : memref<128x128xbf16, #tpu.memory_space<vmem>>, vector<128x128xbf16>
    %cst = arith.constant dense<0.000000e+00> : vector<32x128xf32>
    %2 = tpu.matmul %0, %1, %cst {dimension_numbers = #tpu.dot_dimension_numbers<[1], [0], [0], [1], [0, 0, 1, 1], [], []>} : vector<32x128xbf16>, vector<128x128xbf16>, vector<32x128xf32> -> vector<32x128xf32>
    %c0_3 = arith.constant 0 : index
    %c0_4 = arith.constant 0 : index
    %3 = vector.load %arg3[%c0_3, %c0_4] : memref<1x128xf32, #tpu.memory_space<vmem>>, vector<1x128xf32>
    %4 = vector.broadcast %3 : vector<1x128xf32> to vector<32x128xf32>
    %5 = arith.addf %2, %4 : vector<32x128xf32>
    %cst_5 = arith.constant 0.000000e+00 : f32
    %6 = vector.broadcast %cst_5 : f32 to vector<32x128xf32>
    %7 = arith.cmpf oge, %5, %6 : vector<32x128xf32>
    %cst_6 = arith.constant 0.00999999977 : f32
    %8 = vector.broadcast %cst_6 : f32 to vector<32x128xf32>
    %9 = arith.mulf %8, %5 : vector<32x128xf32>
    %10 = arith.select %7, %5, %9 : vector<32x128xi1>, vector<32x128xf32>
    %11 = arith.truncf %10 : vector<32x128xf32> to vector<32x128xbf16>
    %c0_7 = arith.constant 0 : index
    %c0_8 = arith.constant 0 : index
    %12 = vector.load %arg4[%c0_7, %c0_8] : memref<32x128xbf16, #tpu.memory_space<vmem>>, vector<32x128xbf16>
    tpu.vector_store %arg4[%c0_7, %c0_8], %11 {strides = array<i32>} : memref<32x128xbf16, #tpu.memory_space<vmem>>, vector<32x128xbf16>,
    return
  }
  func.func @transform_0(%arg0: i32) -> (i32, i32) {
    %c0_i32 = arith.constant 0 : i32
    %c0_i32_0 = arith.constant 0 : i32
    return %arg0, %c0_i32 : i32, i32
  }
  func.func @transform_1(%arg0: i32) -> (i32, i32) {
    %c0_i32 = arith.constant 0 : i32
    %c0_i32_0 = arith.constant 0 : i32
    %c0_i32_1 = arith.constant 0 : i32
    return %c0_i32, %c0_i32_0 : i32, i32
  }
  func.func @transform_2(%arg0: i32) -> (i32, i32) {
    %c0_i32 = arith.constant 0 : i32
    %c0_i32_0 = arith.constant 0 : i32
    %c0_i32_1 = arith.constant 0 : i32
    return %c0_i32, %c0_i32_0 : i32, i32
  }
  func.func @transform_3(%arg0: i32) -> (i32, i32) {
    %c0_i32 = arith.constant 0 : i32
    %c0_i32_0 = arith.constant 0 : i32
    return %arg0, %c0_i32 : i32, i32
  }
}

module attributes {stable_mosaic.version = 11 : i64} {
  func.func @_conv_stats_kernel(%arg0: i32, %arg1: memref<32x256xbf16, #tpu.memory_space<vmem>>, %arg2: memref<256x128xbf16, #tpu.memory_space<vmem>>, %arg3: memref<1x128xf32, #tpu.memory_space<vmem>>, %arg4: memref<32x128xbf16, #tpu.memory_space<vmem>>, %arg5: memref<8x128xf32, #tpu.memory_space<vmem>>) attributes {dimension_semantics = [#tpu.dimension_semantics<parallel>], iteration_bounds = array<i64: 4>, scalar_prefetch = 0 : i64, scratch_operands = 0 : i64, tpu.core_type = #tpu.core_type<tc>, window_params = [{transform_indices = @transform_0, window_bounds = array<i64: 32, 256>}, {pipeline_mode = #tpu.pipeline_mode<synchronous>, transform_indices = @transform_1, window_bounds = array<i64: 256, 128>}, {pipeline_mode = #tpu.pipeline_mode<synchronous>, transform_indices = @transform_2, window_bounds = array<i64: 1, 128>}, {transform_indices = @transform_3, window_bounds = array<i64: 32, 128>}, {transform_indices = @transform_4, window_bounds = array<i64: 8, 128>}]} {
    %c0 = arith.constant 0 : index
    %c0_0 = arith.constant 0 : index
    %0 = vector.load %arg1[%c0, %c0_0] : memref<32x256xbf16, #tpu.memory_space<vmem>>, vector<32x256xbf16>
    %c0_1 = arith.constant 0 : index
    %c0_2 = arith.constant 0 : index
    %1 = vector.load %arg2[%c0_1, %c0_2] : memref<256x128xbf16, #tpu.memory_space<vmem>>, vector<256x128xbf16>
    %cst = arith.constant dense<0.000000e+00> : vector<32x128xf32>
    %2 = tpu.matmul %0, %1, %cst {dimension_numbers = #tpu.dot_dimension_numbers<[1], [0], [0], [1], [0, 0, 1, 1], [], []>} : vector<32x256xbf16>, vector<256x128xbf16>, vector<32x128xf32> -> vector<32x128xf32>
    %c0_3 = arith.constant 0 : index
    %c0_4 = arith.constant 0 : index
    %3 = vector.load %arg3[%c0_3, %c0_4] : memref<1x128xf32, #tpu.memory_space<vmem>>, vector<1x128xf32>
    %4 = vector.broadcast %3 : vector<1x128xf32> to vector<32x128xf32>
    %5 = arith.addf %2, %4 : vector<32x128xf32>
    %6 = arith.truncf %5 : vector<32x128xf32> to vector<32x128xbf16>
    %c0_5 = arith.constant 0 : index
    %c0_6 = arith.constant 0 : index
    %7 = vector.load %arg4[%c0_5, %c0_6] : memref<32x128xbf16, #tpu.memory_space<vmem>>, vector<32x128xbf16>
    tpu.vector_store %arg4[%c0_5, %c0_6], %6 {strides = array<i32>} : memref<32x128xbf16, #tpu.memory_space<vmem>>, vector<32x128xbf16>,
    %cst_7 = arith.constant dense<0.000000e+00> : vector<128xf32>
    %8 = vector.multi_reduction <add>, %5, %cst_7 [0] : vector<32x128xf32> to vector<128xf32>
    %9 = vector.shape_cast %8 : vector<128xf32> to vector<1x128xf32>
    %10 = arith.mulf %5, %5 : vector<32x128xf32>
    %cst_8 = arith.constant dense<0.000000e+00> : vector<128xf32>
    %11 = vector.multi_reduction <add>, %10, %cst_8 [0] : vector<32x128xf32> to vector<128xf32>
    %12 = vector.shape_cast %11 : vector<128xf32> to vector<1x128xf32>
    %13 = tpu.iota {dimensions = array<i32: 0>} : vector<8x128xi32>
    %c0_i32 = arith.constant 0 : i32
    %14 = vector.broadcast %c0_i32 : i32 to vector<8x128xi32>
    %15 = arith.cmpi eq, %13, %14 : vector<8x128xi32>
    %c1_i32 = arith.constant 1 : i32
    %16 = vector.broadcast %c1_i32 : i32 to vector<8x128xi32>
    %17 = arith.cmpi eq, %13, %16 : vector<8x128xi32>
    %cst_9 = arith.constant 0.000000e+00 : f32
    %18 = vector.shape_cast %12 : vector<1x128xf32> to vector<1x128xf32>
    %19 = vector.broadcast %18 : vector<1x128xf32> to vector<8x128xf32>
    %20 = vector.broadcast %cst_9 : f32 to vector<8x128xf32>
    %21 = arith.select %17, %19, %20 : vector<8x128xi1>, vector<8x128xf32>
    %22 = vector.shape_cast %9 : vector<1x128xf32> to vector<1x128xf32>
    %23 = vector.broadcast %22 : vector<1x128xf32> to vector<8x128xf32>
    %24 = arith.select %15, %23, %21 : vector<8x128xi1>, vector<8x128xf32>
    %c0_10 = arith.constant 0 : index
    %c0_11 = arith.constant 0 : index
    %25 = vector.load %arg5[%c0_10, %c0_11] : memref<8x128xf32, #tpu.memory_space<vmem>>, vector<8x128xf32>
    tpu.vector_store %arg5[%c0_10, %c0_11], %24 {strides = array<i32>} : memref<8x128xf32, #tpu.memory_space<vmem>>, vector<8x128xf32>,
    return
  }
  func.func @transform_0(%arg0: i32) -> (i32, i32) {
    %c0_i32 = arith.constant 0 : i32
    %c0_i32_0 = arith.constant 0 : i32
    return %arg0, %c0_i32 : i32, i32
  }
  func.func @transform_1(%arg0: i32) -> (i32, i32) {
    %c0_i32 = arith.constant 0 : i32
    %c0_i32_0 = arith.constant 0 : i32
    %c0_i32_1 = arith.constant 0 : i32
    return %c0_i32, %c0_i32_0 : i32, i32
  }
  func.func @transform_2(%arg0: i32) -> (i32, i32) {
    %c0_i32 = arith.constant 0 : i32
    %c0_i32_0 = arith.constant 0 : i32
    %c0_i32_1 = arith.constant 0 : i32
    return %c0_i32, %c0_i32_0 : i32, i32
  }
  func.func @transform_3(%arg0: i32) -> (i32, i32) {
    %c0_i32 = arith.constant 0 : i32
    %c0_i32_0 = arith.constant 0 : i32
    return %arg0, %c0_i32 : i32, i32
  }
  func.func @transform_4(%arg0: i32) -> (i32, i32) {
    %c0_i32 = arith.constant 0 : i32
    %c0_i32_0 = arith.constant 0 : i32
    return %arg0, %c0_i32 : i32, i32
  }
}

module attributes {stable_mosaic.version = 11 : i64} {
  func.func @_conv_act_kernel(%arg0: i32, %arg1: memref<8x256xbf16, #tpu.memory_space<vmem>>, %arg2: memref<256x128xbf16, #tpu.memory_space<vmem>>, %arg3: memref<1x128xf32, #tpu.memory_space<vmem>>, %arg4: memref<8x128xbf16, #tpu.memory_space<vmem>>) attributes {dimension_semantics = [#tpu.dimension_semantics<parallel>], iteration_bounds = array<i64: 4>, scalar_prefetch = 0 : i64, scratch_operands = 0 : i64, tpu.core_type = #tpu.core_type<tc>, window_params = [{transform_indices = @transform_0, window_bounds = array<i64: 8, 256>}, {pipeline_mode = #tpu.pipeline_mode<synchronous>, transform_indices = @transform_1, window_bounds = array<i64: 256, 128>}, {pipeline_mode = #tpu.pipeline_mode<synchronous>, transform_indices = @transform_2, window_bounds = array<i64: 1, 128>}, {transform_indices = @transform_3, window_bounds = array<i64: 8, 128>}]} {
    %c0 = arith.constant 0 : index
    %c0_0 = arith.constant 0 : index
    %0 = vector.load %arg1[%c0, %c0_0] : memref<8x256xbf16, #tpu.memory_space<vmem>>, vector<8x256xbf16>
    %c0_1 = arith.constant 0 : index
    %c0_2 = arith.constant 0 : index
    %1 = vector.load %arg2[%c0_1, %c0_2] : memref<256x128xbf16, #tpu.memory_space<vmem>>, vector<256x128xbf16>
    %cst = arith.constant dense<0.000000e+00> : vector<8x128xf32>
    %2 = tpu.matmul %0, %1, %cst {dimension_numbers = #tpu.dot_dimension_numbers<[1], [0], [0], [1], [0, 0, 1, 1], [], []>} : vector<8x256xbf16>, vector<256x128xbf16>, vector<8x128xf32> -> vector<8x128xf32>
    %c0_3 = arith.constant 0 : index
    %c0_4 = arith.constant 0 : index
    %3 = vector.load %arg3[%c0_3, %c0_4] : memref<1x128xf32, #tpu.memory_space<vmem>>, vector<1x128xf32>
    %4 = vector.broadcast %3 : vector<1x128xf32> to vector<8x128xf32>
    %5 = arith.addf %2, %4 : vector<8x128xf32>
    %cst_5 = arith.constant 0.000000e+00 : f32
    %6 = vector.broadcast %cst_5 : f32 to vector<8x128xf32>
    %7 = arith.cmpf oge, %5, %6 : vector<8x128xf32>
    %cst_6 = arith.constant 0.00999999977 : f32
    %8 = vector.broadcast %cst_6 : f32 to vector<8x128xf32>
    %9 = arith.mulf %8, %5 : vector<8x128xf32>
    %10 = arith.select %7, %5, %9 : vector<8x128xi1>, vector<8x128xf32>
    %11 = arith.truncf %10 : vector<8x128xf32> to vector<8x128xbf16>
    %c0_7 = arith.constant 0 : index
    %c0_8 = arith.constant 0 : index
    %12 = vector.load %arg4[%c0_7, %c0_8] : memref<8x128xbf16, #tpu.memory_space<vmem>>, vector<8x128xbf16>
    tpu.vector_store %arg4[%c0_7, %c0_8], %11 {strides = array<i32>} : memref<8x128xbf16, #tpu.memory_space<vmem>>, vector<8x128xbf16>,
    return
  }
  func.func @transform_0(%arg0: i32) -> (i32, i32) {
    %c0_i32 = arith.constant 0 : i32
    %c0_i32_0 = arith.constant 0 : i32
    return %arg0, %c0_i32 : i32, i32
  }
  func.func @transform_1(%arg0: i32) -> (i32, i32) {
    %c0_i32 = arith.constant 0 : i32
    %c0_i32_0 = arith.constant 0 : i32
    %c0_i32_1 = arith.constant 0 : i32
    return %c0_i32, %c0_i32_0 : i32, i32
  }
  func.func @transform_2(%arg0: i32) -> (i32, i32) {
    %c0_i32 = arith.constant 0 : i32
    %c0_i32_0 = arith.constant 0 : i32
    %c0_i32_1 = arith.constant 0 : i32
    return %c0_i32, %c0_i32_0 : i32, i32
  }
  func.func @transform_3(%arg0: i32) -> (i32, i32) {
    %c0_i32 = arith.constant 0 : i32
    %c0_i32_0 = arith.constant 0 : i32
    return %arg0, %c0_i32 : i32, i32
  }
}

module attributes {stable_mosaic.version = 11 : i64} {
  func.func @_conv_stats_kernel(%arg0: i32, %arg1: memref<8x384xbf16, #tpu.memory_space<vmem>>, %arg2: memref<384x128xbf16, #tpu.memory_space<vmem>>, %arg3: memref<1x128xf32, #tpu.memory_space<vmem>>, %arg4: memref<8x128xbf16, #tpu.memory_space<vmem>>, %arg5: memref<8x128xf32, #tpu.memory_space<vmem>>) attributes {dimension_semantics = [#tpu.dimension_semantics<parallel>], iteration_bounds = array<i64: 4>, scalar_prefetch = 0 : i64, scratch_operands = 0 : i64, tpu.core_type = #tpu.core_type<tc>, window_params = [{transform_indices = @transform_0, window_bounds = array<i64: 8, 384>}, {pipeline_mode = #tpu.pipeline_mode<synchronous>, transform_indices = @transform_1, window_bounds = array<i64: 384, 128>}, {pipeline_mode = #tpu.pipeline_mode<synchronous>, transform_indices = @transform_2, window_bounds = array<i64: 1, 128>}, {transform_indices = @transform_3, window_bounds = array<i64: 8, 128>}, {transform_indices = @transform_4, window_bounds = array<i64: 8, 128>}]} {
    %c0 = arith.constant 0 : index
    %c0_0 = arith.constant 0 : index
    %0 = vector.load %arg1[%c0, %c0_0] : memref<8x384xbf16, #tpu.memory_space<vmem>>, vector<8x384xbf16>
    %c0_1 = arith.constant 0 : index
    %c0_2 = arith.constant 0 : index
    %1 = vector.load %arg2[%c0_1, %c0_2] : memref<384x128xbf16, #tpu.memory_space<vmem>>, vector<384x128xbf16>
    %cst = arith.constant dense<0.000000e+00> : vector<8x128xf32>
    %2 = tpu.matmul %0, %1, %cst {dimension_numbers = #tpu.dot_dimension_numbers<[1], [0], [0], [1], [0, 0, 1, 1], [], []>} : vector<8x384xbf16>, vector<384x128xbf16>, vector<8x128xf32> -> vector<8x128xf32>
    %c0_3 = arith.constant 0 : index
    %c0_4 = arith.constant 0 : index
    %3 = vector.load %arg3[%c0_3, %c0_4] : memref<1x128xf32, #tpu.memory_space<vmem>>, vector<1x128xf32>
    %4 = vector.broadcast %3 : vector<1x128xf32> to vector<8x128xf32>
    %5 = arith.addf %2, %4 : vector<8x128xf32>
    %6 = arith.truncf %5 : vector<8x128xf32> to vector<8x128xbf16>
    %c0_5 = arith.constant 0 : index
    %c0_6 = arith.constant 0 : index
    %7 = vector.load %arg4[%c0_5, %c0_6] : memref<8x128xbf16, #tpu.memory_space<vmem>>, vector<8x128xbf16>
    tpu.vector_store %arg4[%c0_5, %c0_6], %6 {strides = array<i32>} : memref<8x128xbf16, #tpu.memory_space<vmem>>, vector<8x128xbf16>,
    %cst_7 = arith.constant dense<0.000000e+00> : vector<128xf32>
    %8 = vector.multi_reduction <add>, %5, %cst_7 [0] : vector<8x128xf32> to vector<128xf32>
    %9 = vector.shape_cast %8 : vector<128xf32> to vector<1x128xf32>
    %10 = arith.mulf %5, %5 : vector<8x128xf32>
    %cst_8 = arith.constant dense<0.000000e+00> : vector<128xf32>
    %11 = vector.multi_reduction <add>, %10, %cst_8 [0] : vector<8x128xf32> to vector<128xf32>
    %12 = vector.shape_cast %11 : vector<128xf32> to vector<1x128xf32>
    %13 = tpu.iota {dimensions = array<i32: 0>} : vector<8x128xi32>
    %c0_i32 = arith.constant 0 : i32
    %14 = vector.broadcast %c0_i32 : i32 to vector<8x128xi32>
    %15 = arith.cmpi eq, %13, %14 : vector<8x128xi32>
    %c1_i32 = arith.constant 1 : i32
    %16 = vector.broadcast %c1_i32 : i32 to vector<8x128xi32>
    %17 = arith.cmpi eq, %13, %16 : vector<8x128xi32>
    %cst_9 = arith.constant 0.000000e+00 : f32
    %18 = vector.shape_cast %12 : vector<1x128xf32> to vector<1x128xf32>
    %19 = vector.broadcast %18 : vector<1x128xf32> to vector<8x128xf32>
    %20 = vector.broadcast %cst_9 : f32 to vector<8x128xf32>
    %21 = arith.select %17, %19, %20 : vector<8x128xi1>, vector<8x128xf32>
    %22 = vector.shape_cast %9 : vector<1x128xf32> to vector<1x128xf32>
    %23 = vector.broadcast %22 : vector<1x128xf32> to vector<8x128xf32>
    %24 = arith.select %15, %23, %21 : vector<8x128xi1>, vector<8x128xf32>
    %c0_10 = arith.constant 0 : index
    %c0_11 = arith.constant 0 : index
    %25 = vector.load %arg5[%c0_10, %c0_11] : memref<8x128xf32, #tpu.memory_space<vmem>>, vector<8x128xf32>
    tpu.vector_store %arg5[%c0_10, %c0_11], %24 {strides = array<i32>} : memref<8x128xf32, #tpu.memory_space<vmem>>, vector<8x128xf32>,
    return
  }
  func.func @transform_0(%arg0: i32) -> (i32, i32) {
    %c0_i32 = arith.constant 0 : i32
    %c0_i32_0 = arith.constant 0 : i32
    return %arg0, %c0_i32 : i32, i32
  }
  func.func @transform_1(%arg0: i32) -> (i32, i32) {
    %c0_i32 = arith.constant 0 : i32
    %c0_i32_0 = arith.constant 0 : i32
    %c0_i32_1 = arith.constant 0 : i32
    return %c0_i32, %c0_i32_0 : i32, i32
  }
  func.func @transform_2(%arg0: i32) -> (i32, i32) {
    %c0_i32 = arith.constant 0 : i32
    %c0_i32_0 = arith.constant 0 : i32
    %c0_i32_1 = arith.constant 0 : i32
    return %c0_i32, %c0_i32_0 : i32, i32
  }
  func.func @transform_3(%arg0: i32) -> (i32, i32) {
    %c0_i32 = arith.constant 0 : i32
    %c0_i32_0 = arith.constant 0 : i32
    return %arg0, %c0_i32 : i32, i32
  }
  func.func @transform_4(%arg0: i32) -> (i32, i32) {
    %c0_i32 = arith.constant 0 : i32
    %c0_i32_0 = arith.constant 0 : i32
    return %arg0, %c0_i32 : i32, i32
  }
}

module attributes {stable_mosaic.version = 11 : i64} {
  func.func @_conv_act_kernel(%arg0: i32, %arg1: memref<8x512xbf16, #tpu.memory_space<vmem>>, %arg2: memref<512x128xbf16, #tpu.memory_space<vmem>>, %arg3: memref<1x128xf32, #tpu.memory_space<vmem>>, %arg4: memref<8x128xbf16, #tpu.memory_space<vmem>>) attributes {dimension_semantics = [#tpu.dimension_semantics<parallel>], iteration_bounds = array<i64: 1>, scalar_prefetch = 0 : i64, scratch_operands = 0 : i64, tpu.core_type = #tpu.core_type<tc>, window_params = [{transform_indices = @transform_0, window_bounds = array<i64: 8, 512>}, {pipeline_mode = #tpu.pipeline_mode<synchronous>, transform_indices = @transform_1, window_bounds = array<i64: 512, 128>}, {pipeline_mode = #tpu.pipeline_mode<synchronous>, transform_indices = @transform_2, window_bounds = array<i64: 1, 128>}, {transform_indices = @transform_3, window_bounds = array<i64: 8, 128>}]} {
    %c0 = arith.constant 0 : index
    %c0_0 = arith.constant 0 : index
    %0 = vector.load %arg1[%c0, %c0_0] : memref<8x512xbf16, #tpu.memory_space<vmem>>, vector<8x512xbf16>
    %c0_1 = arith.constant 0 : index
    %c0_2 = arith.constant 0 : index
    %1 = vector.load %arg2[%c0_1, %c0_2] : memref<512x128xbf16, #tpu.memory_space<vmem>>, vector<512x128xbf16>
    %cst = arith.constant dense<0.000000e+00> : vector<8x128xf32>
    %2 = tpu.matmul %0, %1, %cst {dimension_numbers = #tpu.dot_dimension_numbers<[1], [0], [0], [1], [0, 0, 1, 1], [], []>} : vector<8x512xbf16>, vector<512x128xbf16>, vector<8x128xf32> -> vector<8x128xf32>
    %c0_3 = arith.constant 0 : index
    %c0_4 = arith.constant 0 : index
    %3 = vector.load %arg3[%c0_3, %c0_4] : memref<1x128xf32, #tpu.memory_space<vmem>>, vector<1x128xf32>
    %4 = vector.broadcast %3 : vector<1x128xf32> to vector<8x128xf32>
    %5 = arith.addf %2, %4 : vector<8x128xf32>
    %cst_5 = arith.constant 0.000000e+00 : f32
    %6 = vector.broadcast %cst_5 : f32 to vector<8x128xf32>
    %7 = arith.cmpf oge, %5, %6 : vector<8x128xf32>
    %cst_6 = arith.constant 0.00999999977 : f32
    %8 = vector.broadcast %cst_6 : f32 to vector<8x128xf32>
    %9 = arith.mulf %8, %5 : vector<8x128xf32>
    %10 = arith.select %7, %5, %9 : vector<8x128xi1>, vector<8x128xf32>
    %11 = arith.truncf %10 : vector<8x128xf32> to vector<8x128xbf16>
    %c0_7 = arith.constant 0 : index
    %c0_8 = arith.constant 0 : index
    %12 = vector.load %arg4[%c0_7, %c0_8] : memref<8x128xbf16, #tpu.memory_space<vmem>>, vector<8x128xbf16>
    tpu.vector_store %arg4[%c0_7, %c0_8], %11 {strides = array<i32>} : memref<8x128xbf16, #tpu.memory_space<vmem>>, vector<8x128xbf16>,
    return
  }
  func.func @transform_0(%arg0: i32) -> (i32, i32) {
    %c0_i32 = arith.constant 0 : i32
    %c0_i32_0 = arith.constant 0 : i32
    return %arg0, %c0_i32 : i32, i32
  }
  func.func @transform_1(%arg0: i32) -> (i32, i32) {
    %c0_i32 = arith.constant 0 : i32
    %c0_i32_0 = arith.constant 0 : i32
    %c0_i32_1 = arith.constant 0 : i32
    return %c0_i32, %c0_i32_0 : i32, i32
  }
  func.func @transform_2(%arg0: i32) -> (i32, i32) {
    %c0_i32 = arith.constant 0 : i32
    %c0_i32_0 = arith.constant 0 : i32
    %c0_i32_1 = arith.constant 0 : i32
    return %c0_i32, %c0_i32_0 : i32, i32
  }
  func.func @transform_3(%arg0: i32) -> (i32, i32) {
    %c0_i32 = arith.constant 0 : i32
    %c0_i32_0 = arith.constant 0 : i32
    return %arg0, %c0_i32 : i32, i32
  }
}

module attributes {stable_mosaic.version = 11 : i64} {
  func.func @_conv_stats_kernel(%arg0: i32, %arg1: memref<8x640xbf16, #tpu.memory_space<vmem>>, %arg2: memref<640x128xbf16, #tpu.memory_space<vmem>>, %arg3: memref<1x128xf32, #tpu.memory_space<vmem>>, %arg4: memref<8x128xbf16, #tpu.memory_space<vmem>>, %arg5: memref<8x128xf32, #tpu.memory_space<vmem>>) attributes {dimension_semantics = [#tpu.dimension_semantics<parallel>], iteration_bounds = array<i64: 1>, scalar_prefetch = 0 : i64, scratch_operands = 0 : i64, tpu.core_type = #tpu.core_type<tc>, window_params = [{transform_indices = @transform_0, window_bounds = array<i64: 8, 640>}, {pipeline_mode = #tpu.pipeline_mode<synchronous>, transform_indices = @transform_1, window_bounds = array<i64: 640, 128>}, {pipeline_mode = #tpu.pipeline_mode<synchronous>, transform_indices = @transform_2, window_bounds = array<i64: 1, 128>}, {transform_indices = @transform_3, window_bounds = array<i64: 8, 128>}, {transform_indices = @transform_4, window_bounds = array<i64: 8, 128>}]} {
    %c0 = arith.constant 0 : index
    %c0_0 = arith.constant 0 : index
    %0 = vector.load %arg1[%c0, %c0_0] : memref<8x640xbf16, #tpu.memory_space<vmem>>, vector<8x640xbf16>
    %c0_1 = arith.constant 0 : index
    %c0_2 = arith.constant 0 : index
    %1 = vector.load %arg2[%c0_1, %c0_2] : memref<640x128xbf16, #tpu.memory_space<vmem>>, vector<640x128xbf16>
    %cst = arith.constant dense<0.000000e+00> : vector<8x128xf32>
    %2 = tpu.matmul %0, %1, %cst {dimension_numbers = #tpu.dot_dimension_numbers<[1], [0], [0], [1], [0, 0, 1, 1], [], []>} : vector<8x640xbf16>, vector<640x128xbf16>, vector<8x128xf32> -> vector<8x128xf32>
    %c0_3 = arith.constant 0 : index
    %c0_4 = arith.constant 0 : index
    %3 = vector.load %arg3[%c0_3, %c0_4] : memref<1x128xf32, #tpu.memory_space<vmem>>, vector<1x128xf32>
    %4 = vector.broadcast %3 : vector<1x128xf32> to vector<8x128xf32>
    %5 = arith.addf %2, %4 : vector<8x128xf32>
    %6 = arith.truncf %5 : vector<8x128xf32> to vector<8x128xbf16>
    %c0_5 = arith.constant 0 : index
    %c0_6 = arith.constant 0 : index
    %7 = vector.load %arg4[%c0_5, %c0_6] : memref<8x128xbf16, #tpu.memory_space<vmem>>, vector<8x128xbf16>
    tpu.vector_store %arg4[%c0_5, %c0_6], %6 {strides = array<i32>} : memref<8x128xbf16, #tpu.memory_space<vmem>>, vector<8x128xbf16>,
    %cst_7 = arith.constant dense<0.000000e+00> : vector<128xf32>
    %8 = vector.multi_reduction <add>, %5, %cst_7 [0] : vector<8x128xf32> to vector<128xf32>
    %9 = vector.shape_cast %8 : vector<128xf32> to vector<1x128xf32>
    %10 = arith.mulf %5, %5 : vector<8x128xf32>
    %cst_8 = arith.constant dense<0.000000e+00> : vector<128xf32>
    %11 = vector.multi_reduction <add>, %10, %cst_8 [0] : vector<8x128xf32> to vector<128xf32>
    %12 = vector.shape_cast %11 : vector<128xf32> to vector<1x128xf32>
    %13 = tpu.iota {dimensions = array<i32: 0>} : vector<8x128xi32>
    %c0_i32 = arith.constant 0 : i32
    %14 = vector.broadcast %c0_i32 : i32 to vector<8x128xi32>
    %15 = arith.cmpi eq, %13, %14 : vector<8x128xi32>
    %c1_i32 = arith.constant 1 : i32
    %16 = vector.broadcast %c1_i32 : i32 to vector<8x128xi32>
    %17 = arith.cmpi eq, %13, %16 : vector<8x128xi32>
    %cst_9 = arith.constant 0.000000e+00 : f32
    %18 = vector.shape_cast %12 : vector<1x128xf32> to vector<1x128xf32>
    %19 = vector.broadcast %18 : vector<1x128xf32> to vector<8x128xf32>
    %20 = vector.broadcast %cst_9 : f32 to vector<8x128xf32>
    %21 = arith.select %17, %19, %20 : vector<8x128xi1>, vector<8x128xf32>
    %22 = vector.shape_cast %9 : vector<1x128xf32> to vector<1x128xf32>
    %23 = vector.broadcast %22 : vector<1x128xf32> to vector<8x128xf32>
    %24 = arith.select %15, %23, %21 : vector<8x128xi1>, vector<8x128xf32>
    %c0_10 = arith.constant 0 : index
    %c0_11 = arith.constant 0 : index
    %25 = vector.load %arg5[%c0_10, %c0_11] : memref<8x128xf32, #tpu.memory_space<vmem>>, vector<8x128xf32>
    tpu.vector_store %arg5[%c0_10, %c0_11], %24 {strides = array<i32>} : memref<8x128xf32, #tpu.memory_space<vmem>>, vector<8x128xf32>,
    return
  }
  func.func @transform_0(%arg0: i32) -> (i32, i32) {
    %c0_i32 = arith.constant 0 : i32
    %c0_i32_0 = arith.constant 0 : i32
    return %arg0, %c0_i32 : i32, i32
  }
  func.func @transform_1(%arg0: i32) -> (i32, i32) {
    %c0_i32 = arith.constant 0 : i32
    %c0_i32_0 = arith.constant 0 : i32
    %c0_i32_1 = arith.constant 0 : i32
    return %c0_i32, %c0_i32_0 : i32, i32
  }
  func.func @transform_2(%arg0: i32) -> (i32, i32) {
    %c0_i32 = arith.constant 0 : i32
    %c0_i32_0 = arith.constant 0 : i32
    %c0_i32_1 = arith.constant 0 : i32
    return %c0_i32, %c0_i32_0 : i32, i32
  }
  func.func @transform_3(%arg0: i32) -> (i32, i32) {
    %c0_i32 = arith.constant 0 : i32
    %c0_i32_0 = arith.constant 0 : i32
    return %arg0, %c0_i32 : i32, i32
  }
  func.func @transform_4(%arg0: i32) -> (i32, i32) {
    %c0_i32 = arith.constant 0 : i32
    %c0_i32_0 = arith.constant 0 : i32
    return %arg0, %c0_i32 : i32, i32
  }
}

</mosaic_0001>

<llo_original>
// kernel: encoder_forward.12
$region0: #{encoder_forward.12}
  #allocation0 [shape = 'u32[]', space=smem, size = 0x4, offset = 0x4, fixed_abs, tag = 'smem constant byte address 0x4 - core index']
  #allocation1 [shape = 'u32[144,128]{1,0:T(1,128)}', space=vmem, size = 0x12000, scoped, tag = 'internal scratch']
  %s0 = inlined_call_operand.vmem [shape: bf16[512,128], index: 0, kind: input, shape index: {}]
  %s1 = inlined_call_operand.vmem [shape: bf16[128,128], index: 1, kind: input, shape index: {}]
  %s2 = inlined_call_operand.vmem [shape: f32[1,128], index: 2, kind: input, shape index: {}]
  %s3 = inlined_call_operand.vmem [shape: bf16[512,128], index: 3, kind: output, shape index: {}]
  %s4 = sld [smem:[#allocation0]]
  $region45: #{encoder_forward.12} parent=0
    _
  %s6 = ssub.s32 1, %s4
  %s7 = scalar_select 0, %s6, %s4
  loop: start=0, step=1, limit=6
  $region2: #{encoder_forward.12} parent=0 // loop_pre_header
    _
  $region3: #{encoder_forward.12} parent=0 // loop_header
    %s9 = sphi 0, %s13
    %p10 = scmp.ge.s32.totalorder %s9, 6
    %s19 = sphi 0, %s21
    %s22 = sphi 0, %s19
    %s23 = sphi 0, %s22
    %s39 = sphi 0, %s23
    %s43 = sphi 0, %s43
    %s45 = sphi 0, %s43
    %s46 = sphi 0, %s45
    %s60 = sphi 0, %s46
    %s64 = sphi 0, %s64
    %s66 = sphi 0, %s64
    %s67 = sphi 0, %s66
    %s81 = sphi 0, %s67
    %s87 = sphi 0, %s89
    %s90 = sphi 0, %s87
    %s91 = sphi 0, %s90
    %s107 = sphi 0, %s91
  $region4: #{encoder_forward.12} parent=0 // loop_header_branch
    %12 = sbr.rel (%p10) target = $region8
  $region5: #{encoder_forward.12} parent=0 // loop_body
    %s14 = ssub.s32 %s9, 1
    %s15 = ssub.s32 %s9, 2
    %s16 = sadd.s32 %s9, 1
    %s17 = ssub.s32 %s9, %s16
    %p18 = scmp.eq.s32.totalorder %s17, 0
    %s20 = sadd.s32 %s19, 1
    %s21 = scalar_select %p18, %s19, %s20
    %p24 = pneg %p18
    %p25 = scmp.eq.s32.totalorder %s9, 3
    %p26 = por %p24, %p25
    %p27 = scmp.ne.s32.totalorder %s19, %s22
    %p28 = scmp.eq.s32.totalorder %s9, 0
    %p29 = por %p27, %p28
    %p30 = scmp.ne.s32.totalorder %s19, %s22
    %p31 = scmp.eq.s32.totalorder %s14, 3
    %p32 = por %p30, %p31
    %p33 = scmp.ne.s32.totalorder %s22, %s23
    %p34 = scmp.eq.s32.totalorder %s14, 0
    %p35 = por %p33, %p34
    %p36 = scmp.ne.s32.totalorder %s22, %s23
    %p37 = scmp.eq.s32.totalorder %s15, 3
    %p38 = por %p36, %p37
    %p40 = scmp.ne.s32.totalorder %s23, %s39
    %p41 = scmp.eq.s32.totalorder %s15, 0
    %p42 = por %p40, %p41
    %s44 = sadd.s32 %s43, 1
    %p47 = scmp.eq.s32.totalorder %s9, 3
    %p48 = scmp.ne.s32.totalorder %s43, %s45
    %p49 = scmp.eq.s32.totalorder %s9, 0
    %p50 = por %p48, %p49
    %p51 = scmp.ne.s32.totalorder %s43, %s45
    %p52 = scmp.eq.s32.totalorder %s14, 3
    %p53 = por %p51, %p52
    %p54 = scmp.ne.s32.totalorder %s45, %s46
    %p55 = scmp.eq.s32.totalorder %s14, 0
    %p56 = por %p54, %p55
    %p57 = scmp.ne.s32.totalorder %s45, %s46
    %p58 = scmp.eq.s32.totalorder %s15, 3
    %p59 = por %p57, %p58
    %p61 = scmp.ne.s32.totalorder %s46, %s60
    %p62 = scmp.eq.s32.totalorder %s15, 0
    %p63 = por %p61, %p62
    %s65 = sadd.s32 %s64, 1
    %p68 = scmp.eq.s32.totalorder %s9, 3
    %p69 = scmp.ne.s32.totalorder %s64, %s66
    %p70 = scmp.eq.s32.totalorder %s9, 0
    %p71 = por %p69, %p70
    %p72 = scmp.ne.s32.totalorder %s64, %s66
    %p73 = scmp.eq.s32.totalorder %s14, 3
    %p74 = por %p72, %p73
    %p75 = scmp.ne.s32.totalorder %s66, %s67
    %p76 = scmp.eq.s32.totalorder %s14, 0
    %p77 = por %p75, %p76
    %p78 = scmp.ne.s32.totalorder %s66, %s67
    %p79 = scmp.eq.s32.totalorder %s15, 3
    %p80 = por %p78, %p79
    %p82 = scmp.ne.s32.totalorder %s67, %s81
    %p83 = scmp.eq.s32.totalorder %s15, 0
    %p84 = por %p82, %p83
    %s85 = ssub.s32 %s9, %s16
    %p86 = scmp.eq.s32.totalorder %s85, 0
    %s88 = sadd.s32 %s87, 1
    %s89 = scalar_select %p86, %s87, %s88
    %p92 = pneg %p86
    %p93 = scmp.eq.s32.totalorder %s9, 3
    %p94 = por %p92, %p93
    %p95 = scmp.ne.s32.totalorder %s87, %s90
    %p96 = scmp.eq.s32.totalorder %s9, 0
    %p97 = por %p95, %p96
    %p98 = scmp.ne.s32.totalorder %s87, %s90
    %p99 = scmp.eq.s32.totalorder %s14, 3
    %p100 = por %p98, %p99
    %p101 = scmp.ne.s32.totalorder %s90, %s91
    %p102 = scmp.eq.s32.totalorder %s14, 0
    %p103 = por %p101, %p102
    %p104 = scmp.ne.s32.totalorder %s90, %s91
    %p105 = scmp.eq.s32.totalorder %s15, 3
    %p106 = por %p104, %p105
    %p108 = scmp.ne.s32.totalorder %s91, %s107
    %p109 = scmp.eq.s32.totalorder %s15, 0
    %p110 = por %p108, %p109
    %p111 = scmp.le.s32.totalorder 1, %s9
    %p112 = scmp.lt.s32.totalorder %s9, 5
    %p113 = pnand %p111, %p112
    %p114 = pneg %p113
    // Predicated region
    $region9: #{encoder_forward.12} parent=5 // pred_check
      _
    $region10: #{encoder_forward.12} parent=5 // pred_check_branch
      %116 = sbr.rel (%p113) target = $region12
    $region11: #{encoder_forward.12} parent=5 // pred_region
      %s117 = ssub.s32 %s9, 1
      // Predicated region
      $region13: #{encoder_forward.12} parent=11 // pred_check
        %p118 = pneg %p56
      $region14: #{encoder_forward.12} parent=11 // pred_check_branch
        %120 = sbr.rel (%p118) target = $region16
      $region15: #{encoder_forward.12} parent=11 // pred_region
        _
      $region16: #{encoder_forward.12} parent=11 // pred_fallthru
        _
      // Predicated region
      $region17: #{encoder_forward.12} parent=11 // pred_check
        %p121 = pneg %p77
      $region18: #{encoder_forward.12} parent=11 // pred_check_branch
        %123 = sbr.rel (%p121) target = $region20
      $region19: #{encoder_forward.12} parent=11 // pred_region
        _
      $region20: #{encoder_forward.12} parent=11 // pred_fallthru
        _
    $region12: #{encoder_forward.12} parent=5 // pred_fallthru
      _
    %p124 = scmp.lt.s32.totalorder %s9, 4
    // Predicated region
    $region21: #{encoder_forward.12} parent=5 // pred_check
      %p125 = pneg %p124
    $region22: #{encoder_forward.12} parent=5 // pred_check_branch
      %127 = sbr.rel (%p125) target = $region24
    $region23: #{encoder_forward.12} parent=5 // pred_region
      // Predicated region
      $region25: #{encoder_forward.12} parent=23 // pred_check
        %p128 = pneg %p29
      $region26: #{encoder_forward.12} parent=23 // pred_check_branch
        %130 = sbr.rel (%p128) target = $region28
      $region27: #{encoder_forward.12} parent=23 // pred_region
        %s131 = smul.u32 16, %s9
        %p132 = scmp.lt.s32.totalorder %s131, 63
        %s133 = scalar_select %p132, %s131, 63
        %s134 = smul.addr %s133, 4
        %s135 = scalar_lea.vmem %s0, %s134
        %s136 = smul.u32 16, %s9
      $region28: #{encoder_forward.12} parent=23 // pred_fallthru
        _
    $region24: #{encoder_forward.12} parent=5 // pred_fallthru
      _
    %p137 = scmp.le.s32.totalorder 1, %s9
    %p138 = scmp.lt.s32.totalorder %s9, 5
    %p139 = pnand %p137, %p138
    %p140 = pneg %p139
    // Predicated region
    $region29: #{encoder_forward.12} parent=5 // pred_check
      _
    $region30: #{encoder_forward.12} parent=5 // pred_check_branch
      %142 = sbr.rel (%p139) target = $region32
    $region31: #{encoder_forward.12} parent=5 // pred_region
      %s143 = ssub.s32 %s9, 1
      %s144 = smul.u32 16, %s14
      %p145 = scmp.lt.s32.totalorder %s144, 63
      %s146 = scalar_select %p145, %s144, 63
      %s147 = smul.addr %s146, 4
      %s148 = scalar_lea.vmem %s0, %s147
      %p149 = pneg %p35
      %p150 = pneg %p32
      %p151 = pneg %p56
      %p152 = pneg %p53
      %p153 = pneg %p77
      %p154 = pneg %p74
      %p155 = pneg %p103
      %p156 = pneg %p100
      %s157 = smul.u32 16, %s14
      %p158 = scmp.lt.s32.totalorder %s157, 63
      %s159 = scalar_select %p158, %s157, 63
      %s160 = smul.addr %s159, 4
      %s161 = scalar_lea.vmem %s3, %s160
      %s162 = smul.u32 16, %s14
      %p163 = scmp.lt.s32.totalorder %s162, 63
      %s164 = scalar_select %p163, %s162, 63
      %s165 = smul.addr %s164, 4
      %s166 = scalar_lea.vmem %s0, %s165
      %s167 = smul.u32 16, %s14
      %s168 = smul.u32 16, %s14
      %p169 = scmp.lt.s32.totalorder %s168, 63
      %s170 = scalar_select %p169, %s168, 63
      %s171 = smul.addr %s170, 4
      %s172 = scalar_lea.vmem %s3, %s171
      %s173 = smul.u32 16, %s14
      %v175 = vld [vmem:[%s166] sm:$0xf]
      %v176 = vld [vmem:[%s166 + $0x4] sm:$0xf]
      %v177 = vld [vmem:[%s166 + $0x8] sm:$0xf]
      %v178 = vld [vmem:[%s166 + $0xc] sm:$0xf]
      %v179 = vld [vmem:[%s166 + $0x10] sm:$0xf]
      %v180 = vld [vmem:[%s166 + $0x14] sm:$0xf]
      %v181 = vld [vmem:[%s166 + $0x18] sm:$0xf]
      %v182 = vld [vmem:[%s166 + $0x1c] sm:$0xf]
      %v183 = vld [vmem:[%s166 + $0x20] sm:$0xf]
      %v184 = vld [vmem:[%s166 + $0x24] sm:$0xf]
      %v185 = vld [vmem:[%s166 + $0x28] sm:$0xf]
      %v186 = vld [vmem:[%s166 + $0x2c] sm:$0xf]
      %v187 = vld [vmem:[%s166 + $0x30] sm:$0xf]
      %v188 = vld [vmem:[%s166 + $0x34] sm:$0xf]
      %v189 = vld [vmem:[%s166 + $0x38] sm:$0xf]
      %v190 = vld [vmem:[%s166 + $0x3c] sm:$0xf]
      %v191 = vld [vmem:[%s1] sm:$0xf]
      %v192 = vld [vmem:[%s1 + $0x4] sm:$0xf]
      %v193 = vld [vmem:[%s1 + $0x8] sm:$0xf]
      %v194 = vld [vmem:[%s1 + $0xc] sm:$0xf]
      %v195 = vld [vmem:[%s1 + $0x10] sm:$0xf]
      %v196 = vld [vmem:[%s1 + $0x14] sm:$0xf]
      %v197 = vld [vmem:[%s1 + $0x18] sm:$0xf]
      %v198 = vld [vmem:[%s1 + $0x1c] sm:$0xf]
      %v199 = vld [vmem:[%s1 + $0x20] sm:$0xf]
      %v200 = vld [vmem:[%s1 + $0x24] sm:$0xf]
      %v201 = vld [vmem:[%s1 + $0x28] sm:$0xf]
      %v202 = vld [vmem:[%s1 + $0x2c] sm:$0xf]
      %v203 = vld [vmem:[%s1 + $0x30] sm:$0xf]
      %v204 = vld [vmem:[%s1 + $0x34] sm:$0xf]
      %v205 = vld [vmem:[%s1 + $0x38] sm:$0xf]
      %v206 = vld [vmem:[%s1 + $0x3c] sm:$0xf]
      %v207 = vld [vmem:[%s2] sm:$0x1]
      %v209 = vlaneseq
      %v210 = vshrl.u32 %v209, 7
      %v211 = vsub.s32 0, %v210
      %v212 = vrot.slane %v207, %v211
      %v230 = vunpack.c.l.b16 %v175
      %v231 = vunpack.c.l.b16 %v176
      %v232 = vunpack.c.l.b16 %v177
      %v233 = vunpack.c.l.b16 %v178
      %v234 = vunpack.c.l.b16 %v179
      %v235 = vunpack.c.l.b16 %v180
      %v236 = vunpack.c.l.b16 %v181
      %v237 = vunpack.c.l.b16 %v182
      %v238 = vunpack.c.l.b16 %v183
      %v239 = vunpack.c.l.b16 %v184
      %v240 = vunpack.c.l.b16 %v185
      %v241 = vunpack.c.l.b16 %v186
      %v242 = vunpack.c.l.b16 %v187
      %v243 = vunpack.c.l.b16 %v188
      %v244 = vunpack.c.l.b16 %v189
      %v245 = vunpack.c.l.b16 %v190
      %v246 = vpack.c.b16 %v231, %v230
      %v247 = vpack.c.b16 %v233, %v232
      %v248 = vpack.c.b16 %v235, %v234
      %v249 = vpack.c.b16 %v237, %v236
      %v250 = vpack.c.b16 %v239, %v238
      %v251 = vpack.c.b16 %v241, %v240
      %v252 = vpack.c.b16 %v243, %v242
      %v253 = vpack.c.b16 %v245, %v244
      %v278 = vunpack.c.l.b16 %v191
      %v279 = vunpack.c.l.b16 %v192
      %v280 = vunpack.c.l.b16 %v193
      %v281 = vunpack.c.l.b16 %v194
      %v282 = vunpack.c.l.b16 %v195
      %v283 = vunpack.c.l.b16 %v196
      %v284 = vunpack.c.l.b16 %v197
      %v285 = vunpack.c.l.b16 %v198
      %v286 = vunpack.c.l.b16 %v199
      %v287 = vunpack.c.l.b16 %v200
      %v288 = vunpack.c.l.b16 %v201
      %v289 = vunpack.c.l.b16 %v202
      %v290 = vunpack.c.l.b16 %v203
      %v291 = vunpack.c.l.b16 %v204
      %v292 = vunpack.c.l.b16 %v205
      %v293 = vunpack.c.l.b16 %v206
      %v294 = vpack.c.b16 %v279, %v278
      %v295 = vpack.c.b16 %v281, %v280
      %v296 = vpack.c.b16 %v283, %v282
      %v297 = vpack.c.b16 %v285, %v284
      %v298 = vpack.c.b16 %v287, %v286
      %v299 = vpack.c.b16 %v289, %v288
      %v300 = vpack.c.b16 %v291, %v290
      %v301 = vpack.c.b16 %v293, %v292
      %310 = vmatprep.subr.bf16.mxu0 0
      %311 = vmatpush1.bf16.msra.mxu0 %v294
      %312 = vmatprep.subr.bf16.mxu0 0
      %313 = vmatpush1.bf16.msra.mxu0 %v295
      %314 = vmatprep.subr.bf16.mxu0 0
      %315 = vmatpush1.bf16.msra.mxu0 %v296
      %316 = vmatprep.subr.bf16.mxu0 0
      %317 = vmatpush1.bf16.msra.mxu0 %v297
      %318 = vmatprep.subr.bf16.mxu0 0
      %319 = vmatpush1.bf16.msra.mxu0 %v298
      %320 = vmatprep.subr.bf16.mxu0 0
      %321 = vmatpush1.bf16.msra.mxu0 %v299
      %322 = vmatprep.subr.bf16.mxu0 0
      %323 = vmatpush1.bf16.msra.mxu0 %v300
      %324 = vmatprep.subr.bf16.mxu0 0
      %325 = vmatpush1.bf16.msra.mxu0 %v301
      %326 = vmatprep.subr.bf16.mxu0 0
      %327 = vmatpush1.bf16.msra.mxu0 0
      %328 = vmatprep.subr.bf16.mxu0 0
      %329 = vmatpush1.bf16.msra.mxu0 0
      %330 = vmatprep.subr.bf16.mxu0 0
      %331 = vmatpush1.bf16.msra.mxu0 0
      %332 = vmatprep.subr.bf16.mxu0 0
      %333 = vmatpush1.bf16.msra.mxu0 0
      %334 = vmatprep.subr.bf16.mxu0 0
      %335 = vmatpush1.bf16.msra.mxu0 0
      %336 = vmatprep.subr.bf16.mxu0 0
      %337 = vmatpush1.bf16.msra.mxu0 0
      %338 = vmatprep.subr.bf16.mxu0 0
      %339 = vmatpush1.bf16.msra.mxu0 0
      %340 = vmatprep.subr.bf16.mxu0 0
      %341 = vmatpush1.bf16.msra.mxu0 0
      %342 = vmatprep.mubr.bf16.mxu0 0
      %343 = vmatmul.mubr.bf16.gmra.mrb[0].mxu0 %v246
      %v344 = vpop.f32.mrb[0].mxu0
      %v345 = vadd.f32 %v212, %v344
      %v346 = vpop.f32.mrb[0].mxu0
      %v347 = vpop.f32.mrb[0].mxu0
      %v348 = vadd.f32 %v212, %v347
      %v349 = vpop.f32.mrb[0].mxu0
      %350 = vmatprep.mubr.bf16.mxu0 0
      %351 = vmatmul.mubr.bf16.gmra.mrb[0].mxu0 %v247
      %v352 = vpop.f32.mrb[0].mxu0
      %v353 = vadd.f32 %v212, %v352
      %v354 = vpop.f32.mrb[0].mxu0
      %v355 = vpop.f32.mrb[0].mxu0
      %v356 = vadd.f32 %v212, %v355
      %v357 = vpop.f32.mrb[0].mxu0
      %358 = vmatprep.mubr.bf16.mxu0 0
      %359 = vmatmul.mubr.bf16.gmra.mrb[0].mxu0 %v248
      %v360 = vpop.f32.mrb[0].mxu0
      %v361 = vadd.f32 %v212, %v360
      %v362 = vpop.f32.mrb[0].mxu0
      %v363 = vpop.f32.mrb[0].mxu0
      %v364 = vadd.f32 %v212, %v363
      %v365 = vpop.f32.mrb[0].mxu0
      %366 = vmatprep.mubr.bf16.mxu0 0
      %367 = vmatmul.mubr.bf16.gmra.mrb[0].mxu0 %v249
      %v368 = vpop.f32.mrb[0].mxu0
      %v369 = vadd.f32 %v212, %v368
      %v370 = vpop.f32.mrb[0].mxu0
      %v371 = vpop.f32.mrb[0].mxu0
      %v372 = vadd.f32 %v212, %v371
      %v373 = vpop.f32.mrb[0].mxu0
      %374 = vmatprep.mubr.bf16.mxu0 0
      %375 = vmatmul.mubr.bf16.gmra.mrb[0].mxu0 %v250
      %v376 = vpop.f32.mrb[0].mxu0
      %v377 = vadd.f32 %v212, %v376
      %v378 = vpop.f32.mrb[0].mxu0
      %v379 = vpop.f32.mrb[0].mxu0
      %v380 = vadd.f32 %v212, %v379
      %v381 = vpop.f32.mrb[0].mxu0
      %382 = vmatprep.mubr.bf16.mxu0 0
      %383 = vmatmul.mubr.bf16.gmra.mrb[0].mxu0 %v251
      %v384 = vpop.f32.mrb[0].mxu0
      %v385 = vadd.f32 %v212, %v384
      %v386 = vpop.f32.mrb[0].mxu0
      %v387 = vpop.f32.mrb[0].mxu0
      %v388 = vadd.f32 %v212, %v387
      %v389 = vpop.f32.mrb[0].mxu0
      %390 = vmatprep.mubr.bf16.mxu0 0
      %391 = vmatmul.mubr.bf16.gmra.mrb[0].mxu0 %v252
      %v392 = vpop.f32.mrb[0].mxu0
      %v393 = vadd.f32 %v212, %v392
      %v394 = vpop.f32.mrb[0].mxu0
      %v395 = vpop.f32.mrb[0].mxu0
      %v396 = vadd.f32 %v212, %v395
      %v397 = vpop.f32.mrb[0].mxu0
      %398 = vmatprep.mubr.bf16.mxu0 0
      %399 = vmatmul.mubr.bf16.gmra.mrb[0].mxu0 %v253
      %v400 = vpop.f32.mrb[0].mxu0
      %v401 = vadd.f32 %v212, %v400
      %v402 = vpop.f32.mrb[0].mxu0
      %v403 = vpop.f32.mrb[0].mxu0
      %v404 = vadd.f32 %v212, %v403
      %v405 = vpop.f32.mrb[0].mxu0
      %406 = vdwg.mxu0
      %vm407 = vcmp.ge.f32.partialorder %v345, 0.0
      %vm408 = vcmp.ge.f32.partialorder %v348, 0.0
      %vm409 = vcmp.ge.f32.partialorder %v353, 0.0
      %vm410 = vcmp.ge.f32.partialorder %v356, 0.0
      %vm411 = vcmp.ge.f32.partialorder %v361, 0.0
      %vm412 = vcmp.ge.f32.partialorder %v364, 0.0
      %vm413 = vcmp.ge.f32.partialorder %v369, 0.0
      %vm414 = vcmp.ge.f32.partialorder %v372, 0.0
      %vm415 = vcmp.ge.f32.partialorder %v377, 0.0
      %vm416 = vcmp.ge.f32.partialorder %v380, 0.0
      %vm417 = vcmp.ge.f32.partialorder %v385, 0.0
      %vm418 = vcmp.ge.f32.partialorder %v388, 0.0
      %vm419 = vcmp.ge.f32.partialorder %v393, 0.0
      %vm420 = vcmp.ge.f32.partialorder %v396, 0.0
      %vm421 = vcmp.ge.f32.partialorder %v401, 0.0
      %vm422 = vcmp.ge.f32.partialorder %v404, 0.0
      %v423 = vmul.f32 %v345, 0.01
      %v424 = vmul.f32 %v348, 0.01
      %v425 = vmul.f32 %v353, 0.01
      %v426 = vmul.f32 %v356, 0.01
      %v427 = vmul.f32 %v361, 0.01
      %v428 = vmul.f32 %v364, 0.01
      %v429 = vmul.f32 %v369, 0.01
      %v430 = vmul.f32 %v372, 0.01
      %v431 = vmul.f32 %v377, 0.01
      %v432 = vmul.f32 %v380, 0.01
      %v433 = vmul.f32 %v385, 0.01
      %v434 = vmul.f32 %v388, 0.01
      %v435 = vmul.f32 %v393, 0.01
      %v436 = vmul.f32 %v396, 0.01
      %v437 = vmul.f32 %v401, 0.01
      %v438 = vmul.f32 %v404, 0.01
      %v439 = vsel %vm407, %v345, %v423
      %v440 = vsel %vm408, %v348, %v424
      %v441 = vsel %vm409, %v353, %v425
      %v442 = vsel %vm410, %v356, %v426
      %v443 = vsel %vm411, %v361, %v427
      %v444 = vsel %vm412, %v364, %v428
      %v445 = vsel %vm413, %v369, %v429
      %v446 = vsel %vm414, %v372, %v430
      %v447 = vsel %vm415, %v377, %v431
      %v448 = vsel %vm416, %v380, %v432
      %v449 = vsel %vm417, %v385, %v433
      %v450 = vsel %vm418, %v388, %v434
      %v451 = vsel %vm419, %v393, %v435
      %v452 = vsel %vm420, %v396, %v436
      %v453 = vsel %vm421, %v401, %v437
      %v454 = vsel %vm422, %v404, %v438
      %v455 = vpack.c.bf16 %v440, %v439
      %v456 = vpack.c.bf16 %v442, %v441
      %v457 = vpack.c.bf16 %v444, %v443
      %v458 = vpack.c.bf16 %v446, %v445
      %v459 = vpack.c.bf16 %v448, %v447
      %v460 = vpack.c.bf16 %v450, %v449
      %v461 = vpack.c.bf16 %v452, %v451
      %v462 = vpack.c.bf16 %v454, %v453
      %v471 = vunpack.c.l.b16 %v455
      %v472 = vunpack.c.h.b16 %v455
      %v473 = vunpack.c.l.b16 %v456
      %v474 = vunpack.c.h.b16 %v456
      %v475 = vunpack.c.l.b16 %v457
      %v476 = vunpack.c.h.b16 %v457
      %v477 = vunpack.c.l.b16 %v458
      %v478 = vunpack.c.h.b16 %v458
      %v479 = vunpack.c.l.b16 %v459
      %v480 = vunpack.c.h.b16 %v459
      %v481 = vunpack.c.l.b16 %v460
      %v482 = vunpack.c.h.b16 %v460
      %v483 = vunpack.c.l.b16 %v461
      %v484 = vunpack.c.h.b16 %v461
      %v485 = vunpack.c.l.b16 %v462
      %v486 = vunpack.c.h.b16 %v462
      %v487 = vpack.c.b16 %v471, %v471
      %v488 = vpack.c.b16 %v472, %v472
      %v489 = vpack.c.b16 %v473, %v473
      %v490 = vpack.c.b16 %v474, %v474
      %v491 = vpack.c.b16 %v475, %v475
      %v492 = vpack.c.b16 %v476, %v476
      %v493 = vpack.c.b16 %v477, %v477
      %v494 = vpack.c.b16 %v478, %v478
      %v495 = vpack.c.b16 %v479, %v479
      %v496 = vpack.c.b16 %v480, %v480
      %v497 = vpack.c.b16 %v481, %v481
      %v498 = vpack.c.b16 %v482, %v482
      %v499 = vpack.c.b16 %v483, %v483
      %v500 = vpack.c.b16 %v484, %v484
      %v501 = vpack.c.b16 %v485, %v485
      %v502 = vpack.c.b16 %v486, %v486
      %519 = vst [vmem:[%s172] sm:$0xf] %v487
      %520 = vst [vmem:[%s172 + $0x4] sm:$0xf] %v488
      %521 = vst [vmem:[%s172 + $0x8] sm:$0xf] %v489
      %522 = vst [vmem:[%s172 + $0xc] sm:$0xf] %v490
      %523 = vst [vmem:[%s172 + $0x10] sm:$0xf] %v491
      %524 = vst [vmem:[%s172 + $0x14] sm:$0xf] %v492
      %525 = vst [vmem:[%s172 + $0x18] sm:$0xf] %v493
      %526 = vst [vmem:[%s172 + $0x1c] sm:$0xf] %v494
      %527 = vst [vmem:[%s172 + $0x20] sm:$0xf] %v495
      %528 = vst [vmem:[%s172 + $0x24] sm:$0xf] %v496
      %529 = vst [vmem:[%s172 + $0x28] sm:$0xf] %v497
      %530 = vst [vmem:[%s172 + $0x2c] sm:$0xf] %v498
      %531 = vst [vmem:[%s172 + $0x30] sm:$0xf] %v499
      %532 = vst [vmem:[%s172 + $0x34] sm:$0xf] %v500
      %533 = vst [vmem:[%s172 + $0x38] sm:$0xf] %v501
      %534 = vst [vmem:[%s172 + $0x3c] sm:$0xf] %v502
      %s535 = smul.u32 16, %s14
      %p536 = scmp.lt.s32.totalorder %s535, 63
      %s537 = scalar_select %p536, %s535, 63
      %s538 = smul.addr %s537, 4
      %s539 = scalar_lea.vmem %s3, %s538
      // Predicated region
      $region33: #{encoder_forward.12} parent=31 // pred_check
        %p540 = pneg %p100
      $region34: #{encoder_forward.12} parent=31 // pred_check_branch
        %542 = sbr.rel (%p540) target = $region36
      $region35: #{encoder_forward.12} parent=31 // pred_region
        %s543 = smul.u32 16, %s14
      $region36: #{encoder_forward.12} parent=31 // pred_fallthru
        _
    $region32: #{encoder_forward.12} parent=5 // pred_fallthru
      _
    %p544 = scmp.le.s32.totalorder 2, %s9
    // Predicated region
    $region37: #{encoder_forward.12} parent=5 // pred_check
      %p545 = pneg %p544
    $region38: #{encoder_forward.12} parent=5 // pred_check_branch
      %547 = sbr.rel (%p545) target = $region40
    $region39: #{encoder_forward.12} parent=5 // pred_region
      %s548 = ssub.s32 %s9, 2
      // Predicated region
      $region41: #{encoder_forward.12} parent=39 // pred_check
        %p549 = pneg %p106
      $region42: #{encoder_forward.12} parent=39 // pred_check_branch
        %551 = sbr.rel (%p549) target = $region44
      $region43: #{encoder_forward.12} parent=39 // pred_region
        %s552 = smul.u32 16, %s15
        %p553 = scmp.lt.s32.totalorder %s552, 63
        %s554 = scalar_select %p553, %s552, 63
        %s555 = smul.addr %s554, 4
        %s556 = scalar_lea.vmem %s3, %s555
      $region44: #{encoder_forward.12} parent=39 // pred_fallthru
        _
    $region40: #{encoder_forward.12} parent=5 // pred_fallthru
      _
  $region6: #{encoder_forward.12} parent=0 // loop_footer
    %s13 = sadd.s32 1, %s9
  $region7: #{encoder_forward.12} parent=0 // loop_footer_branch
    %8 = sbr.rel target = $region3
  $region8: #{encoder_forward.12} parent=0 // loop_exit
    _

// kernel: encoder_forward.13
$region0: #{encoder_forward.13}
  #allocation0 [shape = 'u32[]', space=smem, size = 0x4, offset = 0x4, fixed_abs, tag = 'smem constant byte address 0x4 - core index']
  #allocation1 [shape = 'u32[144,128]{1,0:T(1,128)}', space=vmem, size = 0x12000, scoped, tag = 'internal scratch']
  %s0 = inlined_call_operand.vmem [shape: bf16[512,128], index: 0, kind: input, shape index: {}]
  %s1 = inlined_call_operand.vmem [shape: bf16[128,128], index: 1, kind: input, shape index: {}]
  %s2 = inlined_call_operand.vmem [shape: f32[1,128], index: 2, kind: input, shape index: {}]
  %s3 = inlined_call_operand.vmem [shape: bf16[512,128], index: 3, kind: output, shape index: {0}]
  %s4 = inlined_call_operand.vmem [shape: f32[32,128], index: 4, kind: output, shape index: {1}]
  %5 = xla_tuple %s3, %s4
  %s6 = sld [smem:[#allocation0]]
  $region53: #{encoder_forward.13} parent=0
    _
  %s8 = ssub.s32 1, %s6
  %s9 = scalar_select 0, %s8, %s6
  loop: start=0, step=1, limit=6
  $region2: #{encoder_forward.13} parent=0 // loop_pre_header
    _
  $region3: #{encoder_forward.13} parent=0 // loop_header
    %s11 = sphi 0, %s15
    %p12 = scmp.ge.s32.totalorder %s11, 6
    %s21 = sphi 0, %s23
    %s24 = sphi 0, %s21
    %s25 = sphi 0, %s24
    %s41 = sphi 0, %s25
    %s45 = sphi 0, %s45
    %s47 = sphi 0, %s45
    %s48 = sphi 0, %s47
    %s62 = sphi 0, %s48
    %s66 = sphi 0, %s66
    %s68 = sphi 0, %s66
    %s69 = sphi 0, %s68
    %s83 = sphi 0, %s69
    %s89 = sphi 0, %s91
    %s92 = sphi 0, %s89
    %s93 = sphi 0, %s92
    %s109 = sphi 0, %s93
    %s115 = sphi 0, %s117
    %s118 = sphi 0, %s115
    %s119 = sphi 0, %s118
    %s135 = sphi 0, %s119
  $region4: #{encoder_forward.13} parent=0 // loop_header_branch
    %14 = sbr.rel (%p12) target = $region8
  $region5: #{encoder_forward.13} parent=0 // loop_body
    %s16 = ssub.s32 %s11, 1
    %s17 = ssub.s32 %s11, 2
    %s18 = sadd.s32 %s11, 1
    %s19 = ssub.s32 %s11, %s18
    %p20 = scmp.eq.s32.totalorder %s19, 0
    %s22 = sadd.s32 %s21, 1
    %s23 = scalar_select %p20, %s21, %s22
    %p26 = pneg %p20
    %p27 = scmp.eq.s32.totalorder %s11, 3
    %p28 = por %p26, %p27
    %p29 = scmp.ne.s32.totalorder %s21, %s24
    %p30 = scmp.eq.s32.totalorder %s11, 0
    %p31 = por %p29, %p30
    %p32 = scmp.ne.s32.totalorder %s21, %s24
    %p33 = scmp.eq.s32.totalorder %s16, 3
    %p34 = por %p32, %p33
    %p35 = scmp.ne.s32.totalorder %s24, %s25
    %p36 = scmp.eq.s32.totalorder %s16, 0
    %p37 = por %p35, %p36
    %p38 = scmp.ne.s32.totalorder %s24, %s25
    %p39 = scmp.eq.s32.totalorder %s17, 3
    %p40 = por %p38, %p39
    %p42 = scmp.ne.s32.totalorder %s25, %s41
    %p43 = scmp.eq.s32.totalorder %s17, 0
    %p44 = por %p42, %p43
    %s46 = sadd.s32 %s45, 1
    %p49 = scmp.eq.s32.totalorder %s11, 3
    %p50 = scmp.ne.s32.totalorder %s45, %s47
    %p51 = scmp.eq.s32.totalorder %s11, 0
    %p52 = por %p50, %p51
    %p53 = scmp.ne.s32.totalorder %s45, %s47
    %p54 = scmp.eq.s32.totalorder %s16, 3
    %p55 = por %p53, %p54
    %p56 = scmp.ne.s32.totalorder %s47, %s48
    %p57 = scmp.eq.s32.totalorder %s16, 0
    %p58 = por %p56, %p57
    %p59 = scmp.ne.s32.totalorder %s47, %s48
    %p60 = scmp.eq.s32.totalorder %s17, 3
    %p61 = por %p59, %p60
    %p63 = scmp.ne.s32.totalorder %s48, %s62
    %p64 = scmp.eq.s32.totalorder %s17, 0
    %p65 = por %p63, %p64
    %s67 = sadd.s32 %s66, 1
    %p70 = scmp.eq.s32.totalorder %s11, 3
    %p71 = scmp.ne.s32.totalorder %s66, %s68
    %p72 = scmp.eq.s32.totalorder %s11, 0
    %p73 = por %p71, %p72
    %p74 = scmp.ne.s32.totalorder %s66, %s68
    %p75 = scmp.eq.s32.totalorder %s16, 3
    %p76 = por %p74, %p75
    %p77 = scmp.ne.s32.totalorder %s68, %s69
    %p78 = scmp.eq.s32.totalorder %s16, 0
    %p79 = por %p77, %p78
    %p80 = scmp.ne.s32.totalorder %s68, %s69
    %p81 = scmp.eq.s32.totalorder %s17, 3
    %p82 = por %p80, %p81
    %p84 = scmp.ne.s32.totalorder %s69, %s83
    %p85 = scmp.eq.s32.totalorder %s17, 0
    %p86 = por %p84, %p85
    %s87 = ssub.s32 %s11, %s18
    %p88 = scmp.eq.s32.totalorder %s87, 0
    %s90 = sadd.s32 %s89, 1
    %s91 = scalar_select %p88, %s89, %s90
    %p94 = pneg %p88
    %p95 = scmp.eq.s32.totalorder %s11, 3
    %p96 = por %p94, %p95
    %p97 = scmp.ne.s32.totalorder %s89, %s92
    %p98 = scmp.eq.s32.totalorder %s11, 0
    %p99 = por %p97, %p98
    %p100 = scmp.ne.s32.totalorder %s89, %s92
    %p101 = scmp.eq.s32.totalorder %s16, 3
    %p102 = por %p100, %p101
    %p103 = scmp.ne.s32.totalorder %s92, %s93
    %p104 = scmp.eq.s32.totalorder %s16, 0
    %p105 = por %p103, %p104
    %p106 = scmp.ne.s32.totalorder %s92, %s93
    %p107 = scmp.eq.s32.totalorder %s17, 3
    %p108 = por %p106, %p107
    %p110 = scmp.ne.s32.totalorder %s93, %s109
    %p111 = scmp.eq.s32.totalorder %s17, 0
    %p112 = por %p110, %p111
    %s113 = ssub.s32 %s11, %s18
    %p114 = scmp.eq.s32.totalorder %s113, 0
    %s116 = sadd.s32 %s115, 1
    %s117 = scalar_select %p114, %s115, %s116
    %p120 = pneg %p114
    %p121 = scmp.eq.s32.totalorder %s11, 3
    %p122 = por %p120, %p121
    %p123 = scmp.ne.s32.totalorder %s115, %s118
    %p124 = scmp.eq.s32.totalorder %s11, 0
    %p125 = por %p123, %p124
    %p126 = scmp.ne.s32.totalorder %s115, %s118
    %p127 = scmp.eq.s32.totalorder %s16, 3
    %p128 = por %p126, %p127
    %p129 = scmp.ne.s32.totalorder %s118, %s119
    %p130 = scmp.eq.s32.totalorder %s16, 0
    %p131 = por %p129, %p130
    %p132 = scmp.ne.s32.totalorder %s118, %s119
    %p133 = scmp.eq.s32.totalorder %s17, 3
    %p134 = por %p132, %p133
    %p136 = scmp.ne.s32.totalorder %s119, %s135
    %p137 = scmp.eq.s32.totalorder %s17, 0
    %p138 = por %p136, %p137
    %p139 = scmp.le.s32.totalorder 1, %s11
    %p140 = scmp.lt.s32.totalorder %s11, 5
    %p141 = pnand %p139, %p140
    %p142 = pneg %p141
    // Predicated region
    $region9: #{encoder_forward.13} parent=5 // pred_check
      _
    $region10: #{encoder_forward.13} parent=5 // pred_check_branch
      %144 = sbr.rel (%p141) target = $region12
    $region11: #{encoder_forward.13} parent=5 // pred_region
      %s145 = ssub.s32 %s11, 1
      // Predicated region
      $region13: #{encoder_forward.13} parent=11 // pred_check
        %p146 = pneg %p58
      $region14: #{encoder_forward.13} parent=11 // pred_check_branch
        %148 = sbr.rel (%p146) target = $region16
      $region15: #{encoder_forward.13} parent=11 // pred_region
        _
      $region16: #{encoder_forward.13} parent=11 // pred_fallthru
        _
      // Predicated region
      $region17: #{encoder_forward.13} parent=11 // pred_check
        %p149 = pneg %p79
      $region18: #{encoder_forward.13} parent=11 // pred_check_branch
        %151 = sbr.rel (%p149) target = $region20
      $region19: #{encoder_forward.13} parent=11 // pred_region
        _
      $region20: #{encoder_forward.13} parent=11 // pred_fallthru
        _
    $region12: #{encoder_forward.13} parent=5 // pred_fallthru
      _
    %p152 = scmp.lt.s32.totalorder %s11, 4
    // Predicated region
    $region21: #{encoder_forward.13} parent=5 // pred_check
      %p153 = pneg %p152
    $region22: #{encoder_forward.13} parent=5 // pred_check_branch
      %155 = sbr.rel (%p153) target = $region24
    $region23: #{encoder_forward.13} parent=5 // pred_region
      // Predicated region
      $region25: #{encoder_forward.13} parent=23 // pred_check
        %p156 = pneg %p31
      $region26: #{encoder_forward.13} parent=23 // pred_check_branch
        %158 = sbr.rel (%p156) target = $region28
      $region27: #{encoder_forward.13} parent=23 // pred_region
        %s159 = smul.u32 16, %s11
        %p160 = scmp.lt.s32.totalorder %s159, 63
        %s161 = scalar_select %p160, %s159, 63
        %s162 = smul.addr %s161, 4
        %s163 = scalar_lea.vmem %s0, %s162
        %s164 = smul.u32 16, %s11
      $region28: #{encoder_forward.13} parent=23 // pred_fallthru
        _
    $region24: #{encoder_forward.13} parent=5 // pred_fallthru
      _
    %p165 = scmp.le.s32.totalorder 1, %s11
    %p166 = scmp.lt.s32.totalorder %s11, 5
    %p167 = pnand %p165, %p166
    %p168 = pneg %p167
    // Predicated region
    $region29: #{encoder_forward.13} parent=5 // pred_check
      _
    $region30: #{encoder_forward.13} parent=5 // pred_check_branch
      %170 = sbr.rel (%p167) target = $region32
    $region31: #{encoder_forward.13} parent=5 // pred_region
      %s171 = ssub.s32 %s11, 1
      %s172 = smul.u32 16, %s16
      %p173 = scmp.lt.s32.totalorder %s172, 63
      %s174 = scalar_select %p173, %s172, 63
      %s175 = smul.addr %s174, 4
      %s176 = scalar_lea.vmem %s0, %s175
      %p177 = pneg %p37
      %p178 = pneg %p34
      %p179 = pneg %p58
      %p180 = pneg %p55
      %p181 = pneg %p79
      %p182 = pneg %p76
      %p183 = pneg %p105
      %p184 = pneg %p102
      %s185 = smul.u32 16, %s16
      %p186 = scmp.lt.s32.totalorder %s185, 63
      %s187 = scalar_select %p186, %s185, 63
      %s188 = smul.addr %s187, 4
      %s189 = scalar_lea.vmem %s3, %s188
      %p190 = pneg %p131
      %p191 = pneg %p128
      %p192 = scmp.lt.s32.totalorder %s16, 3
      %s193 = scalar_select %p192, %s16, 3
      %s194 = smul.addr %s193, 8
      %s195 = scalar_lea.vmem %s4, %s194
      %s196 = smul.u32 16, %s16
      %p197 = scmp.lt.s32.totalorder %s196, 63
      %s198 = scalar_select %p197, %s196, 63
      %s199 = smul.addr %s198, 4
      %s200 = scalar_lea.vmem %s0, %s199
      %s201 = smul.u32 16, %s16
      %s202 = smul.u32 16, %s16
      %p203 = scmp.lt.s32.totalorder %s202, 63
      %s204 = scalar_select %p203, %s202, 63
      %s205 = smul.addr %s204, 4
      %s206 = scalar_lea.vmem %s3, %s205
      %s207 = smul.u32 16, %s16
      %p208 = scmp.lt.s32.totalorder %s16, 3
      %s209 = scalar_select %p208, %s16, 3
      %s210 = smul.addr %s209, 8
      %s211 = scalar_lea.vmem %s4, %s210
      %v213 = vld [vmem:[%s200] sm:$0xf]
      %v214 = vld [vmem:[%s200 + $0x4] sm:$0xf]
      %v215 = vld [vmem:[%s200 + $0x8] sm:$0xf]
      %v216 = vld [vmem:[%s200 + $0xc] sm:$0xf]
      %v217 = vld [vmem:[%s200 + $0x10] sm:$0xf]
      %v218 = vld [vmem:[%s200 + $0x14] sm:$0xf]
      %v219 = vld [vmem:[%s200 + $0x18] sm:$0xf]
      %v220 = vld [vmem:[%s200 + $0x1c] sm:$0xf]
      %v221 = vld [vmem:[%s200 + $0x20] sm:$0xf]
      %v222 = vld [vmem:[%s200 + $0x24] sm:$0xf]
      %v223 = vld [vmem:[%s200 + $0x28] sm:$0xf]
      %v224 = vld [vmem:[%s200 + $0x2c] sm:$0xf]
      %v225 = vld [vmem:[%s200 + $0x30] sm:$0xf]
      %v226 = vld [vmem:[%s200 + $0x34] sm:$0xf]
      %v227 = vld [vmem:[%s200 + $0x38] sm:$0xf]
      %v228 = vld [vmem:[%s200 + $0x3c] sm:$0xf]
      %v229 = vld [vmem:[%s1] sm:$0xf]
      %v230 = vld [vmem:[%s1 + $0x4] sm:$0xf]
      %v231 = vld [vmem:[%s1 + $0x8] sm:$0xf]
      %v232 = vld [vmem:[%s1 + $0xc] sm:$0xf]
      %v233 = vld [vmem:[%s1 + $0x10] sm:$0xf]
      %v234 = vld [vmem:[%s1 + $0x14] sm:$0xf]
      %v235 = vld [vmem:[%s1 + $0x18] sm:$0xf]
      %v236 = vld [vmem:[%s1 + $0x1c] sm:$0xf]
      %v237 = vld [vmem:[%s1 + $0x20] sm:$0xf]
      %v238 = vld [vmem:[%s1 + $0x24] sm:$0xf]
      %v239 = vld [vmem:[%s1 + $0x28] sm:$0xf]
      %v240 = vld [vmem:[%s1 + $0x2c] sm:$0xf]
      %v241 = vld [vmem:[%s1 + $0x30] sm:$0xf]
      %v242 = vld [vmem:[%s1 + $0x34] sm:$0xf]
      %v243 = vld [vmem:[%s1 + $0x38] sm:$0xf]
      %v244 = vld [vmem:[%s1 + $0x3c] sm:$0xf]
      %v245 = vld [vmem:[%s2] sm:$0x1]
      %v247 = vlaneseq
      %v248 = vshrl.u32 %v247, 7
      %v249 = vsub.s32 0, %v248
      %v250 = vrot.slane %v245, %v249
      %v268 = vunpack.c.l.b16 %v213
      %v269 = vunpack.c.l.b16 %v214
      %v270 = vunpack.c.l.b16 %v215
      %v271 = vunpack.c.l.b16 %v216
      %v272 = vunpack.c.l.b16 %v217
      %v273 = vunpack.c.l.b16 %v218
      %v274 = vunpack.c.l.b16 %v219
      %v275 = vunpack.c.l.b16 %v220
      %v276 = vunpack.c.l.b16 %v221
      %v277 = vunpack.c.l.b16 %v222
      %v278 = vunpack.c.l.b16 %v223
      %v279 = vunpack.c.l.b16 %v224
      %v280 = vunpack.c.l.b16 %v225
      %v281 = vunpack.c.l.b16 %v226
      %v282 = vunpack.c.l.b16 %v227
      %v283 = vunpack.c.l.b16 %v228
      %v284 = vpack.c.b16 %v269, %v268
      %v285 = vpack.c.b16 %v271, %v270
      %v286 = vpack.c.b16 %v273, %v272
      %v287 = vpack.c.b16 %v275, %v274
      %v288 = vpack.c.b16 %v277, %v276
      %v289 = vpack.c.b16 %v279, %v278
      %v290 = vpack.c.b16 %v281, %v280
      %v291 = vpack.c.b16 %v283, %v282
      %v316 = vunpack.c.l.b16 %v229
      %v317 = vunpack.c.l.b16 %v230
      %v318 = vunpack.c.l.b16 %v231
      %v319 = vunpack.c.l.b16 %v232
      %v320 = vunpack.c.l.b16 %v233
      %v321 = vunpack.c.l.b16 %v234
      %v322 = vunpack.c.l.b16 %v235
      %v323 = vunpack.c.l.b16 %v236
      %v324 = vunpack.c.l.b16 %v237
      %v325 = vunpack.c.l.b16 %v238
      %v326 = vunpack.c.l.b16 %v239
      %v327 = vunpack.c.l.b16 %v240
      %v328 = vunpack.c.l.b16 %v241
      %v329 = vunpack.c.l.b16 %v242
      %v330 = vunpack.c.l.b16 %v243
      %v331 = vunpack.c.l.b16 %v244
      %v332 = vpack.c.b16 %v317, %v316
      %v333 = vpack.c.b16 %v319, %v318
      %v334 = vpack.c.b16 %v321, %v320
      %v335 = vpack.c.b16 %v323, %v322
      %v336 = vpack.c.b16 %v325, %v324
      %v337 = vpack.c.b16 %v327, %v326
      %v338 = vpack.c.b16 %v329, %v328
      %v339 = vpack.c.b16 %v331, %v330
      %348 = vmatprep.subr.bf16.mxu0 0
      %349 = vmatpush1.bf16.msra.mxu0 %v332
      %350 = vmatprep.subr.bf16.mxu0 0
      %351 = vmatpush1.bf16.msra.mxu0 %v333
      %352 = vmatprep.subr.bf16.mxu0 0
      %353 = vmatpush1.bf16.msra.mxu0 %v334
      %354 = vmatprep.subr.bf16.mxu0 0
      %355 = vmatpush1.bf16.msra.mxu0 %v335
      %356 = vmatprep.subr.bf16.mxu0 0
      %357 = vmatpush1.bf16.msra.mxu0 %v336
      %358 = vmatprep.subr.bf16.mxu0 0
      %359 = vmatpush1.bf16.msra.mxu0 %v337
      %360 = vmatprep.subr.bf16.mxu0 0
      %361 = vmatpush1.bf16.msra.mxu0 %v338
      %362 = vmatprep.subr.bf16.mxu0 0
      %363 = vmatpush1.bf16.msra.mxu0 %v339
      %364 = vmatprep.subr.bf16.mxu0 0
      %365 = vmatpush1.bf16.msra.mxu0 0
      %366 = vmatprep.subr.bf16.mxu0 0
      %367 = vmatpush1.bf16.msra.mxu0 0
      %368 = vmatprep.subr.bf16.mxu0 0
      %369 = vmatpush1.bf16.msra.mxu0 0
      %370 = vmatprep.subr.bf16.mxu0 0
      %371 = vmatpush1.bf16.msra.mxu0 0
      %372 = vmatprep.subr.bf16.mxu0 0
      %373 = vmatpush1.bf16.msra.mxu0 0
      %374 = vmatprep.subr.bf16.mxu0 0
      %375 = vmatpush1.bf16.msra.mxu0 0
      %376 = vmatprep.subr.bf16.mxu0 0
      %377 = vmatpush1.bf16.msra.mxu0 0
      %378 = vmatprep.subr.bf16.mxu0 0
      %379 = vmatpush1.bf16.msra.mxu0 0
      %380 = vmatprep.mubr.bf16.mxu0 0
      %381 = vmatmul.mubr.bf16.gmra.mrb[0].mxu0 %v284
      %v382 = vpop.f32.mrb[0].mxu0
      %v383 = vadd.f32 %v250, %v382
      %v384 = vpop.f32.mrb[0].mxu0
      %v385 = vpop.f32.mrb[0].mxu0
      %v386 = vadd.f32 %v250, %v385
      %v387 = vpop.f32.mrb[0].mxu0
      %388 = vmatprep.mubr.bf16.mxu0 0
      %389 = vmatmul.mubr.bf16.gmra.mrb[0].mxu0 %v285
      %v390 = vpop.f32.mrb[0].mxu0
      %v391 = vadd.f32 %v250, %v390
      %v392 = vpop.f32.mrb[0].mxu0
      %v393 = vpop.f32.mrb[0].mxu0
      %v394 = vadd.f32 %v250, %v393
      %v395 = vpop.f32.mrb[0].mxu0
      %396 = vmatprep.mubr.bf16.mxu0 0
      %397 = vmatmul.mubr.bf16.gmra.mrb[0].mxu0 %v286
      %v398 = vpop.f32.mrb[0].mxu0
      %v399 = vadd.f32 %v250, %v398
      %v400 = vpop.f32.mrb[0].mxu0
      %v401 = vpop.f32.mrb[0].mxu0
      %v402 = vadd.f32 %v250, %v401
      %v403 = vpop.f32.mrb[0].mxu0
      %404 = vmatprep.mubr.bf16.mxu0 0
      %405 = vmatmul.mubr.bf16.gmra.mrb[0].mxu0 %v287
      %v406 = vpop.f32.mrb[0].mxu0
      %v407 = vadd.f32 %v250, %v406
      %v408 = vpop.f32.mrb[0].mxu0
      %v409 = vpop.f32.mrb[0].mxu0
      %v410 = vadd.f32 %v250, %v409
      %v411 = vpop.f32.mrb[0].mxu0
      %412 = vmatprep.mubr.bf16.mxu0 0
      %413 = vmatmul.mubr.bf16.gmra.mrb[0].mxu0 %v288
      %v414 = vpop.f32.mrb[0].mxu0
      %v415 = vadd.f32 %v250, %v414
      %v416 = vpop.f32.mrb[0].mxu0
      %v417 = vpop.f32.mrb[0].mxu0
      %v418 = vadd.f32 %v250, %v417
      %v419 = vpop.f32.mrb[0].mxu0
      %420 = vmatprep.mubr.bf16.mxu0 0
      %421 = vmatmul.mubr.bf16.gmra.mrb[0].mxu0 %v289
      %v422 = vpop.f32.mrb[0].mxu0
      %v423 = vadd.f32 %v250, %v422
      %v424 = vpop.f32.mrb[0].mxu0
      %v425 = vpop.f32.mrb[0].mxu0
      %v426 = vadd.f32 %v250, %v425
      %v427 = vpop.f32.mrb[0].mxu0
      %428 = vmatprep.mubr.bf16.mxu0 0
      %429 = vmatmul.mubr.bf16.gmra.mrb[0].mxu0 %v290
      %v430 = vpop.f32.mrb[0].mxu0
      %v431 = vadd.f32 %v250, %v430
      %v432 = vpop.f32.mrb[0].mxu0
      %v433 = vpop.f32.mrb[0].mxu0
      %v434 = vadd.f32 %v250, %v433
      %v435 = vpop.f32.mrb[0].mxu0
      %436 = vmatprep.mubr.bf16.mxu0 0
      %437 = vmatmul.mubr.bf16.gmra.mrb[0].mxu0 %v291
      %v438 = vpop.f32.mrb[0].mxu0
      %v439 = vadd.f32 %v250, %v438
      %v440 = vpop.f32.mrb[0].mxu0
      %v441 = vpop.f32.mrb[0].mxu0
      %v442 = vadd.f32 %v250, %v441
      %v443 = vpop.f32.mrb[0].mxu0
      %444 = vdwg.mxu0
      %v445 = vpack.c.bf16 %v386, %v383
      %v446 = vpack.c.bf16 %v394, %v391
      %v447 = vpack.c.bf16 %v402, %v399
      %v448 = vpack.c.bf16 %v410, %v407
      %v449 = vpack.c.bf16 %v418, %v415
      %v450 = vpack.c.bf16 %v426, %v423
      %v451 = vpack.c.bf16 %v434, %v431
      %v452 = vpack.c.bf16 %v442, %v439
      %v461 = vunpack.c.l.b16 %v445
      %v462 = vunpack.c.h.b16 %v445
      %v463 = vunpack.c.l.b16 %v446
      %v464 = vunpack.c.h.b16 %v446
      %v465 = vunpack.c.l.b16 %v447
      %v466 = vunpack.c.h.b16 %v447
      %v467 = vunpack.c.l.b16 %v448
      %v468 = vunpack.c.h.b16 %v448
      %v469 = vunpack.c.l.b16 %v449
      %v470 = vunpack.c.h.b16 %v449
      %v471 = vunpack.c.l.b16 %v450
      %v472 = vunpack.c.h.b16 %v450
      %v473 = vunpack.c.l.b16 %v451
      %v474 = vunpack.c.h.b16 %v451
      %v475 = vunpack.c.l.b16 %v452
      %v476 = vunpack.c.h.b16 %v452
      %v477 = vpack.c.b16 %v461, %v461
      %v478 = vpack.c.b16 %v462, %v462
      %v479 = vpack.c.b16 %v463, %v463
      %v480 = vpack.c.b16 %v464, %v464
      %v481 = vpack.c.b16 %v465, %v465
      %v482 = vpack.c.b16 %v466, %v466
      %v483 = vpack.c.b16 %v467, %v467
      %v484 = vpack.c.b16 %v468, %v468
      %v485 = vpack.c.b16 %v469, %v469
      %v486 = vpack.c.b16 %v470, %v470
      %v487 = vpack.c.b16 %v471, %v471
      %v488 = vpack.c.b16 %v472, %v472
      %v489 = vpack.c.b16 %v473, %v473
      %v490 = vpack.c.b16 %v474, %v474
      %v491 = vpack.c.b16 %v475, %v475
      %v492 = vpack.c.b16 %v476, %v476
      %509 = vst [vmem:[%s206] sm:$0xf] %v477
      %510 = vst [vmem:[%s206 + $0x4] sm:$0xf] %v478
      %511 = vst [vmem:[%s206 + $0x8] sm:$0xf] %v479
      %512 = vst [vmem:[%s206 + $0xc] sm:$0xf] %v480
      %513 = vst [vmem:[%s206 + $0x10] sm:$0xf] %v481
      %514 = vst [vmem:[%s206 + $0x14] sm:$0xf] %v482
      %515 = vst [vmem:[%s206 + $0x18] sm:$0xf] %v483
      %516 = vst [vmem:[%s206 + $0x1c] sm:$0xf] %v484
      %517 = vst [vmem:[%s206 + $0x20] sm:$0xf] %v485
      %518 = vst [vmem:[%s206 + $0x24] sm:$0xf] %v486
      %519 = vst [vmem:[%s206 + $0x28] sm:$0xf] %v487
      %520 = vst [vmem:[%s206 + $0x2c] sm:$0xf] %v488
      %521 = vst [vmem:[%s206 + $0x30] sm:$0xf] %v489
      %522 = vst [vmem:[%s206 + $0x34] sm:$0xf] %v490
      %523 = vst [vmem:[%s206 + $0x38] sm:$0xf] %v491
      %524 = vst [vmem:[%s206 + $0x3c] sm:$0xf] %v492
      %v525 = vadd.f32 %v383, %v386
      %v526 = vadd.f32 %v525, %v391
      %v527 = vadd.f32 %v526, %v394
      %v528 = vadd.f32 %v527, %v399
      %v529 = vadd.f32 %v528, %v402
      %v530 = vadd.f32 %v529, %v407
      %v531 = vadd.f32 %v530, %v410
      %v532 = vadd.f32 %v531, %v415
      %v533 = vadd.f32 %v532, %v418
      %v534 = vadd.f32 %v533, %v423
      %v535 = vadd.f32 %v534, %v426
      %v536 = vadd.f32 %v535, %v431
      %v537 = vadd.f32 %v536, %v434
      %v538 = vadd.f32 %v537, %v439
      %v539 = vadd.f32 %v538, %v442
      %v540 = vrot.slane %v539, 4
      %v541 = vadd.f32 %v539, %v540
      %v542 = vrot.slane %v541, 2
      %v543 = vadd.f32 %v541, %v542
      %v544 = vrot.slane %v543, 1
      %v545 = vadd.f32 %v543, %v544
      %v546 = vmul.f32 %v383, %v383
      %v547 = vmul.f32 %v386, %v386
      %v548 = vmul.f32 %v391, %v391
      %v549 = vmul.f32 %v394, %v394
      %v550 = vmul.f32 %v399, %v399
      %v551 = vmul.f32 %v402, %v402
      %v552 = vmul.f32 %v407, %v407
      %v553 = vmul.f32 %v410, %v410
      %v554 = vmul.f32 %v415, %v415
      %v555 = vmul.f32 %v418, %v418
      %v556 = vmul.f32 %v423, %v423
      %v557 = vmul.f32 %v426, %v426
      %v558 = vmul.f32 %v431, %v431
      %v559 = vmul.f32 %v434, %v434
      %v560 = vmul.f32 %v439, %v439
      %v561 = vmul.f32 %v442, %v442
      %v562 = vadd.f32 %v546, %v547
      %v563 = vadd.f32 %v562, %v548
      %v564 = vadd.f32 %v563, %v549
      %v565 = vadd.f32 %v564, %v550
      %v566 = vadd.f32 %v565, %v551
      %v567 = vadd.f32 %v566, %v552
      %v568 = vadd.f32 %v567, %v553
      %v569 = vadd.f32 %v568, %v554
      %v570 = vadd.f32 %v569, %v555
      %v571 = vadd.f32 %v570, %v556
      %v572 = vadd.f32 %v571, %v557
      %v573 = vadd.f32 %v572, %v558
      %v574 = vadd.f32 %v573, %v559
      %v575 = vadd.f32 %v574, %v560
      %v576 = vadd.f32 %v575, %v561
      %v577 = vrot.slane %v576, 4
      %v578 = vadd.f32 %v576, %v577
      %v579 = vrot.slane %v578, 2
      %v580 = vadd.f32 %v578, %v579
      %v581 = vrot.slane %v580, 1
      %v582 = vadd.f32 %v580, %v581
      %v583 = vlaneseq
      %v584 = vshrl.u32 %v583, 7
      %vm585 = vcmp.eq.s32.totalorder %v584, 0
      %vm586 = vcmp.eq.s32.totalorder %v584, 1
      %v587 = vsel %vm586, %v582, 0.0
      %v588 = vsel %vm585, %v545, %v587
      %589 = vst [vmem:[%s211] sm:$0xff] %v588
      %s590 = smul.u32 16, %s16
      %p591 = scmp.lt.s32.totalorder %s590, 63
      %s592 = scalar_select %p591, %s590, 63
      %s593 = smul.addr %s592, 4
      %s594 = scalar_lea.vmem %s3, %s593
      %p595 = scmp.lt.s32.totalorder %s16, 3
      %s596 = scalar_select %p595, %s16, 3
      %s597 = smul.addr %s596, 8
      %s598 = scalar_lea.vmem %s4, %s597
      // Predicated region
      $region33: #{encoder_forward.13} parent=31 // pred_check
        %p599 = pneg %p102
      $region34: #{encoder_forward.13} parent=31 // pred_check_branch
        %601 = sbr.rel (%p599) target = $region36
      $region35: #{encoder_forward.13} parent=31 // pred_region
        %s602 = smul.u32 16, %s16
      $region36: #{encoder_forward.13} parent=31 // pred_fallthru
        _
      // Predicated region
      $region37: #{encoder_forward.13} parent=31 // pred_check
        %p603 = pneg %p128
      $region38: #{encoder_forward.13} parent=31 // pred_check_branch
        %605 = sbr.rel (%p603) target = $region40
      $region39: #{encoder_forward.13} parent=31 // pred_region
        _
      $region40: #{encoder_forward.13} parent=31 // pred_fallthru
        _
    $region32: #{encoder_forward.13} parent=5 // pred_fallthru
      _
    %p606 = scmp.le.s32.totalorder 2, %s11
    // Predicated region
    $region41: #{encoder_forward.13} parent=5 // pred_check
      %p607 = pneg %p606
    $region42: #{encoder_forward.13} parent=5 // pred_check_branch
      %609 = sbr.rel (%p607) target = $region44
    $region43: #{encoder_forward.13} parent=5 // pred_region
      %s610 = ssub.s32 %s11, 2
      // Predicated region
      $region45: #{encoder_forward.13} parent=43 // pred_check
        %p611 = pneg %p108
      $region46: #{encoder_forward.13} parent=43 // pred_check_branch
        %613 = sbr.rel (%p611) target = $region48
      $region47: #{encoder_forward.13} parent=43 // pred_region
        %s614 = smul.u32 16, %s17
        %p615 = scmp.lt.s32.totalorder %s614, 63
        %s616 = scalar_select %p615, %s614, 63
        %s617 = smul.addr %s616, 4
        %s618 = scalar_lea.vmem %s3, %s617
      $region48: #{encoder_forward.13} parent=43 // pred_fallthru
        _
      // Predicated region
      $region49: #{encoder_forward.13} parent=43 // pred_check
        %p619 = pneg %p134
      $region50: #{encoder_forward.13} parent=43 // pred_check_branch
        %621 = sbr.rel (%p619) target = $region52
      $region51: #{encoder_forward.13} parent=43 // pred_region
        %p622 = scmp.lt.s32.totalorder %s17, 3
        %s623 = scalar_select %p622, %s17, 3
        %s624 = smul.addr %s623, 8
        %s625 = scalar_lea.vmem %s4, %s624
      $region52: #{encoder_forward.13} parent=43 // pred_fallthru
        _
    $region44: #{encoder_forward.13} parent=5 // pred_fallthru
      _
  $region6: #{encoder_forward.13} parent=0 // loop_footer
    %s15 = sadd.s32 1, %s11
  $region7: #{encoder_forward.13} parent=0 // loop_footer_branch
    %10 = sbr.rel target = $region3
  $region8: #{encoder_forward.13} parent=0 // loop_exit
    _

// kernel: encoder_forward.15
$region0: #{encoder_forward.15}
  #allocation0 [shape = 'u32[]', space=smem, size = 0x4, offset = 0x4, fixed_abs, tag = 'smem constant byte address 0x4 - core index']
  #allocation1 [shape = 'u32[144,128]{1,0:T(1,128)}', space=vmem, size = 0x12000, scoped, tag = 'internal scratch']
  %s0 = inlined_call_operand.vmem [shape: bf16[128,128], index: 0, kind: input, shape index: {}]
  %s1 = inlined_call_operand.vmem [shape: bf16[128,128], index: 1, kind: input, shape index: {}]
  %s2 = inlined_call_operand.vmem [shape: f32[1,128], index: 2, kind: input, shape index: {}]
  %s3 = inlined_call_operand.vmem [shape: bf16[128,128], index: 3, kind: output, shape index: {}]
  %s4 = sld [smem:[#allocation0]]
  $region45: #{encoder_forward.15} parent=0
    _
  %s6 = ssub.s32 1, %s4
  %s7 = scalar_select 0, %s6, %s4
  loop: start=0, step=1, limit=6
  $region2: #{encoder_forward.15} parent=0 // loop_pre_header
    _
  $region3: #{encoder_forward.15} parent=0 // loop_header
    %s9 = sphi 0, %s13
    %p10 = scmp.ge.s32.totalorder %s9, 6
    %s19 = sphi 0, %s21
    %s22 = sphi 0, %s19
    %s23 = sphi 0, %s22
    %s39 = sphi 0, %s23
    %s43 = sphi 0, %s43
    %s45 = sphi 0, %s43
    %s46 = sphi 0, %s45
    %s60 = sphi 0, %s46
    %s64 = sphi 0, %s64
    %s66 = sphi 0, %s64
    %s67 = sphi 0, %s66
    %s81 = sphi 0, %s67
    %s87 = sphi 0, %s89
    %s90 = sphi 0, %s87
    %s91 = sphi 0, %s90
    %s107 = sphi 0, %s91
  $region4: #{encoder_forward.15} parent=0 // loop_header_branch
    %12 = sbr.rel (%p10) target = $region8
  $region5: #{encoder_forward.15} parent=0 // loop_body
    %s14 = ssub.s32 %s9, 1
    %s15 = ssub.s32 %s9, 2
    %s16 = sadd.s32 %s9, 1
    %s17 = ssub.s32 %s9, %s16
    %p18 = scmp.eq.s32.totalorder %s17, 0
    %s20 = sadd.s32 %s19, 1
    %s21 = scalar_select %p18, %s19, %s20
    %p24 = pneg %p18
    %p25 = scmp.eq.s32.totalorder %s9, 3
    %p26 = por %p24, %p25
    %p27 = scmp.ne.s32.totalorder %s19, %s22
    %p28 = scmp.eq.s32.totalorder %s9, 0
    %p29 = por %p27, %p28
    %p30 = scmp.ne.s32.totalorder %s19, %s22
    %p31 = scmp.eq.s32.totalorder %s14, 3
    %p32 = por %p30, %p31
    %p33 = scmp.ne.s32.totalorder %s22, %s23
    %p34 = scmp.eq.s32.totalorder %s14, 0
    %p35 = por %p33, %p34
    %p36 = scmp.ne.s32.totalorder %s22, %s23
    %p37 = scmp.eq.s32.totalorder %s15, 3
    %p38 = por %p36, %p37
    %p40 = scmp.ne.s32.totalorder %s23, %s39
    %p41 = scmp.eq.s32.totalorder %s15, 0
    %p42 = por %p40, %p41
    %s44 = sadd.s32 %s43, 1
    %p47 = scmp.eq.s32.totalorder %s9, 3
    %p48 = scmp.ne.s32.totalorder %s43, %s45
    %p49 = scmp.eq.s32.totalorder %s9, 0
    %p50 = por %p48, %p49
    %p51 = scmp.ne.s32.totalorder %s43, %s45
    %p52 = scmp.eq.s32.totalorder %s14, 3
    %p53 = por %p51, %p52
    %p54 = scmp.ne.s32.totalorder %s45, %s46
    %p55 = scmp.eq.s32.totalorder %s14, 0
    %p56 = por %p54, %p55
    %p57 = scmp.ne.s32.totalorder %s45, %s46
    %p58 = scmp.eq.s32.totalorder %s15, 3
    %p59 = por %p57, %p58
    %p61 = scmp.ne.s32.totalorder %s46, %s60
    %p62 = scmp.eq.s32.totalorder %s15, 0
    %p63 = por %p61, %p62
    %s65 = sadd.s32 %s64, 1
    %p68 = scmp.eq.s32.totalorder %s9, 3
    %p69 = scmp.ne.s32.totalorder %s64, %s66
    %p70 = scmp.eq.s32.totalorder %s9, 0
    %p71 = por %p69, %p70
    %p72 = scmp.ne.s32.totalorder %s64, %s66
    %p73 = scmp.eq.s32.totalorder %s14, 3
    %p74 = por %p72, %p73
    %p75 = scmp.ne.s32.totalorder %s66, %s67
    %p76 = scmp.eq.s32.totalorder %s14, 0
    %p77 = por %p75, %p76
    %p78 = scmp.ne.s32.totalorder %s66, %s67
    %p79 = scmp.eq.s32.totalorder %s15, 3
    %p80 = por %p78, %p79
    %p82 = scmp.ne.s32.totalorder %s67, %s81
    %p83 = scmp.eq.s32.totalorder %s15, 0
    %p84 = por %p82, %p83
    %s85 = ssub.s32 %s9, %s16
    %p86 = scmp.eq.s32.totalorder %s85, 0
    %s88 = sadd.s32 %s87, 1
    %s89 = scalar_select %p86, %s87, %s88
    %p92 = pneg %p86
    %p93 = scmp.eq.s32.totalorder %s9, 3
    %p94 = por %p92, %p93
    %p95 = scmp.ne.s32.totalorder %s87, %s90
    %p96 = scmp.eq.s32.totalorder %s9, 0
    %p97 = por %p95, %p96
    %p98 = scmp.ne.s32.totalorder %s87, %s90
    %p99 = scmp.eq.s32.totalorder %s14, 3
    %p100 = por %p98, %p99
    %p101 = scmp.ne.s32.totalorder %s90, %s91
    %p102 = scmp.eq.s32.totalorder %s14, 0
    %p103 = por %p101, %p102
    %p104 = scmp.ne.s32.totalorder %s90, %s91
    %p105 = scmp.eq.s32.totalorder %s15, 3
    %p106 = por %p104, %p105
    %p108 = scmp.ne.s32.totalorder %s91, %s107
    %p109 = scmp.eq.s32.totalorder %s15, 0
    %p110 = por %p108, %p109
    %p111 = scmp.le.s32.totalorder 1, %s9
    %p112 = scmp.lt.s32.totalorder %s9, 5
    %p113 = pnand %p111, %p112
    %p114 = pneg %p113
    // Predicated region
    $region9: #{encoder_forward.15} parent=5 // pred_check
      _
    $region10: #{encoder_forward.15} parent=5 // pred_check_branch
      %116 = sbr.rel (%p113) target = $region12
    $region11: #{encoder_forward.15} parent=5 // pred_region
      %s117 = ssub.s32 %s9, 1
      // Predicated region
      $region13: #{encoder_forward.15} parent=11 // pred_check
        %p118 = pneg %p56
      $region14: #{encoder_forward.15} parent=11 // pred_check_branch
        %120 = sbr.rel (%p118) target = $region16
      $region15: #{encoder_forward.15} parent=11 // pred_region
        _
      $region16: #{encoder_forward.15} parent=11 // pred_fallthru
        _
      // Predicated region
      $region17: #{encoder_forward.15} parent=11 // pred_check
        %p121 = pneg %p77
      $region18: #{encoder_forward.15} parent=11 // pred_check_branch
        %123 = sbr.rel (%p121) target = $region20
      $region19: #{encoder_forward.15} parent=11 // pred_region
        _
      $region20: #{encoder_forward.15} parent=11 // pred_fallthru
        _
    $region12: #{encoder_forward.15} parent=5 // pred_fallthru
      _
    %p124 = scmp.lt.s32.totalorder %s9, 4
    // Predicated region
    $region21: #{encoder_forward.15} parent=5 // pred_check
      %p125 = pneg %p124
    $region22: #{encoder_forward.15} parent=5 // pred_check_branch
      %127 = sbr.rel (%p125) target = $region24
    $region23: #{encoder_forward.15} parent=5 // pred_region
      // Predicated region
      $region25: #{encoder_forward.15} parent=23 // pred_check
        %p128 = pneg %p29
      $region26: #{encoder_forward.15} parent=23 // pred_check_branch
        %130 = sbr.rel (%p128) target = $region28
      $region27: #{encoder_forward.15} parent=23 // pred_region
        %s131 = smul.u32 4, %s9
        %p132 = scmp.lt.s32.totalorder %s131, 15
        %s133 = scalar_select %p132, %s131, 15
        %s134 = smul.addr %s133, 4
        %s135 = scalar_lea.vmem %s0, %s134
        %s136 = smul.u32 4, %s9
      $region28: #{encoder_forward.15} parent=23 // pred_fallthru
        _
    $region24: #{encoder_forward.15} parent=5 // pred_fallthru
      _
    %p137 = scmp.le.s32.totalorder 1, %s9
    %p138 = scmp.lt.s32.totalorder %s9, 5
    %p139 = pnand %p137, %p138
    %p140 = pneg %p139
    // Predicated region
    $region29: #{encoder_forward.15} parent=5 // pred_check
      _
    $region30: #{encoder_forward.15} parent=5 // pred_check_branch
      %142 = sbr.rel (%p139) target = $region32
    $region31: #{encoder_forward.15} parent=5 // pred_region
      %s143 = ssub.s32 %s9, 1
      %s144 = smul.u32 4, %s14
      %p145 = scmp.lt.s32.totalorder %s144, 15
      %s146 = scalar_select %p145, %s144, 15
      %s147 = smul.addr %s146, 4
      %s148 = scalar_lea.vmem %s0, %s147
      %p149 = pneg %p35
      %p150 = pneg %p32
      %p151 = pneg %p56
      %p152 = pneg %p53
      %p153 = pneg %p77
      %p154 = pneg %p74
      %p155 = pneg %p103
      %p156 = pneg %p100
      %s157 = smul.u32 4, %s14
      %p158 = scmp.lt.s32.totalorder %s157, 15
      %s159 = scalar_select %p158, %s157, 15
      %s160 = smul.addr %s159, 4
      %s161 = scalar_lea.vmem %s3, %s160
      %s162 = smul.u32 4, %s14
      %p163 = scmp.lt.s32.totalorder %s162, 15
      %s164 = scalar_select %p163, %s162, 15
      %s165 = smul.addr %s164, 4
      %s166 = scalar_lea.vmem %s0, %s165
      %s167 = smul.u32 4, %s14
      %s168 = smul.u32 4, %s14
      %p169 = scmp.lt.s32.totalorder %s168, 15
      %s170 = scalar_select %p169, %s168, 15
      %s171 = smul.addr %s170, 4
      %s172 = scalar_lea.vmem %s3, %s171
      %s173 = smul.u32 4, %s14
      %v175 = vld [vmem:[%s166] sm:$0xf]
      %v176 = vld [vmem:[%s166 + $0x4] sm:$0xf]
      %v177 = vld [vmem:[%s166 + $0x8] sm:$0xf]
      %v178 = vld [vmem:[%s166 + $0xc] sm:$0xf]
      %v179 = vld [vmem:[%s1] sm:$0xf]
      %v180 = vld [vmem:[%s1 + $0x4] sm:$0xf]
      %v181 = vld [vmem:[%s1 + $0x8] sm:$0xf]
      %v182 = vld [vmem:[%s1 + $0xc] sm:$0xf]
      %v183 = vld [vmem:[%s1 + $0x10] sm:$0xf]
      %v184 = vld [vmem:[%s1 + $0x14] sm:$0xf]
      %v185 = vld [vmem:[%s1 + $0x18] sm:$0xf]
      %v186 = vld [vmem:[%s1 + $0x1c] sm:$0xf]
      %v187 = vld [vmem:[%s1 + $0x20] sm:$0xf]
      %v188 = vld [vmem:[%s1 + $0x24] sm:$0xf]
      %v189 = vld [vmem:[%s1 + $0x28] sm:$0xf]
      %v190 = vld [vmem:[%s1 + $0x2c] sm:$0xf]
      %v191 = vld [vmem:[%s1 + $0x30] sm:$0xf]
      %v192 = vld [vmem:[%s1 + $0x34] sm:$0xf]
      %v193 = vld [vmem:[%s1 + $0x38] sm:$0xf]
      %v194 = vld [vmem:[%s1 + $0x3c] sm:$0xf]
      %v195 = vld [vmem:[%s2] sm:$0x1]
      %v197 = vlaneseq
      %v198 = vshrl.u32 %v197, 7
      %v199 = vsub.s32 0, %v198
      %v200 = vrot.slane %v195, %v199
      %v206 = vunpack.c.l.b16 %v175
      %v207 = vunpack.c.l.b16 %v176
      %v208 = vunpack.c.l.b16 %v177
      %v209 = vunpack.c.l.b16 %v178
      %v210 = vpack.c.b16 %v207, %v206
      %v211 = vpack.c.b16 %v209, %v208
      %v230 = vunpack.c.l.b16 %v179
      %v231 = vunpack.c.l.b16 %v180
      %v232 = vunpack.c.l.b16 %v181
      %v233 = vunpack.c.l.b16 %v182
      %v234 = vunpack.c.l.b16 %v183
      %v235 = vunpack.c.l.b16 %v184
      %v236 = vunpack.c.l.b16 %v185
      %v237 = vunpack.c.l.b16 %v186
      %v238 = vunpack.c.l.b16 %v187
      %v239 = vunpack.c.l.b16 %v188
      %v240 = vunpack.c.l.b16 %v189
      %v241 = vunpack.c.l.b16 %v190
      %v242 = vunpack.c.l.b16 %v191
      %v243 = vunpack.c.l.b16 %v192
      %v244 = vunpack.c.l.b16 %v193
      %v245 = vunpack.c.l.b16 %v194
      %v246 = vpack.c.b16 %v231, %v230
      %v247 = vpack.c.b16 %v233, %v232
      %v248 = vpack.c.b16 %v235, %v234
      %v249 = vpack.c.b16 %v237, %v236
      %v250 = vpack.c.b16 %v239, %v238
      %v251 = vpack.c.b16 %v241, %v240
      %v252 = vpack.c.b16 %v243, %v242
      %v253 = vpack.c.b16 %v245, %v244
      %262 = vmatprep.subr.bf16.mxu0 0
      %263 = vmatpush1.bf16.msra.mxu0 %v246
      %264 = vmatprep.subr.bf16.mxu0 0
      %265 = vmatpush1.bf16.msra.mxu0 %v247
      %266 = vmatprep.subr.bf16.mxu0 0
      %267 = vmatpush1.bf16.msra.mxu0 %v248
      %268 = vmatprep.subr.bf16.mxu0 0
      %269 = vmatpush1.bf16.msra.mxu0 %v249
      %270 = vmatprep.subr.bf16.mxu0 0
      %271 = vmatpush1.bf16.msra.mxu0 %v250
      %272 = vmatprep.subr.bf16.mxu0 0
      %273 = vmatpush1.bf16.msra.mxu0 %v251
      %274 = vmatprep.subr.bf16.mxu0 0
      %275 = vmatpush1.bf16.msra.mxu0 %v252
      %276 = vmatprep.subr.bf16.mxu0 0
      %277 = vmatpush1.bf16.msra.mxu0 %v253
      %278 = vmatprep.subr.bf16.mxu0 0
      %279 = vmatpush1.bf16.msra.mxu0 0
      %280 = vmatprep.subr.bf16.mxu0 0
      %281 = vmatpush1.bf16.msra.mxu0 0
      %282 = vmatprep.subr.bf16.mxu0 0
      %283 = vmatpush1.bf16.msra.mxu0 0
      %284 = vmatprep.subr.bf16.mxu0 0
      %285 = vmatpush1.bf16.msra.mxu0 0
      %286 = vmatprep.subr.bf16.mxu0 0
      %287 = vmatpush1.bf16.msra.mxu0 0
      %288 = vmatprep.subr.bf16.mxu0 0
      %289 = vmatpush1.bf16.msra.mxu0 0
      %290 = vmatprep.subr.bf16.mxu0 0
      %291 = vmatpush1.bf16.msra.mxu0 0
      %292 = vmatprep.subr.bf16.mxu0 0
      %293 = vmatpush1.bf16.msra.mxu0 0
      %294 = vmatprep.mubr.bf16.mxu0 0
      %295 = vmatmul.mubr.bf16.gmra.mrb[0].mxu0 %v210
      %v296 = vpop.f32.mrb[0].mxu0
      %v297 = vadd.f32 %v200, %v296
      %v298 = vpop.f32.mrb[0].mxu0
      %v299 = vpop.f32.mrb[0].mxu0
      %v300 = vadd.f32 %v200, %v299
      %v301 = vpop.f32.mrb[0].mxu0
      %302 = vmatprep.mubr.bf16.mxu0 0
      %303 = vmatmul.mubr.bf16.gmra.mrb[0].mxu0 %v211
      %v304 = vpop.f32.mrb[0].mxu0
      %v305 = vadd.f32 %v200, %v304
      %v306 = vpop.f32.mrb[0].mxu0
      %v307 = vpop.f32.mrb[0].mxu0
      %v308 = vadd.f32 %v200, %v307
      %v309 = vpop.f32.mrb[0].mxu0
      %310 = vdwg.mxu0
      %vm311 = vcmp.ge.f32.partialorder %v297, 0.0
      %vm312 = vcmp.ge.f32.partialorder %v300, 0.0
      %vm313 = vcmp.ge.f32.partialorder %v305, 0.0
      %vm314 = vcmp.ge.f32.partialorder %v308, 0.0
      %v315 = vmul.f32 %v297, 0.01
      %v316 = vmul.f32 %v300, 0.01
      %v317 = vmul.f32 %v305, 0.01
      %v318 = vmul.f32 %v308, 0.01
      %v319 = vsel %vm311, %v297, %v315
      %v320 = vsel %vm312, %v300, %v316
      %v321 = vsel %vm313, %v305, %v317
      %v322 = vsel %vm314, %v308, %v318
      %v323 = vpack.c.bf16 %v320, %v319
      %v324 = vpack.c.bf16 %v322, %v321
      %v327 = vunpack.c.l.b16 %v323
      %v328 = vunpack.c.h.b16 %v323
      %v329 = vunpack.c.l.b16 %v324
      %v330 = vunpack.c.h.b16 %v324
      %v331 = vpack.c.b16 %v327, %v327
      %v332 = vpack.c.b16 %v328, %v328
      %v333 = vpack.c.b16 %v329, %v329
      %v334 = vpack.c.b16 %v330, %v330
      %339 = vst [vmem:[%s172] sm:$0xf] %v331
      %340 = vst [vmem:[%s172 + $0x4] sm:$0xf] %v332
      %341 = vst [vmem:[%s172 + $0x8] sm:$0xf] %v333
      %342 = vst [vmem:[%s172 + $0xc] sm:$0xf] %v334
      %s343 = smul.u32 4, %s14
      %p344 = scmp.lt.s32.totalorder %s343, 15
      %s345 = scalar_select %p344, %s343, 15
      %s346 = smul.addr %s345, 4
      %s347 = scalar_lea.vmem %s3, %s346
      // Predicated region
      $region33: #{encoder_forward.15} parent=31 // pred_check
        %p348 = pneg %p100
      $region34: #{encoder_forward.15} parent=31 // pred_check_branch
        %350 = sbr.rel (%p348) target = $region36
      $region35: #{encoder_forward.15} parent=31 // pred_region
        %s351 = smul.u32 4, %s14
      $region36: #{encoder_forward.15} parent=31 // pred_fallthru
        _
    $region32: #{encoder_forward.15} parent=5 // pred_fallthru
      _
    %p352 = scmp.le.s32.totalorder 2, %s9
    // Predicated region
    $region37: #{encoder_forward.15} parent=5 // pred_check
      %p353 = pneg %p352
    $region38: #{encoder_forward.15} parent=5 // pred_check_branch
      %355 = sbr.rel (%p353) target = $region40
    $region39: #{encoder_forward.15} parent=5 // pred_region
      %s356 = ssub.s32 %s9, 2
      // Predicated region
      $region41: #{encoder_forward.15} parent=39 // pred_check
        %p357 = pneg %p106
      $region42: #{encoder_forward.15} parent=39 // pred_check_branch
        %359 = sbr.rel (%p357) target = $region44
      $region43: #{encoder_forward.15} parent=39 // pred_region
        %s360 = smul.u32 4, %s15
        %p361 = scmp.lt.s32.totalorder %s360, 15
        %s362 = scalar_select %p361, %s360, 15
        %s363 = smul.addr %s362, 4
        %s364 = scalar_lea.vmem %s3, %s363
      $region44: #{encoder_forward.15} parent=39 // pred_fallthru
        _
    $region40: #{encoder_forward.15} parent=5 // pred_fallthru
      _
  $region6: #{encoder_forward.15} parent=0 // loop_footer
    %s13 = sadd.s32 1, %s9
  $region7: #{encoder_forward.15} parent=0 // loop_footer_branch
    %8 = sbr.rel target = $region3
  $region8: #{encoder_forward.15} parent=0 // loop_exit
    _

// kernel: encoder_forward.16
$region0: #{encoder_forward.16}
  #allocation0 [shape = 'u32[]', space=smem, size = 0x4, offset = 0x4, fixed_abs, tag = 'smem constant byte address 0x4 - core index']
  #allocation1 [shape = 'u32[144,128]{1,0:T(1,128)}', space=vmem, size = 0x12000, scoped, tag = 'internal scratch']
  %s0 = inlined_call_operand.vmem [shape: bf16[128,256], index: 0, kind: input, shape index: {}]
  %s1 = inlined_call_operand.vmem [shape: bf16[256,128], index: 1, kind: input, shape index: {}]
  %s2 = inlined_call_operand.vmem [shape: f32[1,128], index: 2, kind: input, shape index: {}]
  %s3 = inlined_call_operand.vmem [shape: bf16[128,128], index: 3, kind: output, shape index: {0}]
  %s4 = inlined_call_operand.vmem [shape: f32[32,128], index: 4, kind: output, shape index: {1}]
  %5 = xla_tuple %s3, %s4
  %s6 = sld [smem:[#allocation0]]
  $region53: #{encoder_forward.16} parent=0
    _
  %s8 = ssub.s32 1, %s6
  %s9 = scalar_select 0, %s8, %s6
  loop: start=0, step=1, limit=6
  $region2: #{encoder_forward.16} parent=0 // loop_pre_header
    _
  $region3: #{encoder_forward.16} parent=0 // loop_header
    %s11 = sphi 0, %s15
    %p12 = scmp.ge.s32.totalorder %s11, 6
    %s21 = sphi 0, %s23
    %s24 = sphi 0, %s21
    %s25 = sphi 0, %s24
    %s41 = sphi 0, %s25
    %s45 = sphi 0, %s45
    %s47 = sphi 0, %s45
    %s48 = sphi 0, %s47
    %s62 = sphi 0, %s48
    %s66 = sphi 0, %s66
    %s68 = sphi 0, %s66
    %s69 = sphi 0, %s68
    %s83 = sphi 0, %s69
    %s89 = sphi 0, %s91
    %s92 = sphi 0, %s89
    %s93 = sphi 0, %s92
    %s109 = sphi 0, %s93
    %s115 = sphi 0, %s117
    %s118 = sphi 0, %s115
    %s119 = sphi 0, %s118
    %s135 = sphi 0, %s119
  $region4: #{encoder_forward.16} parent=0 // loop_header_branch
    %14 = sbr.rel (%p12) target = $region8
  $region5: #{encoder_forward.16} parent=0 // loop_body
    %s16 = ssub.s32 %s11, 1
    %s17 = ssub.s32 %s11, 2
    %s18 = sadd.s32 %s11, 1
    %s19 = ssub.s32 %s11, %s18
    %p20 = scmp.eq.s32.totalorder %s19, 0
    %s22 = sadd.s32 %s21, 1
    %s23 = scalar_select %p20, %s21, %s22
    %p26 = pneg %p20
    %p27 = scmp.eq.s32.totalorder %s11, 3
    %p28 = por %p26, %p27
    %p29 = scmp.ne.s32.totalorder %s21, %s24
    %p30 = scmp.eq.s32.totalorder %s11, 0
    %p31 = por %p29, %p30
    %p32 = scmp.ne.s32.totalorder %s21, %s24
    %p33 = scmp.eq.s32.totalorder %s16, 3
    %p34 = por %p32, %p33
    %p35 = scmp.ne.s32.totalorder %s24, %s25
    %p36 = scmp.eq.s32.totalorder %s16, 0
    %p37 = por %p35, %p36
    %p38 = scmp.ne.s32.totalorder %s24, %s25
    %p39 = scmp.eq.s32.totalorder %s17, 3
    %p40 = por %p38, %p39
    %p42 = scmp.ne.s32.totalorder %s25, %s41
    %p43 = scmp.eq.s32.totalorder %s17, 0
    %p44 = por %p42, %p43
    %s46 = sadd.s32 %s45, 1
    %p49 = scmp.eq.s32.totalorder %s11, 3
    %p50 = scmp.ne.s32.totalorder %s45, %s47
    %p51 = scmp.eq.s32.totalorder %s11, 0
    %p52 = por %p50, %p51
    %p53 = scmp.ne.s32.totalorder %s45, %s47
    %p54 = scmp.eq.s32.totalorder %s16, 3
    %p55 = por %p53, %p54
    %p56 = scmp.ne.s32.totalorder %s47, %s48
    %p57 = scmp.eq.s32.totalorder %s16, 0
    %p58 = por %p56, %p57
    %p59 = scmp.ne.s32.totalorder %s47, %s48
    %p60 = scmp.eq.s32.totalorder %s17, 3
    %p61 = por %p59, %p60
    %p63 = scmp.ne.s32.totalorder %s48, %s62
    %p64 = scmp.eq.s32.totalorder %s17, 0
    %p65 = por %p63, %p64
    %s67 = sadd.s32 %s66, 1
    %p70 = scmp.eq.s32.totalorder %s11, 3
    %p71 = scmp.ne.s32.totalorder %s66, %s68
    %p72 = scmp.eq.s32.totalorder %s11, 0
    %p73 = por %p71, %p72
    %p74 = scmp.ne.s32.totalorder %s66, %s68
    %p75 = scmp.eq.s32.totalorder %s16, 3
    %p76 = por %p74, %p75
    %p77 = scmp.ne.s32.totalorder %s68, %s69
    %p78 = scmp.eq.s32.totalorder %s16, 0
    %p79 = por %p77, %p78
    %p80 = scmp.ne.s32.totalorder %s68, %s69
    %p81 = scmp.eq.s32.totalorder %s17, 3
    %p82 = por %p80, %p81
    %p84 = scmp.ne.s32.totalorder %s69, %s83
    %p85 = scmp.eq.s32.totalorder %s17, 0
    %p86 = por %p84, %p85
    %s87 = ssub.s32 %s11, %s18
    %p88 = scmp.eq.s32.totalorder %s87, 0
    %s90 = sadd.s32 %s89, 1
    %s91 = scalar_select %p88, %s89, %s90
    %p94 = pneg %p88
    %p95 = scmp.eq.s32.totalorder %s11, 3
    %p96 = por %p94, %p95
    %p97 = scmp.ne.s32.totalorder %s89, %s92
    %p98 = scmp.eq.s32.totalorder %s11, 0
    %p99 = por %p97, %p98
    %p100 = scmp.ne.s32.totalorder %s89, %s92
    %p101 = scmp.eq.s32.totalorder %s16, 3
    %p102 = por %p100, %p101
    %p103 = scmp.ne.s32.totalorder %s92, %s93
    %p104 = scmp.eq.s32.totalorder %s16, 0
    %p105 = por %p103, %p104
    %p106 = scmp.ne.s32.totalorder %s92, %s93
    %p107 = scmp.eq.s32.totalorder %s17, 3
    %p108 = por %p106, %p107
    %p110 = scmp.ne.s32.totalorder %s93, %s109
    %p111 = scmp.eq.s32.totalorder %s17, 0
    %p112 = por %p110, %p111
    %s113 = ssub.s32 %s11, %s18
    %p114 = scmp.eq.s32.totalorder %s113, 0
    %s116 = sadd.s32 %s115, 1
    %s117 = scalar_select %p114, %s115, %s116
    %p120 = pneg %p114
    %p121 = scmp.eq.s32.totalorder %s11, 3
    %p122 = por %p120, %p121
    %p123 = scmp.ne.s32.totalorder %s115, %s118
    %p124 = scmp.eq.s32.totalorder %s11, 0
    %p125 = por %p123, %p124
    %p126 = scmp.ne.s32.totalorder %s115, %s118
    %p127 = scmp.eq.s32.totalorder %s16, 3
    %p128 = por %p126, %p127
    %p129 = scmp.ne.s32.totalorder %s118, %s119
    %p130 = scmp.eq.s32.totalorder %s16, 0
    %p131 = por %p129, %p130
    %p132 = scmp.ne.s32.totalorder %s118, %s119
    %p133 = scmp.eq.s32.totalorder %s17, 3
    %p134 = por %p132, %p133
    %p136 = scmp.ne.s32.totalorder %s119, %s135
    %p137 = scmp.eq.s32.totalorder %s17, 0
    %p138 = por %p136, %p137
    %p139 = scmp.le.s32.totalorder 1, %s11
    %p140 = scmp.lt.s32.totalorder %s11, 5
    %p141 = pnand %p139, %p140
    %p142 = pneg %p141
    // Predicated region
    $region9: #{encoder_forward.16} parent=5 // pred_check
      _
    $region10: #{encoder_forward.16} parent=5 // pred_check_branch
      %144 = sbr.rel (%p141) target = $region12
    $region11: #{encoder_forward.16} parent=5 // pred_region
      %s145 = ssub.s32 %s11, 1
      // Predicated region
      $region13: #{encoder_forward.16} parent=11 // pred_check
        %p146 = pneg %p58
      $region14: #{encoder_forward.16} parent=11 // pred_check_branch
        %148 = sbr.rel (%p146) target = $region16
      $region15: #{encoder_forward.16} parent=11 // pred_region
        _
      $region16: #{encoder_forward.16} parent=11 // pred_fallthru
        _
      // Predicated region
      $region17: #{encoder_forward.16} parent=11 // pred_check
        %p149 = pneg %p79
      $region18: #{encoder_forward.16} parent=11 // pred_check_branch
        %151 = sbr.rel (%p149) target = $region20
      $region19: #{encoder_forward.16} parent=11 // pred_region
        _
      $region20: #{encoder_forward.16} parent=11 // pred_fallthru
        _
    $region12: #{encoder_forward.16} parent=5 // pred_fallthru
      _
    %p152 = scmp.lt.s32.totalorder %s11, 4
    // Predicated region
    $region21: #{encoder_forward.16} parent=5 // pred_check
      %p153 = pneg %p152
    $region22: #{encoder_forward.16} parent=5 // pred_check_branch
      %155 = sbr.rel (%p153) target = $region24
    $region23: #{encoder_forward.16} parent=5 // pred_region
      // Predicated region
      $region25: #{encoder_forward.16} parent=23 // pred_check
        %p156 = pneg %p31
      $region26: #{encoder_forward.16} parent=23 // pred_check_branch
        %158 = sbr.rel (%p156) target = $region28
      $region27: #{encoder_forward.16} parent=23 // pred_region
        %s159 = smul.u32 4, %s11
        %p160 = scmp.lt.s32.totalorder %s159, 15
        %s161 = scalar_select %p160, %s159, 15
        %s162 = smul.addr %s161, 2
        %s163 = smul.addr %s162, 4
        %s164 = scalar_lea.vmem %s0, %s163
        %s165 = smul.u32 4, %s11
      $region28: #{encoder_forward.16} parent=23 // pred_fallthru
        _
    $region24: #{encoder_forward.16} parent=5 // pred_fallthru
      _
    %p166 = scmp.le.s32.totalorder 1, %s11
    %p167 = scmp.lt.s32.totalorder %s11, 5
    %p168 = pnand %p166, %p167
    %p169 = pneg %p168
    // Predicated region
    $region29: #{encoder_forward.16} parent=5 // pred_check
      _
    $region30: #{encoder_forward.16} parent=5 // pred_check_branch
      %171 = sbr.rel (%p168) target = $region32
    $region31: #{encoder_forward.16} parent=5 // pred_region
      %s172 = ssub.s32 %s11, 1
      %s173 = smul.u32 4, %s16
      %p174 = scmp.lt.s32.totalorder %s173, 15
      %s175 = scalar_select %p174, %s173, 15
      %s176 = smul.addr %s175, 2
      %s177 = smul.addr %s176, 4
      %s178 = scalar_lea.vmem %s0, %s177
      %p179 = pneg %p37
      %p180 = pneg %p34
      %p181 = pneg %p58
      %p182 = pneg %p55
      %p183 = pneg %p79
      %p184 = pneg %p76
      %p185 = pneg %p105
      %p186 = pneg %p102
      %s187 = smul.u32 4, %s16
      %p188 = scmp.lt.s32.totalorder %s187, 15
      %s189 = scalar_select %p188, %s187, 15
      %s190 = smul.addr %s189, 4
      %s191 = scalar_lea.vmem %s3, %s190
      %p192 = pneg %p131
      %p193 = pneg %p128
      %p194 = scmp.lt.s32.totalorder %s16, 3
      %s195 = scalar_select %p194, %s16, 3
      %s196 = smul.addr %s195, 8
      %s197 = scalar_lea.vmem %s4, %s196
      %s198 = smul.u32 4, %s16
      %p199 = scmp.lt.s32.totalorder %s198, 15
      %s200 = scalar_select %p199, %s198, 15
      %s201 = smul.addr %s200, 2
      %s202 = smul.addr %s201, 4
      %s203 = scalar_lea.vmem %s0, %s202
      %s204 = smul.u32 4, %s16
      %s205 = smul.u32 4, %s16
      %p206 = scmp.lt.s32.totalorder %s205, 15
      %s207 = scalar_select %p206, %s205, 15
      %s208 = smul.addr %s207, 4
      %s209 = scalar_lea.vmem %s3, %s208
      %s210 = smul.u32 4, %s16
      %p211 = scmp.lt.s32.totalorder %s16, 3
      %s212 = scalar_select %p211, %s16, 3
      %s213 = smul.addr %s212, 8
      %s214 = scalar_lea.vmem %s4, %s213
      %v216 = vld [vmem:[%s203] sm:$0xff]
      %v217 = vld [vmem:[%s203 + $0x8] sm:$0xff]
      %v218 = vld [vmem:[%s203 + $0x10] sm:$0xff]
      %v219 = vld [vmem:[%s203 + $0x18] sm:$0xff]
      %v220 = vld [vmem:[%s1] sm:$0xf]
      %v221 = vld [vmem:[%s1 + $0x4] sm:$0xf]
      %v222 = vld [vmem:[%s1 + $0x8] sm:$0xf]
      %v223 = vld [vmem:[%s1 + $0xc] sm:$0xf]
      %v224 = vld [vmem:[%s1 + $0x10] sm:$0xf]
      %v225 = vld [vmem:[%s1 + $0x14] sm:$0xf]
      %v226 = vld [vmem:[%s1 + $0x18] sm:$0xf]
      %v227 = vld [vmem:[%s1 + $0x1c] sm:$0xf]
      %v228 = vld [vmem:[%s1 + $0x20] sm:$0xf]
      %v229 = vld [vmem:[%s1 + $0x24] sm:$0xf]
      %v230 = vld [vmem:[%s1 + $0x28] sm:$0xf]
      %v231 = vld [vmem:[%s1 + $0x2c] sm:$0xf]
      %v232 = vld [vmem:[%s1 + $0x30] sm:$0xf]
      %v233 = vld [vmem:[%s1 + $0x34] sm:$0xf]
      %v234 = vld [vmem:[%s1 + $0x38] sm:$0xf]
      %v235 = vld [vmem:[%s1 + $0x3c] sm:$0xf]
      %v236 = vld [vmem:[%s1 + $0x40] sm:$0xf]
      %v237 = vld [vmem:[%s1 + $0x44] sm:$0xf]
      %v238 = vld [vmem:[%s1 + $0x48] sm:$0xf]
      %v239 = vld [vmem:[%s1 + $0x4c] sm:$0xf]
      %v240 = vld [vmem:[%s1 + $0x50] sm:$0xf]
      %v241 = vld [vmem:[%s1 + $0x54] sm:$0xf]
      %v242 = vld [vmem:[%s1 + $0x58] sm:$0xf]
      %v243 = vld [vmem:[%s1 + $0x5c] sm:$0xf]
      %v244 = vld [vmem:[%s1 + $0x60] sm:$0xf]
      %v245 = vld [vmem:[%s1 + $0x64] sm:$0xf]
      %v246 = vld [vmem:[%s1 + $0x68] sm:$0xf]
      %v247 = vld [vmem:[%s1 + $0x6c] sm:$0xf]
      %v248 = vld [vmem:[%s1 + $0x70] sm:$0xf]
      %v249 = vld [vmem:[%s1 + $0x74] sm:$0xf]
      %v250 = vld [vmem:[%s1 + $0x78] sm:$0xf]
      %v251 = vld [vmem:[%s1 + $0x7c] sm:$0xf]
      %v252 = vld [vmem:[%s2] sm:$0x1]
      %v254 = vlaneseq
      %v255 = vshrl.u32 %v254, 7
      %v256 = vsub.s32 0, %v255
      %v257 = vrot.slane %v252, %v256
      %v263 = vunpack.c.l.b16 %v216
      %v264 = vunpack.c.h.b16 %v216
      %v265 = vunpack.c.l.b16 %v217
      %v266 = vunpack.c.h.b16 %v217
      %v267 = vunpack.c.l.b16 %v218
      %v268 = vunpack.c.h.b16 %v218
      %v269 = vunpack.c.l.b16 %v219
      %v270 = vunpack.c.h.b16 %v219
      %v271 = vpack.c.b16 %v265, %v263
      %v272 = vpack.c.b16 %v266, %v264
      %v273 = vpack.c.b16 %v269, %v267
      %v274 = vpack.c.b16 %v270, %v268
      %v311 = vunpack.c.l.b16 %v220
      %v312 = vunpack.c.l.b16 %v221
      %v313 = vunpack.c.l.b16 %v222
      %v314 = vunpack.c.l.b16 %v223
      %v315 = vunpack.c.l.b16 %v224
      %v316 = vunpack.c.l.b16 %v225
      %v317 = vunpack.c.l.b16 %v226
      %v318 = vunpack.c.l.b16 %v227
      %v319 = vunpack.c.l.b16 %v228
      %v320 = vunpack.c.l.b16 %v229
      %v321 = vunpack.c.l.b16 %v230
      %v322 = vunpack.c.l.b16 %v231
      %v323 = vunpack.c.l.b16 %v232
      %v324 = vunpack.c.l.b16 %v233
      %v325 = vunpack.c.l.b16 %v234
      %v326 = vunpack.c.l.b16 %v235
      %v327 = vunpack.c.l.b16 %v236
      %v328 = vunpack.c.l.b16 %v237
      %v329 = vunpack.c.l.b16 %v238
      %v330 = vunpack.c.l.b16 %v239
      %v331 = vunpack.c.l.b16 %v240
      %v332 = vunpack.c.l.b16 %v241
      %v333 = vunpack.c.l.b16 %v242
      %v334 = vunpack.c.l.b16 %v243
      %v335 = vunpack.c.l.b16 %v244
      %v336 = vunpack.c.l.b16 %v245
      %v337 = vunpack.c.l.b16 %v246
      %v338 = vunpack.c.l.b16 %v247
      %v339 = vunpack.c.l.b16 %v248
      %v340 = vunpack.c.l.b16 %v249
      %v341 = vunpack.c.l.b16 %v250
      %v342 = vunpack.c.l.b16 %v251
      %v343 = vpack.c.b16 %v312, %v311
      %v344 = vpack.c.b16 %v314, %v313
      %v345 = vpack.c.b16 %v316, %v315
      %v346 = vpack.c.b16 %v318, %v317
      %v347 = vpack.c.b16 %v320, %v319
      %v348 = vpack.c.b16 %v322, %v321
      %v349 = vpack.c.b16 %v324, %v323
      %v350 = vpack.c.b16 %v326, %v325
      %v351 = vpack.c.b16 %v328, %v327
      %v352 = vpack.c.b16 %v330, %v329
      %v353 = vpack.c.b16 %v332, %v331
      %v354 = vpack.c.b16 %v334, %v333
      %v355 = vpack.c.b16 %v336, %v335
      %v356 = vpack.c.b16 %v338, %v337
      %v357 = vpack.c.b16 %v340, %v339
      %v358 = vpack.c.b16 %v342, %v341
      %375 = vmatprep.subr.bf16.mxu0 0
      %376 = vmatpush1.bf16.msra.mxu0 %v343
      %377 = vmatprep.subr.bf16.mxu0 0
      %378 = vmatpush1.bf16.msra.mxu0 %v344
      %379 = vmatprep.subr.bf16.mxu0 0
      %380 = vmatpush1.bf16.msra.mxu0 %v345
      %381 = vmatprep.subr.bf16.mxu0 0
      %382 = vmatpush1.bf16.msra.mxu0 %v346
      %383 = vmatprep.subr.bf16.mxu0 0
      %384 = vmatpush1.bf16.msra.mxu0 %v347
      %385 = vmatprep.subr.bf16.mxu0 0
      %386 = vmatpush1.bf16.msra.mxu0 %v348
      %387 = vmatprep.subr.bf16.mxu0 0
      %388 = vmatpush1.bf16.msra.mxu0 %v349
      %389 = vmatprep.subr.bf16.mxu0 0
      %390 = vmatpush1.bf16.msra.mxu0 %v350
      %391 = vmatprep.subr.bf16.mxu0 0
      %392 = vmatpush1.bf16.msra.mxu0 %v351
      %393 = vmatprep.subr.bf16.mxu0 0
      %394 = vmatpush1.bf16.msra.mxu0 %v352
      %395 = vmatprep.subr.bf16.mxu0 0
      %396 = vmatpush1.bf16.msra.mxu0 %v353
      %397 = vmatprep.subr.bf16.mxu0 0
      %398 = vmatpush1.bf16.msra.mxu0 %v354
      %399 = vmatprep.subr.bf16.mxu0 0
      %400 = vmatpush1.bf16.msra.mxu0 %v355
      %401 = vmatprep.subr.bf16.mxu0 0
      %402 = vmatpush1.bf16.msra.mxu0 %v356
      %403 = vmatprep.subr.bf16.mxu0 0
      %404 = vmatpush1.bf16.msra.mxu0 %v357
      %405 = vmatprep.subr.bf16.mxu0 0
      %406 = vmatpush1.bf16.msra.mxu0 %v358
      %407 = vmatprep.mubr.bf16.mxu0 %v272
      %408 = vmatmul.mubr.bf16.gmra.mrb[0].mxu0 %v271
      %v409 = vpop.f32.mrb[0].mxu0
      %v410 = vadd.f32 %v257, %v409
      %v411 = vpop.f32.mrb[0].mxu0
      %v412 = vpop.f32.mrb[0].mxu0
      %v413 = vadd.f32 %v257, %v412
      %v414 = vpop.f32.mrb[0].mxu0
      %415 = vmatprep.mubr.bf16.mxu0 %v274
      %416 = vmatmul.mubr.bf16.gmra.mrb[0].mxu0 %v273
      %v417 = vpop.f32.mrb[0].mxu0
      %v418 = vadd.f32 %v257, %v417
      %v419 = vpop.f32.mrb[0].mxu0
      %v420 = vpop.f32.mrb[0].mxu0
      %v421 = vadd.f32 %v257, %v420
      %v422 = vpop.f32.mrb[0].mxu0
      %423 = vdwg.mxu0
      %v424 = vpack.c.bf16 %v413, %v410
      %v425 = vpack.c.bf16 %v421, %v418
      %v428 = vunpack.c.l.b16 %v424
      %v429 = vunpack.c.h.b16 %v424
      %v430 = vunpack.c.l.b16 %v425
      %v431 = vunpack.c.h.b16 %v425
      %v432 = vpack.c.b16 %v428, %v428
      %v433 = vpack.c.b16 %v429, %v429
      %v434 = vpack.c.b16 %v430, %v430
      %v435 = vpack.c.b16 %v431, %v431
      %440 = vst [vmem:[%s209] sm:$0xf] %v432
      %441 = vst [vmem:[%s209 + $0x4] sm:$0xf] %v433
      %442 = vst [vmem:[%s209 + $0x8] sm:$0xf] %v434
      %443 = vst [vmem:[%s209 + $0xc] sm:$0xf] %v435
      %v444 = vadd.f32 %v410, %v413
      %v445 = vadd.f32 %v444, %v418
      %v446 = vadd.f32 %v445, %v421
      %v447 = vrot.slane %v446, 4
      %v448 = vadd.f32 %v446, %v447
      %v449 = vrot.slane %v448, 2
      %v450 = vadd.f32 %v448, %v449
      %v451 = vrot.slane %v450, 1
      %v452 = vadd.f32 %v450, %v451
      %v453 = vmul.f32 %v410, %v410
      %v454 = vmul.f32 %v413, %v413
      %v455 = vmul.f32 %v418, %v418
      %v456 = vmul.f32 %v421, %v421
      %v457 = vadd.f32 %v453, %v454
      %v458 = vadd.f32 %v457, %v455
      %v459 = vadd.f32 %v458, %v456
      %v460 = vrot.slane %v459, 4
      %v461 = vadd.f32 %v459, %v460
      %v462 = vrot.slane %v461, 2
      %v463 = vadd.f32 %v461, %v462
      %v464 = vrot.slane %v463, 1
      %v465 = vadd.f32 %v463, %v464
      %v466 = vlaneseq
      %v467 = vshrl.u32 %v466, 7
      %vm468 = vcmp.eq.s32.totalorder %v467, 0
      %vm469 = vcmp.eq.s32.totalorder %v467, 1
      %v470 = vsel %vm469, %v465, 0.0
      %v471 = vsel %vm468, %v452, %v470
      %472 = vst [vmem:[%s214] sm:$0xff] %v471
      %s473 = smul.u32 4, %s16
      %p474 = scmp.lt.s32.totalorder %s473, 15
      %s475 = scalar_select %p474, %s473, 15
      %s476 = smul.addr %s475, 4
      %s477 = scalar_lea.vmem %s3, %s476
      %p478 = scmp.lt.s32.totalorder %s16, 3
      %s479 = scalar_select %p478, %s16, 3
      %s480 = smul.addr %s479, 8
      %s481 = scalar_lea.vmem %s4, %s480
      // Predicated region
      $region33: #{encoder_forward.16} parent=31 // pred_check
        %p482 = pneg %p102
      $region34: #{encoder_forward.16} parent=31 // pred_check_branch
        %484 = sbr.rel (%p482) target = $region36
      $region35: #{encoder_forward.16} parent=31 // pred_region
        %s485 = smul.u32 4, %s16
      $region36: #{encoder_forward.16} parent=31 // pred_fallthru
        _
      // Predicated region
      $region37: #{encoder_forward.16} parent=31 // pred_check
        %p486 = pneg %p128
      $region38: #{encoder_forward.16} parent=31 // pred_check_branch
        %488 = sbr.rel (%p486) target = $region40
      $region39: #{encoder_forward.16} parent=31 // pred_region
        _
      $region40: #{encoder_forward.16} parent=31 // pred_fallthru
        _
    $region32: #{encoder_forward.16} parent=5 // pred_fallthru
      _
    %p489 = scmp.le.s32.totalorder 2, %s11
    // Predicated region
    $region41: #{encoder_forward.16} parent=5 // pred_check
      %p490 = pneg %p489
    $region42: #{encoder_forward.16} parent=5 // pred_check_branch
      %492 = sbr.rel (%p490) target = $region44
    $region43: #{encoder_forward.16} parent=5 // pred_region
      %s493 = ssub.s32 %s11, 2
      // Predicated region
      $region45: #{encoder_forward.16} parent=43 // pred_check
        %p494 = pneg %p108
      $region46: #{encoder_forward.16} parent=43 // pred_check_branch
        %496 = sbr.rel (%p494) target = $region48
      $region47: #{encoder_forward.16} parent=43 // pred_region
        %s497 = smul.u32 4, %s17
        %p498 = scmp.lt.s32.totalorder %s497, 15
        %s499 = scalar_select %p498, %s497, 15
        %s500 = smul.addr %s499, 4
        %s501 = scalar_lea.vmem %s3, %s500
      $region48: #{encoder_forward.16} parent=43 // pred_fallthru
        _
      // Predicated region
      $region49: #{encoder_forward.16} parent=43 // pred_check
        %p502 = pneg %p134
      $region50: #{encoder_forward.16} parent=43 // pred_check_branch
        %504 = sbr.rel (%p502) target = $region52
      $region51: #{encoder_forward.16} parent=43 // pred_region
        %p505 = scmp.lt.s32.totalorder %s17, 3
        %s506 = scalar_select %p505, %s17, 3
        %s507 = smul.addr %s506, 8
        %s508 = scalar_lea.vmem %s4, %s507
      $region52: #{encoder_forward.16} parent=43 // pred_fallthru
        _
    $region44: #{encoder_forward.16} parent=5 // pred_fallthru
      _
  $region6: #{encoder_forward.16} parent=0 // loop_footer
    %s15 = sadd.s32 1, %s11
  $region7: #{encoder_forward.16} parent=0 // loop_footer_branch
    %10 = sbr.rel target = $region3
  $region8: #{encoder_forward.16} parent=0 // loop_exit
    _

// kernel: encoder_forward.18
$region0: #{encoder_forward.18}
  #allocation0 [shape = 'u32[]', space=smem, size = 0x4, offset = 0x4, fixed_abs, tag = 'smem constant byte address 0x4 - core index']
  #allocation1 [shape = 'u32[144,128]{1,0:T(1,128)}', space=vmem, size = 0x12000, scoped, tag = 'internal scratch']
  %s0 = inlined_call_operand.vmem [shape: bf16[32,256], index: 0, kind: input, shape index: {}]
  %s1 = inlined_call_operand.vmem [shape: bf16[256,128], index: 1, kind: input, shape index: {}]
  %s2 = inlined_call_operand.vmem [shape: f32[1,128], index: 2, kind: input, shape index: {}]
  %s3 = inlined_call_operand.vmem [shape: bf16[32,128], index: 3, kind: output, shape index: {}]
  %s4 = sld [smem:[#allocation0]]
  $region45: #{encoder_forward.18} parent=0
    _
  %s6 = ssub.s32 1, %s4
  %s7 = scalar_select 0, %s6, %s4
  loop: start=0, step=1, limit=6
  $region2: #{encoder_forward.18} parent=0 // loop_pre_header
    _
  $region3: #{encoder_forward.18} parent=0 // loop_header
    %s9 = sphi 0, %s13
    %p10 = scmp.ge.s32.totalorder %s9, 6
    %s19 = sphi 0, %s21
    %s22 = sphi 0, %s19
    %s23 = sphi 0, %s22
    %s39 = sphi 0, %s23
    %s43 = sphi 0, %s43
    %s45 = sphi 0, %s43
    %s46 = sphi 0, %s45
    %s60 = sphi 0, %s46
    %s64 = sphi 0, %s64
    %s66 = sphi 0, %s64
    %s67 = sphi 0, %s66
    %s81 = sphi 0, %s67
    %s87 = sphi 0, %s89
    %s90 = sphi 0, %s87
    %s91 = sphi 0, %s90
    %s107 = sphi 0, %s91
  $region4: #{encoder_forward.18} parent=0 // loop_header_branch
    %12 = sbr.rel (%p10) target = $region8
  $region5: #{encoder_forward.18} parent=0 // loop_body
    %s14 = ssub.s32 %s9, 1
    %s15 = ssub.s32 %s9, 2
    %s16 = sadd.s32 %s9, 1
    %s17 = ssub.s32 %s9, %s16
    %p18 = scmp.eq.s32.totalorder %s17, 0
    %s20 = sadd.s32 %s19, 1
    %s21 = scalar_select %p18, %s19, %s20
    %p24 = pneg %p18
    %p25 = scmp.eq.s32.totalorder %s9, 3
    %p26 = por %p24, %p25
    %p27 = scmp.ne.s32.totalorder %s19, %s22
    %p28 = scmp.eq.s32.totalorder %s9, 0
    %p29 = por %p27, %p28
    %p30 = scmp.ne.s32.totalorder %s19, %s22
    %p31 = scmp.eq.s32.totalorder %s14, 3
    %p32 = por %p30, %p31
    %p33 = scmp.ne.s32.totalorder %s22, %s23
    %p34 = scmp.eq.s32.totalorder %s14, 0
    %p35 = por %p33, %p34
    %p36 = scmp.ne.s32.totalorder %s22, %s23
    %p37 = scmp.eq.s32.totalorder %s15, 3
    %p38 = por %p36, %p37
    %p40 = scmp.ne.s32.totalorder %s23, %s39
    %p41 = scmp.eq.s32.totalorder %s15, 0
    %p42 = por %p40, %p41
    %s44 = sadd.s32 %s43, 1
    %p47 = scmp.eq.s32.totalorder %s9, 3
    %p48 = scmp.ne.s32.totalorder %s43, %s45
    %p49 = scmp.eq.s32.totalorder %s9, 0
    %p50 = por %p48, %p49
    %p51 = scmp.ne.s32.totalorder %s43, %s45
    %p52 = scmp.eq.s32.totalorder %s14, 3
    %p53 = por %p51, %p52
    %p54 = scmp.ne.s32.totalorder %s45, %s46
    %p55 = scmp.eq.s32.totalorder %s14, 0
    %p56 = por %p54, %p55
    %p57 = scmp.ne.s32.totalorder %s45, %s46
    %p58 = scmp.eq.s32.totalorder %s15, 3
    %p59 = por %p57, %p58
    %p61 = scmp.ne.s32.totalorder %s46, %s60
    %p62 = scmp.eq.s32.totalorder %s15, 0
    %p63 = por %p61, %p62
    %s65 = sadd.s32 %s64, 1
    %p68 = scmp.eq.s32.totalorder %s9, 3
    %p69 = scmp.ne.s32.totalorder %s64, %s66
    %p70 = scmp.eq.s32.totalorder %s9, 0
    %p71 = por %p69, %p70
    %p72 = scmp.ne.s32.totalorder %s64, %s66
    %p73 = scmp.eq.s32.totalorder %s14, 3
    %p74 = por %p72, %p73
    %p75 = scmp.ne.s32.totalorder %s66, %s67
    %p76 = scmp.eq.s32.totalorder %s14, 0
    %p77 = por %p75, %p76
    %p78 = scmp.ne.s32.totalorder %s66, %s67
    %p79 = scmp.eq.s32.totalorder %s15, 3
    %p80 = por %p78, %p79
    %p82 = scmp.ne.s32.totalorder %s67, %s81
    %p83 = scmp.eq.s32.totalorder %s15, 0
    %p84 = por %p82, %p83
    %s85 = ssub.s32 %s9, %s16
    %p86 = scmp.eq.s32.totalorder %s85, 0
    %s88 = sadd.s32 %s87, 1
    %s89 = scalar_select %p86, %s87, %s88
    %p92 = pneg %p86
    %p93 = scmp.eq.s32.totalorder %s9, 3
    %p94 = por %p92, %p93
    %p95 = scmp.ne.s32.totalorder %s87, %s90
    %p96 = scmp.eq.s32.totalorder %s9, 0
    %p97 = por %p95, %p96
    %p98 = scmp.ne.s32.totalorder %s87, %s90
    %p99 = scmp.eq.s32.totalorder %s14, 3
    %p100 = por %p98, %p99
    %p101 = scmp.ne.s32.totalorder %s90, %s91
    %p102 = scmp.eq.s32.totalorder %s14, 0
    %p103 = por %p101, %p102
    %p104 = scmp.ne.s32.totalorder %s90, %s91
    %p105 = scmp.eq.s32.totalorder %s15, 3
    %p106 = por %p104, %p105
    %p108 = scmp.ne.s32.totalorder %s91, %s107
    %p109 = scmp.eq.s32.totalorder %s15, 0
    %p110 = por %p108, %p109
    %p111 = scmp.le.s32.totalorder 1, %s9
    %p112 = scmp.lt.s32.totalorder %s9, 5
    %p113 = pnand %p111, %p112
    %p114 = pneg %p113
    // Predicated region
    $region9: #{encoder_forward.18} parent=5 // pred_check
      _
    $region10: #{encoder_forward.18} parent=5 // pred_check_branch
      %116 = sbr.rel (%p113) target = $region12
    $region11: #{encoder_forward.18} parent=5 // pred_region
      %s117 = ssub.s32 %s9, 1
      // Predicated region
      $region13: #{encoder_forward.18} parent=11 // pred_check
        %p118 = pneg %p56
      $region14: #{encoder_forward.18} parent=11 // pred_check_branch
        %120 = sbr.rel (%p118) target = $region16
      $region15: #{encoder_forward.18} parent=11 // pred_region
        _
      $region16: #{encoder_forward.18} parent=11 // pred_fallthru
        _
      // Predicated region
      $region17: #{encoder_forward.18} parent=11 // pred_check
        %p121 = pneg %p77
      $region18: #{encoder_forward.18} parent=11 // pred_check_branch
        %123 = sbr.rel (%p121) target = $region20
      $region19: #{encoder_forward.18} parent=11 // pred_region
        _
      $region20: #{encoder_forward.18} parent=11 // pred_fallthru
        _
    $region12: #{encoder_forward.18} parent=5 // pred_fallthru
      _
    %p124 = scmp.lt.s32.totalorder %s9, 4
    // Predicated region
    $region21: #{encoder_forward.18} parent=5 // pred_check
      %p125 = pneg %p124
    $region22: #{encoder_forward.18} parent=5 // pred_check_branch
      %127 = sbr.rel (%p125) target = $region24
    $region23: #{encoder_forward.18} parent=5 // pred_region
      // Predicated region
      $region25: #{encoder_forward.18} parent=23 // pred_check
        %p128 = pneg %p29
      $region26: #{encoder_forward.18} parent=23 // pred_check_branch
        %130 = sbr.rel (%p128) target = $region28
      $region27: #{encoder_forward.18} parent=23 // pred_region
        %p131 = scmp.lt.s32.totalorder %s9, 3
        %s132 = scalar_select %p131, %s9, 3
        %s133 = smul.addr %s132, 2
        %s134 = smul.addr %s133, 4
        %s135 = scalar_lea.vmem %s0, %s134
      $region28: #{encoder_forward.18} parent=23 // pred_fallthru
        _
    $region24: #{encoder_forward.18} parent=5 // pred_fallthru
      _
    %p136 = scmp.le.s32.totalorder 1, %s9
    %p137 = scmp.lt.s32.totalorder %s9, 5
    %p138 = pnand %p136, %p137
    %p139 = pneg %p138
    // Predicated region
    $region29: #{encoder_forward.18} parent=5 // pred_check
      _
    $region30: #{encoder_forward.18} parent=5 // pred_check_branch
      %141 = sbr.rel (%p138) target = $region32
    $region31: #{encoder_forward.18} parent=5 // pred_region
      %s142 = ssub.s32 %s9, 1
      %p143 = scmp.lt.s32.totalorder %s14, 3
      %s144 = scalar_select %p143, %s14, 3
      %s145 = smul.addr %s144, 2
      %s146 = smul.addr %s145, 4
      %s147 = scalar_lea.vmem %s0, %s146
      %p148 = pneg %p35
      %p149 = pneg %p32
      %p150 = pneg %p56
      %p151 = pneg %p53
      %p152 = pneg %p77
      %p153 = pneg %p74
      %p154 = pneg %p103
      %p155 = pneg %p100
      %p156 = scmp.lt.s32.totalorder %s14, 3
      %s157 = scalar_select %p156, %s14, 3
      %s158 = smul.addr %s157, 4
      %s159 = scalar_lea.vmem %s3, %s158
      %p160 = scmp.lt.s32.totalorder %s14, 3
      %s161 = scalar_select %p160, %s14, 3
      %s162 = smul.addr %s161, 2
      %s163 = smul.addr %s162, 4
      %s164 = scalar_lea.vmem %s0, %s163
      %p165 = scmp.lt.s32.totalorder %s14, 3
      %s166 = scalar_select %p165, %s14, 3
      %s167 = smul.addr %s166, 4
      %s168 = scalar_lea.vmem %s3, %s167
      %v170 = vld [vmem:[%s164] sm:$0xff]
      %v171 = vld [vmem:[%s1] sm:$0xf]
      %v172 = vld [vmem:[%s1 + $0x4] sm:$0xf]
      %v173 = vld [vmem:[%s1 + $0x8] sm:$0xf]
      %v174 = vld [vmem:[%s1 + $0xc] sm:$0xf]
      %v175 = vld [vmem:[%s1 + $0x10] sm:$0xf]
      %v176 = vld [vmem:[%s1 + $0x14] sm:$0xf]
      %v177 = vld [vmem:[%s1 + $0x18] sm:$0xf]
      %v178 = vld [vmem:[%s1 + $0x1c] sm:$0xf]
      %v179 = vld [vmem:[%s1 + $0x20] sm:$0xf]
      %v180 = vld [vmem:[%s1 + $0x24] sm:$0xf]
      %v181 = vld [vmem:[%s1 + $0x28] sm:$0xf]
      %v182 = vld [vmem:[%s1 + $0x2c] sm:$0xf]
      %v183 = vld [vmem:[%s1 + $0x30] sm:$0xf]
      %v184 = vld [vmem:[%s1 + $0x34] sm:$0xf]
      %v185 = vld [vmem:[%s1 + $0x38] sm:$0xf]
      %v186 = vld [vmem:[%s1 + $0x3c] sm:$0xf]
      %v187 = vld [vmem:[%s1 + $0x40] sm:$0xf]
      %v188 = vld [vmem:[%s1 + $0x44] sm:$0xf]
      %v189 = vld [vmem:[%s1 + $0x48] sm:$0xf]
      %v190 = vld [vmem:[%s1 + $0x4c] sm:$0xf]
      %v191 = vld [vmem:[%s1 + $0x50] sm:$0xf]
      %v192 = vld [vmem:[%s1 + $0x54] sm:$0xf]
      %v193 = vld [vmem:[%s1 + $0x58] sm:$0xf]
      %v194 = vld [vmem:[%s1 + $0x5c] sm:$0xf]
      %v195 = vld [vmem:[%s1 + $0x60] sm:$0xf]
      %v196 = vld [vmem:[%s1 + $0x64] sm:$0xf]
      %v197 = vld [vmem:[%s1 + $0x68] sm:$0xf]
      %v198 = vld [vmem:[%s1 + $0x6c] sm:$0xf]
      %v199 = vld [vmem:[%s1 + $0x70] sm:$0xf]
      %v200 = vld [vmem:[%s1 + $0x74] sm:$0xf]
      %v201 = vld [vmem:[%s1 + $0x78] sm:$0xf]
      %v202 = vld [vmem:[%s1 + $0x7c] sm:$0xf]
      %v203 = vld [vmem:[%s2] sm:$0x1]
      %v205 = vlaneseq
      %v206 = vshrl.u32 %v205, 7
      %v207 = vsub.s32 0, %v206
      %v208 = vrot.slane %v203, %v207
      %v211 = vunpack.c.l.b16 %v170
      %v212 = vunpack.c.h.b16 %v170
      %v213 = vpack.c.b16 %v211, %v211
      %v214 = vpack.c.b16 %v212, %v212
      %v249 = vunpack.c.l.b16 %v171
      %v250 = vunpack.c.l.b16 %v172
      %v251 = vunpack.c.l.b16 %v173
      %v252 = vunpack.c.l.b16 %v174
      %v253 = vunpack.c.l.b16 %v175
      %v254 = vunpack.c.l.b16 %v176
      %v255 = vunpack.c.l.b16 %v177
      %v256 = vunpack.c.l.b16 %v178
      %v257 = vunpack.c.l.b16 %v179
      %v258 = vunpack.c.l.b16 %v180
      %v259 = vunpack.c.l.b16 %v181
      %v260 = vunpack.c.l.b16 %v182
      %v261 = vunpack.c.l.b16 %v183
      %v262 = vunpack.c.l.b16 %v184
      %v263 = vunpack.c.l.b16 %v185
      %v264 = vunpack.c.l.b16 %v186
      %v265 = vunpack.c.l.b16 %v187
      %v266 = vunpack.c.l.b16 %v188
      %v267 = vunpack.c.l.b16 %v189
      %v268 = vunpack.c.l.b16 %v190
      %v269 = vunpack.c.l.b16 %v191
      %v270 = vunpack.c.l.b16 %v192
      %v271 = vunpack.c.l.b16 %v193
      %v272 = vunpack.c.l.b16 %v194
      %v273 = vunpack.c.l.b16 %v195
      %v274 = vunpack.c.l.b16 %v196
      %v275 = vunpack.c.l.b16 %v197
      %v276 = vunpack.c.l.b16 %v198
      %v277 = vunpack.c.l.b16 %v199
      %v278 = vunpack.c.l.b16 %v200
      %v279 = vunpack.c.l.b16 %v201
      %v280 = vunpack.c.l.b16 %v202
      %v281 = vpack.c.b16 %v250, %v249
      %v282 = vpack.c.b16 %v252, %v251
      %v283 = vpack.c.b16 %v254, %v253
      %v284 = vpack.c.b16 %v256, %v255
      %v285 = vpack.c.b16 %v258, %v257
      %v286 = vpack.c.b16 %v260, %v259
      %v287 = vpack.c.b16 %v262, %v261
      %v288 = vpack.c.b16 %v264, %v263
      %v289 = vpack.c.b16 %v266, %v265
      %v290 = vpack.c.b16 %v268, %v267
      %v291 = vpack.c.b16 %v270, %v269
      %v292 = vpack.c.b16 %v272, %v271
      %v293 = vpack.c.b16 %v274, %v273
      %v294 = vpack.c.b16 %v276, %v275
      %v295 = vpack.c.b16 %v278, %v277
      %v296 = vpack.c.b16 %v280, %v279
      %313 = vmatprep.subr.bf16.mxu0 0
      %314 = vmatpush1.bf16.msra.mxu0 %v281
      %315 = vmatprep.subr.bf16.mxu0 0
      %316 = vmatpush1.bf16.msra.mxu0 %v282
      %317 = vmatprep.subr.bf16.mxu0 0
      %318 = vmatpush1.bf16.msra.mxu0 %v283
      %319 = vmatprep.subr.bf16.mxu0 0
      %320 = vmatpush1.bf16.msra.mxu0 %v284
      %321 = vmatprep.subr.bf16.mxu0 0
      %322 = vmatpush1.bf16.msra.mxu0 %v285
      %323 = vmatprep.subr.bf16.mxu0 0
      %324 = vmatpush1.bf16.msra.mxu0 %v286
      %325 = vmatprep.subr.bf16.mxu0 0
      %326 = vmatpush1.bf16.msra.mxu0 %v287
      %327 = vmatprep.subr.bf16.mxu0 0
      %328 = vmatpush1.bf16.msra.mxu0 %v288
      %329 = vmatprep.subr.bf16.mxu0 0
      %330 = vmatpush1.bf16.msra.mxu0 %v289
      %331 = vmatprep.subr.bf16.mxu0 0
      %332 = vmatpush1.bf16.msra.mxu0 %v290
      %333 = vmatprep.subr.bf16.mxu0 0
      %334 = vmatpush1.bf16.msra.mxu0 %v291
      %335 = vmatprep.subr.bf16.mxu0 0
      %336 = vmatpush1.bf16.msra.mxu0 %v292
      %337 = vmatprep.subr.bf16.mxu0 0
      %338 = vmatpush1.bf16.msra.mxu0 %v293
      %339 = vmatprep.subr.bf16.mxu0 0
      %340 = vmatpush1.bf16.msra.mxu0 %v294
      %341 = vmatprep.subr.bf16.mxu0 0
      %342 = vmatpush1.bf16.msra.mxu0 %v295
      %343 = vmatprep.subr.bf16.mxu0 0
      %344 = vmatpush1.bf16.msra.mxu0 %v296
      %345 = vmatprep.mubr.bf16.mxu0 %v214
      %346 = vmatmul.mubr.bf16.gmra.mrb[0].mxu0 %v213
      %v347 = vpop.f32.mrb[0].mxu0
      %v348 = vadd.f32 %v208, %v347
      %v349 = vpop.f32.mrb[0].mxu0
      %v350 = vpop.f32.mrb[0].mxu0
      %v351 = vpop.f32.mrb[0].mxu0
      %352 = vdwg.mxu0
      %vm353 = vcmp.ge.f32.partialorder %v348, 0.0
      %v354 = vmul.f32 %v348, 0.01
      %v355 = vsel %vm353, %v348, %v354
      %v356 = vpack.c.bf16 %v355, %v355
      %357 = vst [vmem:[%s168] sm:$0xf] %v356
      %p358 = scmp.lt.s32.totalorder %s14, 3
      %s359 = scalar_select %p358, %s14, 3
      %s360 = smul.addr %s359, 4
      %s361 = scalar_lea.vmem %s3, %s360
      // Predicated region
      $region33: #{encoder_forward.18} parent=31 // pred_check
        %p362 = pneg %p100
      $region34: #{encoder_forward.18} parent=31 // pred_check_branch
        %364 = sbr.rel (%p362) target = $region36
      $region35: #{encoder_forward.18} parent=31 // pred_region
        _
      $region36: #{encoder_forward.18} parent=31 // pred_fallthru
        _
    $region32: #{encoder_forward.18} parent=5 // pred_fallthru
      _
    %p365 = scmp.le.s32.totalorder 2, %s9
    // Predicated region
    $region37: #{encoder_forward.18} parent=5 // pred_check
      %p366 = pneg %p365
    $region38: #{encoder_forward.18} parent=5 // pred_check_branch
      %368 = sbr.rel (%p366) target = $region40
    $region39: #{encoder_forward.18} parent=5 // pred_region
      %s369 = ssub.s32 %s9, 2
      // Predicated region
      $region41: #{encoder_forward.18} parent=39 // pred_check
        %p370 = pneg %p106
      $region42: #{encoder_forward.18} parent=39 // pred_check_branch
        %372 = sbr.rel (%p370) target = $region44
      $region43: #{encoder_forward.18} parent=39 // pred_region
        %p373 = scmp.lt.s32.totalorder %s15, 3
        %s374 = scalar_select %p373, %s15, 3
        %s375 = smul.addr %s374, 4
        %s376 = scalar_lea.vmem %s3, %s375
      $region44: #{encoder_forward.18} parent=39 // pred_fallthru
        _
    $region40: #{encoder_forward.18} parent=5 // pred_fallthru
      _
  $region6: #{encoder_forward.18} parent=0 // loop_footer
    %s13 = sadd.s32 1, %s9
  $region7: #{encoder_forward.18} parent=0 // loop_footer_branch
    %8 = sbr.rel target = $region3
  $region8: #{encoder_forward.18} parent=0 // loop_exit
    _

// kernel: encoder_forward.19
$region0: #{encoder_forward.19}
  #allocation0 [shape = 'u32[]', space=smem, size = 0x4, offset = 0x4, fixed_abs, tag = 'smem constant byte address 0x4 - core index']
  #allocation1 [shape = 'u32[144,128]{1,0:T(1,128)}', space=vmem, size = 0x12000, scoped, tag = 'internal scratch']
  %s0 = inlined_call_operand.vmem [shape: bf16[32,384], index: 0, kind: input, shape index: {}]
  %s1 = inlined_call_operand.vmem [shape: bf16[384,128], index: 1, kind: input, shape index: {}]
  %s2 = inlined_call_operand.vmem [shape: f32[1,128], index: 2, kind: input, shape index: {}]
  %s3 = inlined_call_operand.vmem [shape: bf16[32,128], index: 3, kind: output, shape index: {0}]
  %s4 = inlined_call_operand.vmem [shape: f32[32,128], index: 4, kind: output, shape index: {1}]
  %5 = xla_tuple %s3, %s4
  %s6 = sld [smem:[#allocation0]]
  $region53: #{encoder_forward.19} parent=0
    _
  %s8 = ssub.s32 1, %s6
  %s9 = scalar_select 0, %s8, %s6
  loop: start=0, step=1, limit=6
  $region2: #{encoder_forward.19} parent=0 // loop_pre_header
    _
  $region3: #{encoder_forward.19} parent=0 // loop_header
    %s11 = sphi 0, %s15
    %p12 = scmp.ge.s32.totalorder %s11, 6
    %s21 = sphi 0, %s23
    %s24 = sphi 0, %s21
    %s25 = sphi 0, %s24
    %s41 = sphi 0, %s25
    %s45 = sphi 0, %s45
    %s47 = sphi 0, %s45
    %s48 = sphi 0, %s47
    %s62 = sphi 0, %s48
    %s66 = sphi 0, %s66
    %s68 = sphi 0, %s66
    %s69 = sphi 0, %s68
    %s83 = sphi 0, %s69
    %s89 = sphi 0, %s91
    %s92 = sphi 0, %s89
    %s93 = sphi 0, %s92
    %s109 = sphi 0, %s93
    %s115 = sphi 0, %s117
    %s118 = sphi 0, %s115
    %s119 = sphi 0, %s118
    %s135 = sphi 0, %s119
  $region4: #{encoder_forward.19} parent=0 // loop_header_branch
    %14 = sbr.rel (%p12) target = $region8
  $region5: #{encoder_forward.19} parent=0 // loop_body
    %s16 = ssub.s32 %s11, 1
    %s17 = ssub.s32 %s11, 2
    %s18 = sadd.s32 %s11, 1
    %s19 = ssub.s32 %s11, %s18
    %p20 = scmp.eq.s32.totalorder %s19, 0
    %s22 = sadd.s32 %s21, 1
    %s23 = scalar_select %p20, %s21, %s22
    %p26 = pneg %p20
    %p27 = scmp.eq.s32.totalorder %s11, 3
    %p28 = por %p26, %p27
    %p29 = scmp.ne.s32.totalorder %s21, %s24
    %p30 = scmp.eq.s32.totalorder %s11, 0
    %p31 = por %p29, %p30
    %p32 = scmp.ne.s32.totalorder %s21, %s24
    %p33 = scmp.eq.s32.totalorder %s16, 3
    %p34 = por %p32, %p33
    %p35 = scmp.ne.s32.totalorder %s24, %s25
    %p36 = scmp.eq.s32.totalorder %s16, 0
    %p37 = por %p35, %p36
    %p38 = scmp.ne.s32.totalorder %s24, %s25
    %p39 = scmp.eq.s32.totalorder %s17, 3
    %p40 = por %p38, %p39
    %p42 = scmp.ne.s32.totalorder %s25, %s41
    %p43 = scmp.eq.s32.totalorder %s17, 0
    %p44 = por %p42, %p43
    %s46 = sadd.s32 %s45, 1
    %p49 = scmp.eq.s32.totalorder %s11, 3
    %p50 = scmp.ne.s32.totalorder %s45, %s47
    %p51 = scmp.eq.s32.totalorder %s11, 0
    %p52 = por %p50, %p51
    %p53 = scmp.ne.s32.totalorder %s45, %s47
    %p54 = scmp.eq.s32.totalorder %s16, 3
    %p55 = por %p53, %p54
    %p56 = scmp.ne.s32.totalorder %s47, %s48
    %p57 = scmp.eq.s32.totalorder %s16, 0
    %p58 = por %p56, %p57
    %p59 = scmp.ne.s32.totalorder %s47, %s48
    %p60 = scmp.eq.s32.totalorder %s17, 3
    %p61 = por %p59, %p60
    %p63 = scmp.ne.s32.totalorder %s48, %s62
    %p64 = scmp.eq.s32.totalorder %s17, 0
    %p65 = por %p63, %p64
    %s67 = sadd.s32 %s66, 1
    %p70 = scmp.eq.s32.totalorder %s11, 3
    %p71 = scmp.ne.s32.totalorder %s66, %s68
    %p72 = scmp.eq.s32.totalorder %s11, 0
    %p73 = por %p71, %p72
    %p74 = scmp.ne.s32.totalorder %s66, %s68
    %p75 = scmp.eq.s32.totalorder %s16, 3
    %p76 = por %p74, %p75
    %p77 = scmp.ne.s32.totalorder %s68, %s69
    %p78 = scmp.eq.s32.totalorder %s16, 0
    %p79 = por %p77, %p78
    %p80 = scmp.ne.s32.totalorder %s68, %s69
    %p81 = scmp.eq.s32.totalorder %s17, 3
    %p82 = por %p80, %p81
    %p84 = scmp.ne.s32.totalorder %s69, %s83
    %p85 = scmp.eq.s32.totalorder %s17, 0
    %p86 = por %p84, %p85
    %s87 = ssub.s32 %s11, %s18
    %p88 = scmp.eq.s32.totalorder %s87, 0
    %s90 = sadd.s32 %s89, 1
    %s91 = scalar_select %p88, %s89, %s90
    %p94 = pneg %p88
    %p95 = scmp.eq.s32.totalorder %s11, 3
    %p96 = por %p94, %p95
    %p97 = scmp.ne.s32.totalorder %s89, %s92
    %p98 = scmp.eq.s32.totalorder %s11, 0
    %p99 = por %p97, %p98
    %p100 = scmp.ne.s32.totalorder %s89, %s92
    %p101 = scmp.eq.s32.totalorder %s16, 3
    %p102 = por %p100, %p101
    %p103 = scmp.ne.s32.totalorder %s92, %s93
    %p104 = scmp.eq.s32.totalorder %s16, 0
    %p105 = por %p103, %p104
    %p106 = scmp.ne.s32.totalorder %s92, %s93
    %p107 = scmp.eq.s32.totalorder %s17, 3
    %p108 = por %p106, %p107
    %p110 = scmp.ne.s32.totalorder %s93, %s109
    %p111 = scmp.eq.s32.totalorder %s17, 0
    %p112 = por %p110, %p111
    %s113 = ssub.s32 %s11, %s18
    %p114 = scmp.eq.s32.totalorder %s113, 0
    %s116 = sadd.s32 %s115, 1
    %s117 = scalar_select %p114, %s115, %s116
    %p120 = pneg %p114
    %p121 = scmp.eq.s32.totalorder %s11, 3
    %p122 = por %p120, %p121
    %p123 = scmp.ne.s32.totalorder %s115, %s118
    %p124 = scmp.eq.s32.totalorder %s11, 0
    %p125 = por %p123, %p124
    %p126 = scmp.ne.s32.totalorder %s115, %s118
    %p127 = scmp.eq.s32.totalorder %s16, 3
    %p128 = por %p126, %p127
    %p129 = scmp.ne.s32.totalorder %s118, %s119
    %p130 = scmp.eq.s32.totalorder %s16, 0
    %p131 = por %p129, %p130
    %p132 = scmp.ne.s32.totalorder %s118, %s119
    %p133 = scmp.eq.s32.totalorder %s17, 3
    %p134 = por %p132, %p133
    %p136 = scmp.ne.s32.totalorder %s119, %s135
    %p137 = scmp.eq.s32.totalorder %s17, 0
    %p138 = por %p136, %p137
    %p139 = scmp.le.s32.totalorder 1, %s11
    %p140 = scmp.lt.s32.totalorder %s11, 5
    %p141 = pnand %p139, %p140
    %p142 = pneg %p141
    // Predicated region
    $region9: #{encoder_forward.19} parent=5 // pred_check
      _
    $region10: #{encoder_forward.19} parent=5 // pred_check_branch
      %144 = sbr.rel (%p141) target = $region12
    $region11: #{encoder_forward.19} parent=5 // pred_region
      %s145 = ssub.s32 %s11, 1
      // Predicated region
      $region13: #{encoder_forward.19} parent=11 // pred_check
        %p146 = pneg %p58
      $region14: #{encoder_forward.19} parent=11 // pred_check_branch
        %148 = sbr.rel (%p146) target = $region16
      $region15: #{encoder_forward.19} parent=11 // pred_region
        _
      $region16: #{encoder_forward.19} parent=11 // pred_fallthru
        _
      // Predicated region
      $region17: #{encoder_forward.19} parent=11 // pred_check
        %p149 = pneg %p79
      $region18: #{encoder_forward.19} parent=11 // pred_check_branch
        %151 = sbr.rel (%p149) target = $region20
      $region19: #{encoder_forward.19} parent=11 // pred_region
        _
      $region20: #{encoder_forward.19} parent=11 // pred_fallthru
        _
    $region12: #{encoder_forward.19} parent=5 // pred_fallthru
      _
    %p152 = scmp.lt.s32.totalorder %s11, 4
    // Predicated region
    $region21: #{encoder_forward.19} parent=5 // pred_check
      %p153 = pneg %p152
    $region22: #{encoder_forward.19} parent=5 // pred_check_branch
      %155 = sbr.rel (%p153) target = $region24
    $region23: #{encoder_forward.19} parent=5 // pred_region
      // Predicated region
      $region25: #{encoder_forward.19} parent=23 // pred_check
        %p156 = pneg %p31
      $region26: #{encoder_forward.19} parent=23 // pred_check_branch
        %158 = sbr.rel (%p156) target = $region28
      $region27: #{encoder_forward.19} parent=23 // pred_region
        %p159 = scmp.lt.s32.totalorder %s11, 3
        %s160 = scalar_select %p159, %s11, 3
        %s161 = smul.addr %s160, 3
        %s162 = smul.addr %s161, 4
        %s163 = scalar_lea.vmem %s0, %s162
      $region28: #{encoder_forward.19} parent=23 // pred_fallthru
        _
    $region24: #{encoder_forward.19} parent=5 // pred_fallthru
      _
    %p164 = scmp.le.s32.totalorder 1, %s11
    %p165 = scmp.lt.s32.totalorder %s11, 5
    %p166 = pnand %p164, %p165
    %p167 = pneg %p166
    // Predicated region
    $region29: #{encoder_forward.19} parent=5 // pred_check
      _
    $region30: #{encoder_forward.19} parent=5 // pred_check_branch
      %169 = sbr.rel (%p166) target = $region32
    $region31: #{encoder_forward.19} parent=5 // pred_region
      %s170 = ssub.s32 %s11, 1
      %p171 = scmp.lt.s32.totalorder %s16, 3
      %s172 = scalar_select %p171, %s16, 3
      %s173 = smul.addr %s172, 3
      %s174 = smul.addr %s173, 4
      %s175 = scalar_lea.vmem %s0, %s174
      %p176 = pneg %p37
      %p177 = pneg %p34
      %p178 = pneg %p58
      %p179 = pneg %p55
      %p180 = pneg %p79
      %p181 = pneg %p76
      %p182 = pneg %p105
      %p183 = pneg %p102
      %p184 = scmp.lt.s32.totalorder %s16, 3
      %s185 = scalar_select %p184, %s16, 3
      %s186 = smul.addr %s185, 4
      %s187 = scalar_lea.vmem %s3, %s186
      %p188 = pneg %p131
      %p189 = pneg %p128
      %p190 = scmp.lt.s32.totalorder %s16, 3
      %s191 = scalar_select %p190, %s16, 3
      %s192 = smul.addr %s191, 8
      %s193 = scalar_lea.vmem %s4, %s192
      %p194 = scmp.lt.s32.totalorder %s16, 3
      %s195 = scalar_select %p194, %s16, 3
      %s196 = smul.addr %s195, 3
      %s197 = smul.addr %s196, 4
      %s198 = scalar_lea.vmem %s0, %s197
      %p199 = scmp.lt.s32.totalorder %s16, 3
      %s200 = scalar_select %p199, %s16, 3
      %s201 = smul.addr %s200, 4
      %s202 = scalar_lea.vmem %s3, %s201
      %p203 = scmp.lt.s32.totalorder %s16, 3
      %s204 = scalar_select %p203, %s16, 3
      %s205 = smul.addr %s204, 8
      %s206 = scalar_lea.vmem %s4, %s205
      %v208 = vld [vmem:[%s198] sm:$0xff]
      %v209 = vld [vmem:[%s198 + $0x8] sm:$0xf]
      %v210 = vld [vmem:[%s1] sm:$0xf]
      %v211 = vld [vmem:[%s1 + $0x4] sm:$0xf]
      %v212 = vld [vmem:[%s1 + $0x8] sm:$0xf]
      %v213 = vld [vmem:[%s1 + $0xc] sm:$0xf]
      %v214 = vld [vmem:[%s1 + $0x10] sm:$0xf]
      %v215 = vld [vmem:[%s1 + $0x14] sm:$0xf]
      %v216 = vld [vmem:[%s1 + $0x18] sm:$0xf]
      %v217 = vld [vmem:[%s1 + $0x1c] sm:$0xf]
      %v218 = vld [vmem:[%s1 + $0x20] sm:$0xf]
      %v219 = vld [vmem:[%s1 + $0x24] sm:$0xf]
      %v220 = vld [vmem:[%s1 + $0x28] sm:$0xf]
      %v221 = vld [vmem:[%s1 + $0x2c] sm:$0xf]
      %v222 = vld [vmem:[%s1 + $0x30] sm:$0xf]
      %v223 = vld [vmem:[%s1 + $0x34] sm:$0xf]
      %v224 = vld [vmem:[%s1 + $0x38] sm:$0xf]
      %v225 = vld [vmem:[%s1 + $0x3c] sm:$0xf]
      %v226 = vld [vmem:[%s1 + $0x40] sm:$0xf]
      %v227 = vld [vmem:[%s1 + $0x44] sm:$0xf]
      %v228 = vld [vmem:[%s1 + $0x48] sm:$0xf]
      %v229 = vld [vmem:[%s1 + $0x4c] sm:$0xf]
      %v230 = vld [vmem:[%s1 + $0x50] sm:$0xf]
      %v231 = vld [vmem:[%s1 + $0x54] sm:$0xf]
      %v232 = vld [vmem:[%s1 + $0x58] sm:$0xf]
      %v233 = vld [vmem:[%s1 + $0x5c] sm:$0xf]
      %v234 = vld [vmem:[%s1 + $0x60] sm:$0xf]
      %v235 = vld [vmem:[%s1 + $0x64] sm:$0xf]
      %v236 = vld [vmem:[%s1 + $0x68] sm:$0xf]
      %v237 = vld [vmem:[%s1 + $0x6c] sm:$0xf]
      %v238 = vld [vmem:[%s1 + $0x70] sm:$0xf]
      %v239 = vld [vmem:[%s1 + $0x74] sm:$0xf]
      %v240 = vld [vmem:[%s1 + $0x78] sm:$0xf]
      %v241 = vld [vmem:[%s1 + $0x7c] sm:$0xf]
      %v242 = vld [vmem:[%s1 + $0x80] sm:$0xf]
      %v243 = vld [vmem:[%s1 + $0x84] sm:$0xf]
      %v244 = vld [vmem:[%s1 + $0x88] sm:$0xf]
      %v245 = vld [vmem:[%s1 + $0x8c] sm:$0xf]
      %v246 = vld [vmem:[%s1 + $0x90] sm:$0xf]
      %v247 = vld [vmem:[%s1 + $0x94] sm:$0xf]
      %v248 = vld [vmem:[%s1 + $0x98] sm:$0xf]
      %v249 = vld [vmem:[%s1 + $0x9c] sm:$0xf]
      %v250 = vld [vmem:[%s1 + $0xa0] sm:$0xf]
      %v251 = vld [vmem:[%s1 + $0xa4] sm:$0xf]
      %v252 = vld [vmem:[%s1 + $0xa8] sm:$0xf]
      %v253 = vld [vmem:[%s1 + $0xac] sm:$0xf]
      %v254 = vld [vmem:[%s1 + $0xb0] sm:$0xf]
      %v255 = vld [vmem:[%s1 + $0xb4] sm:$0xf]
      %v256 = vld [vmem:[%s1 + $0xb8] sm:$0xf]
      %v257 = vld [vmem:[%s1 + $0xbc] sm:$0xf]
      %v258 = vld [vmem:[%s2] sm:$0x1]
      %v260 = vlaneseq
      %v261 = vshrl.u32 %v260, 7
      %v262 = vsub.s32 0, %v261
      %v263 = vrot.slane %v258, %v262
      %v267 = vunpack.c.l.b16 %v208
      %v268 = vunpack.c.h.b16 %v208
      %v269 = vunpack.c.l.b16 %v209
      %v270 = vpack.c.b16 %v267, %v267
      %v271 = vpack.c.b16 %v268, %v268
      %v272 = vpack.c.b16 %v269, %v269
      %v324 = vunpack.c.l.b16 %v210
      %v325 = vunpack.c.l.b16 %v211
      %v326 = vunpack.c.l.b16 %v212
      %v327 = vunpack.c.l.b16 %v213
      %v328 = vunpack.c.l.b16 %v214
      %v329 = vunpack.c.l.b16 %v215
      %v330 = vunpack.c.l.b16 %v216
      %v331 = vunpack.c.l.b16 %v217
      %v332 = vunpack.c.l.b16 %v218
      %v333 = vunpack.c.l.b16 %v219
      %v334 = vunpack.c.l.b16 %v220
      %v335 = vunpack.c.l.b16 %v221
      %v336 = vunpack.c.l.b16 %v222
      %v337 = vunpack.c.l.b16 %v223
      %v338 = vunpack.c.l.b16 %v224
      %v339 = vunpack.c.l.b16 %v225
      %v340 = vunpack.c.l.b16 %v226
      %v341 = vunpack.c.l.b16 %v227
      %v342 = vunpack.c.l.b16 %v228
      %v343 = vunpack.c.l.b16 %v229
      %v344 = vunpack.c.l.b16 %v230
      %v345 = vunpack.c.l.b16 %v231
      %v346 = vunpack.c.l.b16 %v232
      %v347 = vunpack.c.l.b16 %v233
      %v348 = vunpack.c.l.b16 %v234
      %v349 = vunpack.c.l.b16 %v235
      %v350 = vunpack.c.l.b16 %v236
      %v351 = vunpack.c.l.b16 %v237
      %v352 = vunpack.c.l.b16 %v238
      %v353 = vunpack.c.l.b16 %v239
      %v354 = vunpack.c.l.b16 %v240
      %v355 = vunpack.c.l.b16 %v241
      %v356 = vunpack.c.l.b16 %v242
      %v357 = vunpack.c.l.b16 %v243
      %v358 = vunpack.c.l.b16 %v244
      %v359 = vunpack.c.l.b16 %v245
      %v360 = vunpack.c.l.b16 %v246
      %v361 = vunpack.c.l.b16 %v247
      %v362 = vunpack.c.l.b16 %v248
      %v363 = vunpack.c.l.b16 %v249
      %v364 = vunpack.c.l.b16 %v250
      %v365 = vunpack.c.l.b16 %v251
      %v366 = vunpack.c.l.b16 %v252
      %v367 = vunpack.c.l.b16 %v253
      %v368 = vunpack.c.l.b16 %v254
      %v369 = vunpack.c.l.b16 %v255
      %v370 = vunpack.c.l.b16 %v256
      %v371 = vunpack.c.l.b16 %v257
      %v372 = vpack.c.b16 %v325, %v324
      %v373 = vpack.c.b16 %v327, %v326
      %v374 = vpack.c.b16 %v329, %v328
      %v375 = vpack.c.b16 %v331, %v330
      %v376 = vpack.c.b16 %v333, %v332
      %v377 = vpack.c.b16 %v335, %v334
      %v378 = vpack.c.b16 %v337, %v336
      %v379 = vpack.c.b16 %v339, %v338
      %v380 = vpack.c.b16 %v341, %v340
      %v381 = vpack.c.b16 %v343, %v342
      %v382 = vpack.c.b16 %v345, %v344
      %v383 = vpack.c.b16 %v347, %v346
      %v384 = vpack.c.b16 %v349, %v348
      %v385 = vpack.c.b16 %v351, %v350
      %v386 = vpack.c.b16 %v353, %v352
      %v387 = vpack.c.b16 %v355, %v354
      %v388 = vpack.c.b16 %v357, %v356
      %v389 = vpack.c.b16 %v359, %v358
      %v390 = vpack.c.b16 %v361, %v360
      %v391 = vpack.c.b16 %v363, %v362
      %v392 = vpack.c.b16 %v365, %v364
      %v393 = vpack.c.b16 %v367, %v366
      %v394 = vpack.c.b16 %v369, %v368
      %v395 = vpack.c.b16 %v371, %v370
      %420 = vmatprep.subr.bf16.mxu0 0
      %421 = vmatpush1.bf16.msra.mxu0 %v372
      %422 = vmatprep.subr.bf16.mxu0 0
      %423 = vmatpush1.bf16.msra.mxu0 %v373
      %424 = vmatprep.subr.bf16.mxu0 0
      %425 = vmatpush1.bf16.msra.mxu0 %v374
      %426 = vmatprep.subr.bf16.mxu0 0
      %427 = vmatpush1.bf16.msra.mxu0 %v375
      %428 = vmatprep.subr.bf16.mxu0 0
      %429 = vmatpush1.bf16.msra.mxu0 %v376
      %430 = vmatprep.subr.bf16.mxu0 0
      %431 = vmatpush1.bf16.msra.mxu0 %v377
      %432 = vmatprep.subr.bf16.mxu0 0
      %433 = vmatpush1.bf16.msra.mxu0 %v378
      %434 = vmatprep.subr.bf16.mxu0 0
      %435 = vmatpush1.bf16.msra.mxu0 %v379
      %436 = vmatprep.subr.bf16.mxu0 0
      %437 = vmatpush1.bf16.msra.mxu0 %v380
      %438 = vmatprep.subr.bf16.mxu0 0
      %439 = vmatpush1.bf16.msra.mxu0 %v381
      %440 = vmatprep.subr.bf16.mxu0 0
      %441 = vmatpush1.bf16.msra.mxu0 %v382
      %442 = vmatprep.subr.bf16.mxu0 0
      %443 = vmatpush1.bf16.msra.mxu0 %v383
      %444 = vmatprep.subr.bf16.mxu0 0
      %445 = vmatpush1.bf16.msra.mxu0 %v384
      %446 = vmatprep.subr.bf16.mxu0 0
      %447 = vmatpush1.bf16.msra.mxu0 %v385
      %448 = vmatprep.subr.bf16.mxu0 0
      %449 = vmatpush1.bf16.msra.mxu0 %v386
      %450 = vmatprep.subr.bf16.mxu0 0
      %451 = vmatpush1.bf16.msra.mxu0 %v387
      %452 = vmatprep.mubr.bf16.mxu0 %v271
      %453 = vmatmul.mubr.bf16.gmra.mrb[0].mxu0 %v270
      %v454 = vpop.f32.mrb[0].mxu0
      %v455 = vadd.f32 %v263, %v454
      %v456 = vpop.f32.mrb[0].mxu0
      %v457 = vpop.f32.mrb[0].mxu0
      %v458 = vpop.f32.mrb[0].mxu0
      %459 = vdwg.mxu0
      %460 = vmatprep.subr.bf16.mxu0 0
      %461 = vmatpush1.bf16.msra.mxu0 %v388
      %462 = vmatprep.subr.bf16.mxu0 0
      %463 = vmatpush1.bf16.msra.mxu0 %v389
      %464 = vmatprep.subr.bf16.mxu0 0
      %465 = vmatpush1.bf16.msra.mxu0 %v390
      %466 = vmatprep.subr.bf16.mxu0 0
      %467 = vmatpush1.bf16.msra.mxu0 %v391
      %468 = vmatprep.subr.bf16.mxu0 0
      %469 = vmatpush1.bf16.msra.mxu0 %v392
      %470 = vmatprep.subr.bf16.mxu0 0
      %471 = vmatpush1.bf16.msra.mxu0 %v393
      %472 = vmatprep.subr.bf16.mxu0 0
      %473 = vmatpush1.bf16.msra.mxu0 %v394
      %474 = vmatprep.subr.bf16.mxu0 0
      %475 = vmatpush1.bf16.msra.mxu0 %v395
      %476 = vmatprep.subr.bf16.mxu0 0
      %477 = vmatpush1.bf16.msra.mxu0 0
      %478 = vmatprep.subr.bf16.mxu0 0
      %479 = vmatpush1.bf16.msra.mxu0 0
      %480 = vmatprep.subr.bf16.mxu0 0
      %481 = vmatpush1.bf16.msra.mxu0 0
      %482 = vmatprep.subr.bf16.mxu0 0
      %483 = vmatpush1.bf16.msra.mxu0 0
      %484 = vmatprep.subr.bf16.mxu0 0
      %485 = vmatpush1.bf16.msra.mxu0 0
      %486 = vmatprep.subr.bf16.mxu0 0
      %487 = vmatpush1.bf16.msra.mxu0 0
      %488 = vmatprep.subr.bf16.mxu0 0
      %489 = vmatpush1.bf16.msra.mxu0 0
      %490 = vmatprep.subr.bf16.mxu0 0
      %491 = vmatpush1.bf16.msra.mxu0 0
      %492 = vmatprep.mubr.bf16.mxu0 0
      %493 = vmatmul.mubr.bf16.gmra.mrb[0].mxu0 %v272
      %v494 = vpop.f32.mrb[0].mxu0
      %v495 = vadd.f32 %v455, %v494
      %v496 = vpop.f32.mrb[0].mxu0
      %v497 = vpop.f32.mrb[0].mxu0
      %v498 = vpop.f32.mrb[0].mxu0
      %499 = vdwg.mxu0
      %v500 = vpack.c.bf16 %v495, %v495
      %501 = vst [vmem:[%s202] sm:$0xf] %v500
      %v502 = vrot.slane %v495, 4
      %v503 = vadd.f32 %v495, %v502
      %v504 = vrot.slane %v503, 2
      %v505 = vadd.f32 %v503, %v504
      %v506 = vrot.slane %v505, 1
      %v507 = vadd.f32 %v505, %v506
      %v508 = vmul.f32 %v495, %v495
      %v509 = vrot.slane %v508, 4
      %v510 = vadd.f32 %v508, %v509
      %v511 = vrot.slane %v510, 2
      %v512 = vadd.f32 %v510, %v511
      %v513 = vrot.slane %v512, 1
      %v514 = vadd.f32 %v512, %v513
      %v515 = vlaneseq
      %v516 = vshrl.u32 %v515, 7
      %vm517 = vcmp.eq.s32.totalorder %v516, 0
      %vm518 = vcmp.eq.s32.totalorder %v516, 1
      %v519 = vsel %vm518, %v514, 0.0
      %v520 = vsel %vm517, %v507, %v519
      %521 = vst [vmem:[%s206] sm:$0xff] %v520
      %p522 = scmp.lt.s32.totalorder %s16, 3
      %s523 = scalar_select %p522, %s16, 3
      %s524 = smul.addr %s523, 4
      %s525 = scalar_lea.vmem %s3, %s524
      %p526 = scmp.lt.s32.totalorder %s16, 3
      %s527 = scalar_select %p526, %s16, 3
      %s528 = smul.addr %s527, 8
      %s529 = scalar_lea.vmem %s4, %s528
      // Predicated region
      $region33: #{encoder_forward.19} parent=31 // pred_check
        %p530 = pneg %p102
      $region34: #{encoder_forward.19} parent=31 // pred_check_branch
        %532 = sbr.rel (%p530) target = $region36
      $region35: #{encoder_forward.19} parent=31 // pred_region
        _
      $region36: #{encoder_forward.19} parent=31 // pred_fallthru
        _
      // Predicated region
      $region37: #{encoder_forward.19} parent=31 // pred_check
        %p533 = pneg %p128
      $region38: #{encoder_forward.19} parent=31 // pred_check_branch
        %535 = sbr.rel (%p533) target = $region40
      $region39: #{encoder_forward.19} parent=31 // pred_region
        _
      $region40: #{encoder_forward.19} parent=31 // pred_fallthru
        _
    $region32: #{encoder_forward.19} parent=5 // pred_fallthru
      _
    %p536 = scmp.le.s32.totalorder 2, %s11
    // Predicated region
    $region41: #{encoder_forward.19} parent=5 // pred_check
      %p537 = pneg %p536
    $region42: #{encoder_forward.19} parent=5 // pred_check_branch
      %539 = sbr.rel (%p537) target = $region44
    $region43: #{encoder_forward.19} parent=5 // pred_region
      %s540 = ssub.s32 %s11, 2
      // Predicated region
      $region45: #{encoder_forward.19} parent=43 // pred_check
        %p541 = pneg %p108
      $region46: #{encoder_forward.19} parent=43 // pred_check_branch
        %543 = sbr.rel (%p541) target = $region48
      $region47: #{encoder_forward.19} parent=43 // pred_region
        %p544 = scmp.lt.s32.totalorder %s17, 3
        %s545 = scalar_select %p544, %s17, 3
        %s546 = smul.addr %s545, 4
        %s547 = scalar_lea.vmem %s3, %s546
      $region48: #{encoder_forward.19} parent=43 // pred_fallthru
        _
      // Predicated region
      $region49: #{encoder_forward.19} parent=43 // pred_check
        %p548 = pneg %p134
      $region50: #{encoder_forward.19} parent=43 // pred_check_branch
        %550 = sbr.rel (%p548) target = $region52
      $region51: #{encoder_forward.19} parent=43 // pred_region
        %p551 = scmp.lt.s32.totalorder %s17, 3
        %s552 = scalar_select %p551, %s17, 3
        %s553 = smul.addr %s552, 8
        %s554 = scalar_lea.vmem %s4, %s553
      $region52: #{encoder_forward.19} parent=43 // pred_fallthru
        _
    $region44: #{encoder_forward.19} parent=5 // pred_fallthru
      _
  $region6: #{encoder_forward.19} parent=0 // loop_footer
    %s15 = sadd.s32 1, %s11
  $region7: #{encoder_forward.19} parent=0 // loop_footer_branch
    %10 = sbr.rel target = $region3
  $region8: #{encoder_forward.19} parent=0 // loop_exit
    _

// kernel: encoder_forward.21
$region0: #{encoder_forward.21}
  #allocation0 [shape = 'u32[]', space=smem, size = 0x4, offset = 0x4, fixed_abs, tag = 'smem constant byte address 0x4 - core index']
  #allocation1 [shape = 'u32[144,128]{1,0:T(1,128)}', space=vmem, size = 0x12000, scoped, tag = 'internal scratch']
  %s0 = inlined_call_operand.vmem [shape: bf16[8,512], index: 0, kind: input, shape index: {}]
  %s1 = inlined_call_operand.vmem [shape: bf16[512,128], index: 1, kind: input, shape index: {}]
  %s2 = inlined_call_operand.vmem [shape: f32[1,128], index: 2, kind: input, shape index: {}]
  %s3 = inlined_call_operand.vmem [shape: bf16[8,128], index: 3, kind: output, shape index: {}]
  %s4 = sld [smem:[#allocation0]]
  $region22: #{encoder_forward.21} parent=0
    _
  %s6 = ssub.s32 1, %s4
  %s7 = scalar_select 0, %s6, %s4
  // Predicated region
  $region2: #{encoder_forward.21} parent=0 // pred_check
    _
  $region3: #{encoder_forward.21} parent=0 // pred_check_branch
    %9 = sbr.rel (0) target = $region5
  $region4: #{encoder_forward.21} parent=0 // pred_region
    _
  $region5: #{encoder_forward.21} parent=0 // pred_fallthru
    _
  // Predicated region
  $region6: #{encoder_forward.21} parent=0 // pred_check
    _
  $region7: #{encoder_forward.21} parent=0 // pred_check_branch
    %11 = sbr.rel (0) target = $region9
  $region8: #{encoder_forward.21} parent=0 // pred_region
    _
  $region9: #{encoder_forward.21} parent=0 // pred_fallthru
    _
  // Predicated region
  $region10: #{encoder_forward.21} parent=0 // pred_check
    _
  $region11: #{encoder_forward.21} parent=0 // pred_check_branch
    %13 = sbr.rel (0) target = $region13
  $region12: #{encoder_forward.21} parent=0 // pred_region
    _
  $region13: #{encoder_forward.21} parent=0 // pred_fallthru
    _
  %v15 = vld [vmem:[%s0] sm:$0xff]
  %v16 = vld [vmem:[%s0 + $0x8] sm:$0xff]
  %v17 = vld [vmem:[%s1] sm:$0xf]
  %v18 = vld [vmem:[%s1 + $0x4] sm:$0xf]
  %v19 = vld [vmem:[%s1 + $0x8] sm:$0xf]
  %v20 = vld [vmem:[%s1 + $0xc] sm:$0xf]
  %v21 = vld [vmem:[%s1 + $0x10] sm:$0xf]
  %v22 = vld [vmem:[%s1 + $0x14] sm:$0xf]
  %v23 = vld [vmem:[%s1 + $0x18] sm:$0xf]
  %v24 = vld [vmem:[%s1 + $0x1c] sm:$0xf]
  %v25 = vld [vmem:[%s1 + $0x20] sm:$0xf]
  %v26 = vld [vmem:[%s1 + $0x24] sm:$0xf]
  %v27 = vld [vmem:[%s1 + $0x28] sm:$0xf]
  %v28 = vld [vmem:[%s1 + $0x2c] sm:$0xf]
  %v29 = vld [vmem:[%s1 + $0x30] sm:$0xf]
  %v30 = vld [vmem:[%s1 + $0x34] sm:$0xf]
  %v31 = vld [vmem:[%s1 + $0x38] sm:$0xf]
  %v32 = vld [vmem:[%s1 + $0x3c] sm:$0xf]
  %v33 = vld [vmem:[%s1 + $0x40] sm:$0xf]
  %v34 = vld [vmem:[%s1 + $0x44] sm:$0xf]
  %v35 = vld [vmem:[%s1 + $0x48] sm:$0xf]
  %v36 = vld [vmem:[%s1 + $0x4c] sm:$0xf]
  %v37 = vld [vmem:[%s1 + $0x50] sm:$0xf]
  %v38 = vld [vmem:[%s1 + $0x54] sm:$0xf]
  %v39 = vld [vmem:[%s1 + $0x58] sm:$0xf]
  %v40 = vld [vmem:[%s1 + $0x5c] sm:$0xf]
  %v41 = vld [vmem:[%s1 + $0x60] sm:$0xf]
  %v42 = vld [vmem:[%s1 + $0x64] sm:$0xf]
  %v43 = vld [vmem:[%s1 + $0x68] sm:$0xf]
  %v44 = vld [vmem:[%s1 + $0x6c] sm:$0xf]
  %v45 = vld [vmem:[%s1 + $0x70] sm:$0xf]
  %v46 = vld [vmem:[%s1 + $0x74] sm:$0xf]
  %v47 = vld [vmem:[%s1 + $0x78] sm:$0xf]
  %v48 = vld [vmem:[%s1 + $0x7c] sm:$0xf]
  %v49 = vld [vmem:[%s1 + $0x80] sm:$0xf]
  %v50 = vld [vmem:[%s1 + $0x84] sm:$0xf]
  %v51 = vld [vmem:[%s1 + $0x88] sm:$0xf]
  %v52 = vld [vmem:[%s1 + $0x8c] sm:$0xf]
  %v53 = vld [vmem:[%s1 + $0x90] sm:$0xf]
  %v54 = vld [vmem:[%s1 + $0x94] sm:$0xf]
  %v55 = vld [vmem:[%s1 + $0x98] sm:$0xf]
  %v56 = vld [vmem:[%s1 + $0x9c] sm:$0xf]
  %v57 = vld [vmem:[%s1 + $0xa0] sm:$0xf]
  %v58 = vld [vmem:[%s1 + $0xa4] sm:$0xf]
  %v59 = vld [vmem:[%s1 + $0xa8] sm:$0xf]
  %v60 = vld [vmem:[%s1 + $0xac] sm:$0xf]
  %v61 = vld [vmem:[%s1 + $0xb0] sm:$0xf]
  %v62 = vld [vmem:[%s1 + $0xb4] sm:$0xf]
  %v63 = vld [vmem:[%s1 + $0xb8] sm:$0xf]
  %v64 = vld [vmem:[%s1 + $0xbc] sm:$0xf]
  %v65 = vld [vmem:[%s1 + $0xc0] sm:$0xf]
  %v66 = vld [vmem:[%s1 + $0xc4] sm:$0xf]
  %v67 = vld [vmem:[%s1 + $0xc8] sm:$0xf]
  %v68 = vld [vmem:[%s1 + $0xcc] sm:$0xf]
  %v69 = vld [vmem:[%s1 + $0xd0] sm:$0xf]
  %v70 = vld [vmem:[%s1 + $0xd4] sm:$0xf]
  %v71 = vld [vmem:[%s1 + $0xd8] sm:$0xf]
  %v72 = vld [vmem:[%s1 + $0xdc] sm:$0xf]
  %v73 = vld [vmem:[%s1 + $0xe0] sm:$0xf]
  %v74 = vld [vmem:[%s1 + $0xe4] sm:$0xf]
  %v75 = vld [vmem:[%s1 + $0xe8] sm:$0xf]
  %v76 = vld [vmem:[%s1 + $0xec] sm:$0xf]
  %v77 = vld [vmem:[%s1 + $0xf0] sm:$0xf]
  %v78 = vld [vmem:[%s1 + $0xf4] sm:$0xf]
  %v79 = vld [vmem:[%s1 + $0xf8] sm:$0xf]
  %v80 = vld [vmem:[%s1 + $0xfc] sm:$0xf]
  %v81 = vld [vmem:[%s2] sm:$0x1]
  %v83 = vlaneseq
  %v84 = vshrl.u32 %v83, 7
  %v85 = vsub.s32 0, %v84
  %v86 = vrot.slane %v81, %v85
  %v90 = vunpack.c.l.b16 %v15
  %v91 = vunpack.c.h.b16 %v15
  %v92 = vunpack.c.l.b16 %v16
  %v93 = vunpack.c.h.b16 %v16
  %v94 = vpack.c.b16 %v90, %v90
  %v95 = vpack.c.b16 %v91, %v91
  %v96 = vpack.c.b16 %v92, %v92
  %v97 = vpack.c.b16 %v93, %v93
  %v166 = vunpack.c.l.b16 %v17
  %v167 = vunpack.c.l.b16 %v18
  %v168 = vunpack.c.l.b16 %v19
  %v169 = vunpack.c.l.b16 %v20
  %v170 = vunpack.c.l.b16 %v21
  %v171 = vunpack.c.l.b16 %v22
  %v172 = vunpack.c.l.b16 %v23
  %v173 = vunpack.c.l.b16 %v24
  %v174 = vunpack.c.l.b16 %v25
  %v175 = vunpack.c.l.b16 %v26
  %v176 = vunpack.c.l.b16 %v27
  %v177 = vunpack.c.l.b16 %v28
  %v178 = vunpack.c.l.b16 %v29
  %v179 = vunpack.c.l.b16 %v30
  %v180 = vunpack.c.l.b16 %v31
  %v181 = vunpack.c.l.b16 %v32
  %v182 = vunpack.c.l.b16 %v33
  %v183 = vunpack.c.l.b16 %v34
  %v184 = vunpack.c.l.b16 %v35
  %v185 = vunpack.c.l.b16 %v36
  %v186 = vunpack.c.l.b16 %v37
  %v187 = vunpack.c.l.b16 %v38
  %v188 = vunpack.c.l.b16 %v39
  %v189 = vunpack.c.l.b16 %v40
  %v190 = vunpack.c.l.b16 %v41
  %v191 = vunpack.c.l.b16 %v42
  %v192 = vunpack.c.l.b16 %v43
  %v193 = vunpack.c.l.b16 %v44
  %v194 = vunpack.c.l.b16 %v45
  %v195 = vunpack.c.l.b16 %v46
  %v196 = vunpack.c.l.b16 %v47
  %v197 = vunpack.c.l.b16 %v48
  %v198 = vunpack.c.l.b16 %v49
  %v199 = vunpack.c.l.b16 %v50
  %v200 = vunpack.c.l.b16 %v51
  %v201 = vunpack.c.l.b16 %v52
  %v202 = vunpack.c.l.b16 %v53
  %v203 = vunpack.c.l.b16 %v54
  %v204 = vunpack.c.l.b16 %v55
  %v205 = vunpack.c.l.b16 %v56
  %v206 = vunpack.c.l.b16 %v57
  %v207 = vunpack.c.l.b16 %v58
  %v208 = vunpack.c.l.b16 %v59
  %v209 = vunpack.c.l.b16 %v60
  %v210 = vunpack.c.l.b16 %v61
  %v211 = vunpack.c.l.b16 %v62
  %v212 = vunpack.c.l.b16 %v63
  %v213 = vunpack.c.l.b16 %v64
  %v214 = vunpack.c.l.b16 %v65
  %v215 = vunpack.c.l.b16 %v66
  %v216 = vunpack.c.l.b16 %v67
  %v217 = vunpack.c.l.b16 %v68
  %v218 = vunpack.c.l.b16 %v69
  %v219 = vunpack.c.l.b16 %v70
  %v220 = vunpack.c.l.b16 %v71
  %v221 = vunpack.c.l.b16 %v72
  %v222 = vunpack.c.l.b16 %v73
  %v223 = vunpack.c.l.b16 %v74
  %v224 = vunpack.c.l.b16 %v75
  %v225 = vunpack.c.l.b16 %v76
  %v226 = vunpack.c.l.b16 %v77
  %v227 = vunpack.c.l.b16 %v78
  %v228 = vunpack.c.l.b16 %v79
  %v229 = vunpack.c.l.b16 %v80
  %v230 = vpack.c.b16 %v167, %v166
  %v231 = vpack.c.b16 %v169, %v168
  %v232 = vpack.c.b16 %v171, %v170
  %v233 = vpack.c.b16 %v173, %v172
  %v234 = vpack.c.b16 %v175, %v174
  %v235 = vpack.c.b16 %v177, %v176
  %v236 = vpack.c.b16 %v179, %v178
  %v237 = vpack.c.b16 %v181, %v180
  %v238 = vpack.c.b16 %v183, %v182
  %v239 = vpack.c.b16 %v185, %v184
  %v240 = vpack.c.b16 %v187, %v186
  %v241 = vpack.c.b16 %v189, %v188
  %v242 = vpack.c.b16 %v191, %v190
  %v243 = vpack.c.b16 %v193, %v192
  %v244 = vpack.c.b16 %v195, %v194
  %v245 = vpack.c.b16 %v197, %v196
  %v246 = vpack.c.b16 %v199, %v198
  %v247 = vpack.c.b16 %v201, %v200
  %v248 = vpack.c.b16 %v203, %v202
  %v249 = vpack.c.b16 %v205, %v204
  %v250 = vpack.c.b16 %v207, %v206
  %v251 = vpack.c.b16 %v209, %v208
  %v252 = vpack.c.b16 %v211, %v210
  %v253 = vpack.c.b16 %v213, %v212
  %v254 = vpack.c.b16 %v215, %v214
  %v255 = vpack.c.b16 %v217, %v216
  %v256 = vpack.c.b16 %v219, %v218
  %v257 = vpack.c.b16 %v221, %v220
  %v258 = vpack.c.b16 %v223, %v222
  %v259 = vpack.c.b16 %v225, %v224
  %v260 = vpack.c.b16 %v227, %v226
  %v261 = vpack.c.b16 %v229, %v228
  %294 = vmatprep.subr.bf16.mxu0 0
  %295 = vmatpush1.bf16.msra.mxu0 %v230
  %296 = vmatprep.subr.bf16.mxu0 0
  %297 = vmatpush1.bf16.msra.mxu0 %v231
  %298 = vmatprep.subr.bf16.mxu0 0
  %299 = vmatpush1.bf16.msra.mxu0 %v232
  %300 = vmatprep.subr.bf16.mxu0 0
  %301 = vmatpush1.bf16.msra.mxu0 %v233
  %302 = vmatprep.subr.bf16.mxu0 0
  %303 = vmatpush1.bf16.msra.mxu0 %v234
  %304 = vmatprep.subr.bf16.mxu0 0
  %305 = vmatpush1.bf16.msra.mxu0 %v235
  %306 = vmatprep.subr.bf16.mxu0 0
  %307 = vmatpush1.bf16.msra.mxu0 %v236
  %308 = vmatprep.subr.bf16.mxu0 0
  %309 = vmatpush1.bf16.msra.mxu0 %v237
  %310 = vmatprep.subr.bf16.mxu0 0
  %311 = vmatpush1.bf16.msra.mxu0 %v238
  %312 = vmatprep.subr.bf16.mxu0 0
  %313 = vmatpush1.bf16.msra.mxu0 %v239
  %314 = vmatprep.subr.bf16.mxu0 0
  %315 = vmatpush1.bf16.msra.mxu0 %v240
  %316 = vmatprep.subr.bf16.mxu0 0
  %317 = vmatpush1.bf16.msra.mxu0 %v241
  %318 = vmatprep.subr.bf16.mxu0 0
  %319 = vmatpush1.bf16.msra.mxu0 %v242
  %320 = vmatprep.subr.bf16.mxu0 0
  %321 = vmatpush1.bf16.msra.mxu0 %v243
  %322 = vmatprep.subr.bf16.mxu0 0
  %323 = vmatpush1.bf16.msra.mxu0 %v244
  %324 = vmatprep.subr.bf16.mxu0 0
  %325 = vmatpush1.bf16.msra.mxu0 %v245
  %326 = vmatprep.mubr.bf16.mxu0 %v95
  %327 = vmatmul.mubr.bf16.gmra.mrb[0].mxu0 %v94
  %v328 = vpop.f32.mrb[0].mxu0
  %v329 = vadd.f32 %v86, %v328
  %v330 = vpop.f32.mrb[0].mxu0
  %v331 = vpop.f32.mrb[0].mxu0
  %v332 = vpop.f32.mrb[0].mxu0
  %333 = vdwg.mxu0
  %334 = vmatprep.subr.bf16.mxu0 0
  %335 = vmatpush1.bf16.msra.mxu0 %v246
  %336 = vmatprep.subr.bf16.mxu0 0
  %337 = vmatpush1.bf16.msra.mxu0 %v247
  %338 = vmatprep.subr.bf16.mxu0 0
  %339 = vmatpush1.bf16.msra.mxu0 %v248
  %340 = vmatprep.subr.bf16.mxu0 0
  %341 = vmatpush1.bf16.msra.mxu0 %v249
  %342 = vmatprep.subr.bf16.mxu0 0
  %343 = vmatpush1.bf16.msra.mxu0 %v250
  %344 = vmatprep.subr.bf16.mxu0 0
  %345 = vmatpush1.bf16.msra.mxu0 %v251
  %346 = vmatprep.subr.bf16.mxu0 0
  %347 = vmatpush1.bf16.msra.mxu0 %v252
  %348 = vmatprep.subr.bf16.mxu0 0
  %349 = vmatpush1.bf16.msra.mxu0 %v253
  %350 = vmatprep.subr.bf16.mxu0 0
  %351 = vmatpush1.bf16.msra.mxu0 %v254
  %352 = vmatprep.subr.bf16.mxu0 0
  %353 = vmatpush1.bf16.msra.mxu0 %v255
  %354 = vmatprep.subr.bf16.mxu0 0
  %355 = vmatpush1.bf16.msra.mxu0 %v256
  %356 = vmatprep.subr.bf16.mxu0 0
  %357 = vmatpush1.bf16.msra.mxu0 %v257
  %358 = vmatprep.subr.bf16.mxu0 0
  %359 = vmatpush1.bf16.msra.mxu0 %v258
  %360 = vmatprep.subr.bf16.mxu0 0
  %361 = vmatpush1.bf16.msra.mxu0 %v259
  %362 = vmatprep.subr.bf16.mxu0 0
  %363 = vmatpush1.bf16.msra.mxu0 %v260
  %364 = vmatprep.subr.bf16.mxu0 0
  %365 = vmatpush1.bf16.msra.mxu0 %v261
  %366 = vmatprep.mubr.bf16.mxu0 %v97
  %367 = vmatmul.mubr.bf16.gmra.mrb[0].mxu0 %v96
  %v368 = vpop.f32.mrb[0].mxu0
  %v369 = vadd.f32 %v329, %v368
  %v370 = vpop.f32.mrb[0].mxu0
  %v371 = vpop.f32.mrb[0].mxu0
  %v372 = vpop.f32.mrb[0].mxu0
  %373 = vdwg.mxu0
  %vm374 = vcmp.ge.f32.partialorder %v369, 0.0
  %v375 = vmul.f32 %v369, 0.01
  %v376 = vsel %vm374, %v369, %v375
  %v377 = vpack.c.bf16 %v376, %v376
  %378 = vst [vmem:[%s3] sm:$0xf] %v377
  // Predicated region
  $region14: #{encoder_forward.21} parent=0 // pred_check
    _
  $region15: #{encoder_forward.21} parent=0 // pred_check_branch
    %380 = sbr.rel (0) target = $region17
  $region16: #{encoder_forward.21} parent=0 // pred_region
    _
  $region17: #{encoder_forward.21} parent=0 // pred_fallthru
    _
  // Predicated region
  $region18: #{encoder_forward.21} parent=0 // pred_check
    _
  $region19: #{encoder_forward.21} parent=0 // pred_check_branch
    %382 = sbr.rel (0) target = $region21
  $region20: #{encoder_forward.21} parent=0 // pred_region
    _
  $region21: #{encoder_forward.21} parent=0 // pred_fallthru
    _

// kernel: encoder_forward.22
$region0: #{encoder_forward.22}
  #allocation0 [shape = 'u32[]', space=smem, size = 0x4, offset = 0x4, fixed_abs, tag = 'smem constant byte address 0x4 - core index']
  #allocation1 [shape = 'u32[144,128]{1,0:T(1,128)}', space=vmem, size = 0x12000, scoped, tag = 'internal scratch']
  %s0 = inlined_call_operand.vmem [shape: bf16[8,640], index: 0, kind: input, shape index: {}]
  %s1 = inlined_call_operand.vmem [shape: bf16[640,128], index: 1, kind: input, shape index: {}]
  %s2 = inlined_call_operand.vmem [shape: f32[1,128], index: 2, kind: input, shape index: {}]
  %s3 = inlined_call_operand.vmem [shape: bf16[8,128], index: 3, kind: output, shape index: {0}]
  %s4 = inlined_call_operand.vmem [shape: f32[8,128], index: 4, kind: output, shape index: {1}]
  %5 = xla_tuple %s3, %s4
  %s6 = sld [smem:[#allocation0]]
  $region30: #{encoder_forward.22} parent=0
    _
  %s8 = ssub.s32 1, %s6
  %s9 = scalar_select 0, %s8, %s6
  // Predicated region
  $region2: #{encoder_forward.22} parent=0 // pred_check
    _
  $region3: #{encoder_forward.22} parent=0 // pred_check_branch
    %11 = sbr.rel (0) target = $region5
  $region4: #{encoder_forward.22} parent=0 // pred_region
    _
  $region5: #{encoder_forward.22} parent=0 // pred_fallthru
    _
  // Predicated region
  $region6: #{encoder_forward.22} parent=0 // pred_check
    _
  $region7: #{encoder_forward.22} parent=0 // pred_check_branch
    %13 = sbr.rel (0) target = $region9
  $region8: #{encoder_forward.22} parent=0 // pred_region
    _
  $region9: #{encoder_forward.22} parent=0 // pred_fallthru
    _
  // Predicated region
  $region10: #{encoder_forward.22} parent=0 // pred_check
    _
  $region11: #{encoder_forward.22} parent=0 // pred_check_branch
    %15 = sbr.rel (0) target = $region13
  $region12: #{encoder_forward.22} parent=0 // pred_region
    _
  $region13: #{encoder_forward.22} parent=0 // pred_fallthru
    _
  %v17 = vld [vmem:[%s0] sm:$0xff]
  %v18 = vld [vmem:[%s0 + $0x8] sm:$0xff]
  %v19 = vld [vmem:[%s0 + $0x10] sm:$0xf]
  %v20 = vld [vmem:[%s1] sm:$0xf]
  %v21 = vld [vmem:[%s1 + $0x4] sm:$0xf]
  %v22 = vld [vmem:[%s1 + $0x8] sm:$0xf]
  %v23 = vld [vmem:[%s1 + $0xc] sm:$0xf]
  %v24 = vld [vmem:[%s1 + $0x10] sm:$0xf]
  %v25 = vld [vmem:[%s1 + $0x14] sm:$0xf]
  %v26 = vld [vmem:[%s1 + $0x18] sm:$0xf]
  %v27 = vld [vmem:[%s1 + $0x1c] sm:$0xf]
  %v28 = vld [vmem:[%s1 + $0x20] sm:$0xf]
  %v29 = vld [vmem:[%s1 + $0x24] sm:$0xf]
  %v30 = vld [vmem:[%s1 + $0x28] sm:$0xf]
  %v31 = vld [vmem:[%s1 + $0x2c] sm:$0xf]
  %v32 = vld [vmem:[%s1 + $0x30] sm:$0xf]
  %v33 = vld [vmem:[%s1 + $0x34] sm:$0xf]
  %v34 = vld [vmem:[%s1 + $0x38] sm:$0xf]
  %v35 = vld [vmem:[%s1 + $0x3c] sm:$0xf]
  %v36 = vld [vmem:[%s1 + $0x40] sm:$0xf]
  %v37 = vld [vmem:[%s1 + $0x44] sm:$0xf]
  %v38 = vld [vmem:[%s1 + $0x48] sm:$0xf]
  %v39 = vld [vmem:[%s1 + $0x4c] sm:$0xf]
  %v40 = vld [vmem:[%s1 + $0x50] sm:$0xf]
  %v41 = vld [vmem:[%s1 + $0x54] sm:$0xf]
  %v42 = vld [vmem:[%s1 + $0x58] sm:$0xf]
  %v43 = vld [vmem:[%s1 + $0x5c] sm:$0xf]
  %v44 = vld [vmem:[%s1 + $0x60] sm:$0xf]
  %v45 = vld [vmem:[%s1 + $0x64] sm:$0xf]
  %v46 = vld [vmem:[%s1 + $0x68] sm:$0xf]
  %v47 = vld [vmem:[%s1 + $0x6c] sm:$0xf]
  %v48 = vld [vmem:[%s1 + $0x70] sm:$0xf]
  %v49 = vld [vmem:[%s1 + $0x74] sm:$0xf]
  %v50 = vld [vmem:[%s1 + $0x78] sm:$0xf]
  %v51 = vld [vmem:[%s1 + $0x7c] sm:$0xf]
  %v52 = vld [vmem:[%s1 + $0x80] sm:$0xf]
  %v53 = vld [vmem:[%s1 + $0x84] sm:$0xf]
  %v54 = vld [vmem:[%s1 + $0x88] sm:$0xf]
  %v55 = vld [vmem:[%s1 + $0x8c] sm:$0xf]
  %v56 = vld [vmem:[%s1 + $0x90] sm:$0xf]
  %v57 = vld [vmem:[%s1 + $0x94] sm:$0xf]
  %v58 = vld [vmem:[%s1 + $0x98] sm:$0xf]
  %v59 = vld [vmem:[%s1 + $0x9c] sm:$0xf]
  %v60 = vld [vmem:[%s1 + $0xa0] sm:$0xf]
  %v61 = vld [vmem:[%s1 + $0xa4] sm:$0xf]
  %v62 = vld [vmem:[%s1 + $0xa8] sm:$0xf]
  %v63 = vld [vmem:[%s1 + $0xac] sm:$0xf]
  %v64 = vld [vmem:[%s1 + $0xb0] sm:$0xf]
  %v65 = vld [vmem:[%s1 + $0xb4] sm:$0xf]
  %v66 = vld [vmem:[%s1 + $0xb8] sm:$0xf]
  %v67 = vld [vmem:[%s1 + $0xbc] sm:$0xf]
  %v68 = vld [vmem:[%s1 + $0xc0] sm:$0xf]
  %v69 = vld [vmem:[%s1 + $0xc4] sm:$0xf]
  %v70 = vld [vmem:[%s1 + $0xc8] sm:$0xf]
  %v71 = vld [vmem:[%s1 + $0xcc] sm:$0xf]
  %v72 = vld [vmem:[%s1 + $0xd0] sm:$0xf]
  %v73 = vld [vmem:[%s1 + $0xd4] sm:$0xf]
  %v74 = vld [vmem:[%s1 + $0xd8] sm:$0xf]
  %v75 = vld [vmem:[%s1 + $0xdc] sm:$0xf]
  %v76 = vld [vmem:[%s1 + $0xe0] sm:$0xf]
  %v77 = vld [vmem:[%s1 + $0xe4] sm:$0xf]
  %v78 = vld [vmem:[%s1 + $0xe8] sm:$0xf]
  %v79 = vld [vmem:[%s1 + $0xec] sm:$0xf]
  %v80 = vld [vmem:[%s1 + $0xf0] sm:$0xf]
  %v81 = vld [vmem:[%s1 + $0xf4] sm:$0xf]
  %v82 = vld [vmem:[%s1 + $0xf8] sm:$0xf]
  %v83 = vld [vmem:[%s1 + $0xfc] sm:$0xf]
  %v84 = vld [vmem:[%s1 + $0x100] sm:$0xf]
  %v85 = vld [vmem:[%s1 + $0x104] sm:$0xf]
  %v86 = vld [vmem:[%s1 + $0x108] sm:$0xf]
  %v87 = vld [vmem:[%s1 + $0x10c] sm:$0xf]
  %v88 = vld [vmem:[%s1 + $0x110] sm:$0xf]
  %v89 = vld [vmem:[%s1 + $0x114] sm:$0xf]
  %v90 = vld [vmem:[%s1 + $0x118] sm:$0xf]
  %v91 = vld [vmem:[%s1 + $0x11c] sm:$0xf]
  %v92 = vld [vmem:[%s1 + $0x120] sm:$0xf]
  %v93 = vld [vmem:[%s1 + $0x124] sm:$0xf]
  %v94 = vld [vmem:[%s1 + $0x128] sm:$0xf]
  %v95 = vld [vmem:[%s1 + $0x12c] sm:$0xf]
  %v96 = vld [vmem:[%s1 + $0x130] sm:$0xf]
  %v97 = vld [vmem:[%s1 + $0x134] sm:$0xf]
  %v98 = vld [vmem:[%s1 + $0x138] sm:$0xf]
  %v99 = vld [vmem:[%s1 + $0x13c] sm:$0xf]
  %v100 = vld [vmem:[%s2] sm:$0x1]
  %v102 = vlaneseq
  %v103 = vshrl.u32 %v102, 7
  %v104 = vsub.s32 0, %v103
  %v105 = vrot.slane %v100, %v104
  %v110 = vunpack.c.l.b16 %v17
  %v111 = vunpack.c.h.b16 %v17
  %v112 = vunpack.c.l.b16 %v18
  %v113 = vunpack.c.h.b16 %v18
  %v114 = vunpack.c.l.b16 %v19
  %v115 = vpack.c.b16 %v110, %v110
  %v116 = vpack.c.b16 %v111, %v111
  %v117 = vpack.c.b16 %v112, %v112
  %v118 = vpack.c.b16 %v113, %v113
  %v119 = vpack.c.b16 %v114, %v114
  %v205 = vunpack.c.l.b16 %v20
  %v206 = vunpack.c.l.b16 %v21
  %v207 = vunpack.c.l.b16 %v22
  %v208 = vunpack.c.l.b16 %v23
  %v209 = vunpack.c.l.b16 %v24
  %v210 = vunpack.c.l.b16 %v25
  %v211 = vunpack.c.l.b16 %v26
  %v212 = vunpack.c.l.b16 %v27
  %v213 = vunpack.c.l.b16 %v28
  %v214 = vunpack.c.l.b16 %v29
  %v215 = vunpack.c.l.b16 %v30
  %v216 = vunpack.c.l.b16 %v31
  %v217 = vunpack.c.l.b16 %v32
  %v218 = vunpack.c.l.b16 %v33
  %v219 = vunpack.c.l.b16 %v34
  %v220 = vunpack.c.l.b16 %v35
  %v221 = vunpack.c.l.b16 %v36
  %v222 = vunpack.c.l.b16 %v37
  %v223 = vunpack.c.l.b16 %v38
  %v224 = vunpack.c.l.b16 %v39
  %v225 = vunpack.c.l.b16 %v40
  %v226 = vunpack.c.l.b16 %v41
  %v227 = vunpack.c.l.b16 %v42
  %v228 = vunpack.c.l.b16 %v43
  %v229 = vunpack.c.l.b16 %v44
  %v230 = vunpack.c.l.b16 %v45
  %v231 = vunpack.c.l.b16 %v46
  %v232 = vunpack.c.l.b16 %v47
  %v233 = vunpack.c.l.b16 %v48
  %v234 = vunpack.c.l.b16 %v49
  %v235 = vunpack.c.l.b16 %v50
  %v236 = vunpack.c.l.b16 %v51
  %v237 = vunpack.c.l.b16 %v52
  %v238 = vunpack.c.l.b16 %v53
  %v239 = vunpack.c.l.b16 %v54
  %v240 = vunpack.c.l.b16 %v55
  %v241 = vunpack.c.l.b16 %v56
  %v242 = vunpack.c.l.b16 %v57
  %v243 = vunpack.c.l.b16 %v58
  %v244 = vunpack.c.l.b16 %v59
  %v245 = vunpack.c.l.b16 %v60
  %v246 = vunpack.c.l.b16 %v61
  %v247 = vunpack.c.l.b16 %v62
  %v248 = vunpack.c.l.b16 %v63
  %v249 = vunpack.c.l.b16 %v64
  %v250 = vunpack.c.l.b16 %v65
  %v251 = vunpack.c.l.b16 %v66
  %v252 = vunpack.c.l.b16 %v67
  %v253 = vunpack.c.l.b16 %v68
  %v254 = vunpack.c.l.b16 %v69
  %v255 = vunpack.c.l.b16 %v70
  %v256 = vunpack.c.l.b16 %v71
  %v257 = vunpack.c.l.b16 %v72
  %v258 = vunpack.c.l.b16 %v73
  %v259 = vunpack.c.l.b16 %v74
  %v260 = vunpack.c.l.b16 %v75
  %v261 = vunpack.c.l.b16 %v76
  %v262 = vunpack.c.l.b16 %v77
  %v263 = vunpack.c.l.b16 %v78
  %v264 = vunpack.c.l.b16 %v79
  %v265 = vunpack.c.l.b16 %v80
  %v266 = vunpack.c.l.b16 %v81
  %v267 = vunpack.c.l.b16 %v82
  %v268 = vunpack.c.l.b16 %v83
  %v269 = vunpack.c.l.b16 %v84
  %v270 = vunpack.c.l.b16 %v85
  %v271 = vunpack.c.l.b16 %v86
  %v272 = vunpack.c.l.b16 %v87
  %v273 = vunpack.c.l.b16 %v88
  %v274 = vunpack.c.l.b16 %v89
  %v275 = vunpack.c.l.b16 %v90
  %v276 = vunpack.c.l.b16 %v91
  %v277 = vunpack.c.l.b16 %v92
  %v278 = vunpack.c.l.b16 %v93
  %v279 = vunpack.c.l.b16 %v94
  %v280 = vunpack.c.l.b16 %v95
  %v281 = vunpack.c.l.b16 %v96
  %v282 = vunpack.c.l.b16 %v97
  %v283 = vunpack.c.l.b16 %v98
  %v284 = vunpack.c.l.b16 %v99
  %v285 = vpack.c.b16 %v206, %v205
  %v286 = vpack.c.b16 %v208, %v207
  %v287 = vpack.c.b16 %v210, %v209
  %v288 = vpack.c.b16 %v212, %v211
  %v289 = vpack.c.b16 %v214, %v213
  %v290 = vpack.c.b16 %v216, %v215
  %v291 = vpack.c.b16 %v218, %v217
  %v292 = vpack.c.b16 %v220, %v219
  %v293 = vpack.c.b16 %v222, %v221
  %v294 = vpack.c.b16 %v224, %v223
  %v295 = vpack.c.b16 %v226, %v225
  %v296 = vpack.c.b16 %v228, %v227
  %v297 = vpack.c.b16 %v230, %v229
  %v298 = vpack.c.b16 %v232, %v231
  %v299 = vpack.c.b16 %v234, %v233
  %v300 = vpack.c.b16 %v236, %v235
  %v301 = vpack.c.b16 %v238, %v237
  %v302 = vpack.c.b16 %v240, %v239
  %v303 = vpack.c.b16 %v242, %v241
  %v304 = vpack.c.b16 %v244, %v243
  %v305 = vpack.c.b16 %v246, %v245
  %v306 = vpack.c.b16 %v248, %v247
  %v307 = vpack.c.b16 %v250, %v249
  %v308 = vpack.c.b16 %v252, %v251
  %v309 = vpack.c.b16 %v254, %v253
  %v310 = vpack.c.b16 %v256, %v255
  %v311 = vpack.c.b16 %v258, %v257
  %v312 = vpack.c.b16 %v260, %v259
  %v313 = vpack.c.b16 %v262, %v261
  %v314 = vpack.c.b16 %v264, %v263
  %v315 = vpack.c.b16 %v266, %v265
  %v316 = vpack.c.b16 %v268, %v267
  %v317 = vpack.c.b16 %v270, %v269
  %v318 = vpack.c.b16 %v272, %v271
  %v319 = vpack.c.b16 %v274, %v273
  %v320 = vpack.c.b16 %v276, %v275
  %v321 = vpack.c.b16 %v278, %v277
  %v322 = vpack.c.b16 %v280, %v279
  %v323 = vpack.c.b16 %v282, %v281
  %v324 = vpack.c.b16 %v284, %v283
  %365 = vmatprep.subr.bf16.mxu0 0
  %366 = vmatpush1.bf16.msra.mxu0 %v285
  %367 = vmatprep.subr.bf16.mxu0 0
  %368 = vmatpush1.bf16.msra.mxu0 %v286
  %369 = vmatprep.subr.bf16.mxu0 0
  %370 = vmatpush1.bf16.msra.mxu0 %v287
  %371 = vmatprep.subr.bf16.mxu0 0
  %372 = vmatpush1.bf16.msra.mxu0 %v288
  %373 = vmatprep.subr.bf16.mxu0 0
  %374 = vmatpush1.bf16.msra.mxu0 %v289
  %375 = vmatprep.subr.bf16.mxu0 0
  %376 = vmatpush1.bf16.msra.mxu0 %v290
  %377 = vmatprep.subr.bf16.mxu0 0
  %378 = vmatpush1.bf16.msra.mxu0 %v291
  %379 = vmatprep.subr.bf16.mxu0 0
  %380 = vmatpush1.bf16.msra.mxu0 %v292
  %381 = vmatprep.subr.bf16.mxu0 0
  %382 = vmatpush1.bf16.msra.mxu0 %v293
  %383 = vmatprep.subr.bf16.mxu0 0
  %384 = vmatpush1.bf16.msra.mxu0 %v294
  %385 = vmatprep.subr.bf16.mxu0 0
  %386 = vmatpush1.bf16.msra.mxu0 %v295
  %387 = vmatprep.subr.bf16.mxu0 0
  %388 = vmatpush1.bf16.msra.mxu0 %v296
  %389 = vmatprep.subr.bf16.mxu0 0
  %390 = vmatpush1.bf16.msra.mxu0 %v297
  %391 = vmatprep.subr.bf16.mxu0 0
  %392 = vmatpush1.bf16.msra.mxu0 %v298
  %393 = vmatprep.subr.bf16.mxu0 0
  %394 = vmatpush1.bf16.msra.mxu0 %v299
  %395 = vmatprep.subr.bf16.mxu0 0
  %396 = vmatpush1.bf16.msra.mxu0 %v300
  %397 = vmatprep.mubr.bf16.mxu0 %v116
  %398 = vmatmul.mubr.bf16.gmra.mrb[0].mxu0 %v115
  %v399 = vpop.f32.mrb[0].mxu0
  %v400 = vadd.f32 %v105, %v399
  %v401 = vpop.f32.mrb[0].mxu0
  %v402 = vpop.f32.mrb[0].mxu0
  %v403 = vpop.f32.mrb[0].mxu0
  %404 = vdwg.mxu0
  %405 = vmatprep.subr.bf16.mxu0 0
  %406 = vmatpush1.bf16.msra.mxu0 %v301
  %407 = vmatprep.subr.bf16.mxu0 0
  %408 = vmatpush1.bf16.msra.mxu0 %v302
  %409 = vmatprep.subr.bf16.mxu0 0
  %410 = vmatpush1.bf16.msra.mxu0 %v303
  %411 = vmatprep.subr.bf16.mxu0 0
  %412 = vmatpush1.bf16.msra.mxu0 %v304
  %413 = vmatprep.subr.bf16.mxu0 0
  %414 = vmatpush1.bf16.msra.mxu0 %v305
  %415 = vmatprep.subr.bf16.mxu0 0
  %416 = vmatpush1.bf16.msra.mxu0 %v306
  %417 = vmatprep.subr.bf16.mxu0 0
  %418 = vmatpush1.bf16.msra.mxu0 %v307
  %419 = vmatprep.subr.bf16.mxu0 0
  %420 = vmatpush1.bf16.msra.mxu0 %v308
  %421 = vmatprep.subr.bf16.mxu0 0
  %422 = vmatpush1.bf16.msra.mxu0 %v309
  %423 = vmatprep.subr.bf16.mxu0 0
  %424 = vmatpush1.bf16.msra.mxu0 %v310
  %425 = vmatprep.subr.bf16.mxu0 0
  %426 = vmatpush1.bf16.msra.mxu0 %v311
  %427 = vmatprep.subr.bf16.mxu0 0
  %428 = vmatpush1.bf16.msra.mxu0 %v312
  %429 = vmatprep.subr.bf16.mxu0 0
  %430 = vmatpush1.bf16.msra.mxu0 %v313
  %431 = vmatprep.subr.bf16.mxu0 0
  %432 = vmatpush1.bf16.msra.mxu0 %v314
  %433 = vmatprep.subr.bf16.mxu0 0
  %434 = vmatpush1.bf16.msra.mxu0 %v315
  %435 = vmatprep.subr.bf16.mxu0 0
  %436 = vmatpush1.bf16.msra.mxu0 %v316
  %437 = vmatprep.mubr.bf16.mxu0 %v118
  %438 = vmatmul.mubr.bf16.gmra.mrb[0].mxu0 %v117
  %v439 = vpop.f32.mrb[0].mxu0
  %v440 = vadd.f32 %v400, %v439
  %v441 = vpop.f32.mrb[0].mxu0
  %v442 = vpop.f32.mrb[0].mxu0
  %v443 = vpop.f32.mrb[0].mxu0
  %444 = vdwg.mxu0
  %445 = vmatprep.subr.bf16.mxu0 0
  %446 = vmatpush1.bf16.msra.mxu0 %v317
  %447 = vmatprep.subr.bf16.mxu0 0
  %448 = vmatpush1.bf16.msra.mxu0 %v318
  %449 = vmatprep.subr.bf16.mxu0 0
  %450 = vmatpush1.bf16.msra.mxu0 %v319
  %451 = vmatprep.subr.bf16.mxu0 0
  %452 = vmatpush1.bf16.msra.mxu0 %v320
  %453 = vmatprep.subr.bf16.mxu0 0
  %454 = vmatpush1.bf16.msra.mxu0 %v321
  %455 = vmatprep.subr.bf16.mxu0 0
  %456 = vmatpush1.bf16.msra.mxu0 %v322
  %457 = vmatprep.subr.bf16.mxu0 0
  %458 = vmatpush1.bf16.msra.mxu0 %v323
  %459 = vmatprep.subr.bf16.mxu0 0
  %460 = vmatpush1.bf16.msra.mxu0 %v324
  %461 = vmatprep.subr.bf16.mxu0 0
  %462 = vmatpush1.bf16.msra.mxu0 0
  %463 = vmatprep.subr.bf16.mxu0 0
  %464 = vmatpush1.bf16.msra.mxu0 0
  %465 = vmatprep.subr.bf16.mxu0 0
  %466 = vmatpush1.bf16.msra.mxu0 0
  %467 = vmatprep.subr.bf16.mxu0 0
  %468 = vmatpush1.bf16.msra.mxu0 0
  %469 = vmatprep.subr.bf16.mxu0 0
  %470 = vmatpush1.bf16.msra.mxu0 0
  %471 = vmatprep.subr.bf16.mxu0 0
  %472 = vmatpush1.bf16.msra.mxu0 0
  %473 = vmatprep.subr.bf16.mxu0 0
  %474 = vmatpush1.bf16.msra.mxu0 0
  %475 = vmatprep.subr.bf16.mxu0 0
  %476 = vmatpush1.bf16.msra.mxu0 0
  %477 = vmatprep.mubr.bf16.mxu0 0
  %478 = vmatmul.mubr.bf16.gmra.mrb[0].mxu0 %v119
  %v479 = vpop.f32.mrb[0].mxu0
  %v480 = vadd.f32 %v440, %v479
  %v481 = vpop.f32.mrb[0].mxu0
  %v482 = vpop.f32.mrb[0].mxu0
  %v483 = vpop.f32.mrb[0].mxu0
  %484 = vdwg.mxu0
  %v485 = vpack.c.bf16 %v480, %v480
  %486 = vst [vmem:[%s3] sm:$0xf] %v485
  %v487 = vrot.slane %v480, 4
  %v488 = vadd.f32 %v480, %v487
  %v489 = vrot.slane %v488, 2
  %v490 = vadd.f32 %v488, %v489
  %v491 = vrot.slane %v490, 1
  %v492 = vadd.f32 %v490, %v491
  %v493 = vmul.f32 %v480, %v480
  %v494 = vrot.slane %v493, 4
  %v495 = vadd.f32 %v493, %v494
  %v496 = vrot.slane %v495, 2
  %v497 = vadd.f32 %v495, %v496
  %v498 = vrot.slane %v497, 1
  %v499 = vadd.f32 %v497, %v498
  %v500 = vlaneseq
  %v501 = vshrl.u32 %v500, 7
  %vm502 = vcmp.eq.s32.totalorder %v501, 0
  %vm503 = vcmp.eq.s32.totalorder %v501, 1
  %v504 = vsel %vm503, %v499, 0.0
  %v505 = vsel %vm502, %v492, %v504
  %506 = vst [vmem:[%s4] sm:$0xff] %v505
  // Predicated region
  $region14: #{encoder_forward.22} parent=0 // pred_check
    _
  $region15: #{encoder_forward.22} parent=0 // pred_check_branch
    %508 = sbr.rel (0) target = $region17
  $region16: #{encoder_forward.22} parent=0 // pred_region
    _
  $region17: #{encoder_forward.22} parent=0 // pred_fallthru
    _
  // Predicated region
  $region18: #{encoder_forward.22} parent=0 // pred_check
    _
  $region19: #{encoder_forward.22} parent=0 // pred_check_branch
    %510 = sbr.rel (0) target = $region21
  $region20: #{encoder_forward.22} parent=0 // pred_region
    _
  $region21: #{encoder_forward.22} parent=0 // pred_fallthru
    _
  // Predicated region
  $region22: #{encoder_forward.22} parent=0 // pred_check
    _
  $region23: #{encoder_forward.22} parent=0 // pred_check_branch
    %512 = sbr.rel (0) target = $region25
  $region24: #{encoder_forward.22} parent=0 // pred_region
    _
  $region25: #{encoder_forward.22} parent=0 // pred_fallthru
    _
  // Predicated region
  $region26: #{encoder_forward.22} parent=0 // pred_check
    _
  $region27: #{encoder_forward.22} parent=0 // pred_check_branch
    %514 = sbr.rel (0) target = $region29
  $region28: #{encoder_forward.22} parent=0 // pred_region
    _
  $region29: #{encoder_forward.22} parent=0 // pred_fallthru
    _

</llo_original>
